<compile_context>
chip_gen: v6e
topology: v6e:2x2x1
jax: 0.10.0
libtpu: 0.0.40
codegen_flags: <defaults>
</compile_context>

<pallas_src>
import functools

import jax
import jax.numpy as jnp
import numpy as np
from jax import lax
from jax.experimental import pallas as pl
from jax.experimental.pallas import tpu as pltpu


def _round_up(n, m):
  return ((n + m - 1) // m) * m


def _pick_batch_block(bp):
  """Largest batch block (multiple of 8, <= 32) dividing Bp; prefers >= 2 blocks
  when Bp >= 16 so the 'parallel' grid axis can span both v7x TensorCores."""
  for cand in (32, 24, 16, 8):
    if bp % cand == 0 and (bp // cand >= 2 or bp < 16):
      return cand
  return bp


def _vmem_budget_bytes(L, chunk_T, Bp_blk, Hp, Dp):
  """Conservative VMEM footprint estimate for CompilerParams.vmem_limit_bytes."""
  bf16, f32 = 2, 4
  rows = chunk_T * Bp_blk
  weights = (Dp * 4 * Hp * bf16               # w_ih0
             + (L - 1) * Hp * 4 * Hp * bf16   # wih (layers >= 1)
             + L * Hp * 4 * Hp * bf16         # whh
             + L * 8 * 4 * Hp * f32)          # biases (sublane padded)
  stream = 2 * rows * Dp * bf16               # double-buffered x chunks
  outs = 2 * 2 * L * Bp_blk * Hp * f32        # h/c output blocks (+ slack)
  scratch = rows * Hp * bf16 + rows * 4 * Hp * f32
  total = weights + stream + outs + scratch
  return int(min(100 * 1024 * 1024, max(32 * 1024 * 1024, 2 * total + (4 << 20))))


# ---------------------------------------------------------------------------
# Fused multi-layer LSTM kernel.  grid = (batch_blocks, time_chunks).
# ---------------------------------------------------------------------------
def _make_encoder_kernel(num_layers, T_total, chunk_T, Bp_blk, Hp):
  """Ref order: x, w_ih0, wih[1..L-1], whh[0..L-1], b[0..L-1], h_out, c_out,
  y_scr, gx_scr."""
  needs_mask = (T_total % chunk_T) != 0
  bf16 = jnp.bfloat16

  def _sigmoid(v):
    # Exact identity sigmoid(x) = 0.5*tanh(0.5*x) + 0.5 : 1 EUP op + 2 VPU ops.
    return 0.5 * jnp.tanh(0.5 * v) + 0.5

  def kernel(*refs):
    L = num_layers
    x_ref = refs[0]                       # (1, chunk_T*Bp_blk, Dp) bf16
    w_ih0_ref = refs[1]                   # (Dp, 4Hp) bf16
    wih_refs = refs[2:L + 1]              # (Hp, 4Hp) bf16, layers 1..L-1
    whh_refs = refs[L + 1:2 * L + 1]      # (Hp, 4Hp) bf16
    b_refs = refs[2 * L + 1:3 * L + 1]    # (1, 4Hp) f32
    h_out_ref = refs[3 * L + 1]           # (L, Bp_blk, Hp) f32  (carried)
    c_out_ref = refs[3 * L + 2]           # (L, Bp_blk, Hp) f32  (carried)
    y_scr = refs[3 * L + 3]               # (chunk_T*Bp_blk, Hp) bf16
    gx_scr = refs[3 * L + 4]              # (chunk_T*Bp_blk, 4Hp) f32

    chunk = pl.program_id(1)

    @pl.when(chunk == 0)
    def _init():
      h_out_ref[...] = jnp.zeros_like(h_out_ref)
      c_out_ref[...] = jnp.zeros_like(c_out_ref)

    for layer in range(L):
      # One chunk-wide MXU matmul projects every timestep of this layer's input
      # at once (bias folded in); only h @ W_hh remains on the serial path.
      if layer == 0:
        src = x_ref[0]
        w_in = w_ih0_ref[...]
      else:
        src = y_scr[...]
        w_in = wih_refs[layer - 1][...]
      gx_scr[...] = (jnp.dot(src, w_in, preferred_element_type=jnp.float32)
                     + b_refs[layer][...])

      w_hh = whh_refs[layer][...]          # hoisted: loaded once per layer
      write_y = layer + 1 < L

      def step(t, carry, _w_hh=w_hh, _write_y=write_y):
        h, c = carry
        if isinstance(t, int):
          row = t * Bp_blk
        else:
          row = pl.multiple_of(t * Bp_blk, Bp_blk)
        g = (gx_scr[pl.ds(row, Bp_blk), :]
             + jnp.dot(h.astype(bf16), _w_hh,
                       preferred_element_type=jnp.float32))
        # PyTorch gate order: input, forget, cell(g), output.  Hp is a multiple
        # of 128 so every slice is lane-aligned.
        i_g = _sigmoid(g[:, 0 * Hp:1 * Hp])
        f_g = _sigmoid(g[:, 1 * Hp:2 * Hp])
        g_g = jnp.tanh(g[:, 2 * Hp:3 * Hp])
        o_g = _sigmoid(g[:, 3 * Hp:4 * Hp])
        c_new = f_g * c + i_g * g_g
        h_new = o_g * jnp.tanh(c_new)
        if needs_mask:                      # tail chunk: freeze past T_total
          valid = (chunk * chunk_T + t) < T_total
          c_new = jnp.where(valid, c_new, c)
          h_new = jnp.where(valid, h_new, h)
        if _write_y:                        # feed next layer (stays in VMEM)
          y_scr[pl.ds(row, Bp_blk), :] = h_new.astype(bf16)
        return h_new, c_new

      carry0 = (h_out_ref[layer], c_out_ref[layer])
      if chunk_T <= 8:
        h, c = carry0
        for t in range(chunk_T):            # short chunk: full static unroll
          h, c = step(t, (h, c))
      else:
        h, c = lax.fori_loop(0, chunk_T, step, carry0,
                             unroll=min(8, chunk_T))
      h_out_ref[layer] = h
      c_out_ref[layer] = c

  return kernel


def _encoder_pallas(x_packed, packed, *, T_total, chunk_T, num_chunks,
                    Bp, Bp_blk, Hp, Dp, num_layers):
  nb = Bp // Bp_blk
  kernel = _make_encoder_kernel(num_layers, T_total, chunk_T, Bp_blk, Hp)
  vmem = pltpu.MemorySpace.VMEM

  n_resident = 1 + (num_layers - 1) + num_layers + num_layers
  in_specs = (
      [pl.BlockSpec((1, chunk_T * Bp_blk, Dp), lambda b, c: (b, c, 0))]
      + [pl.BlockSpec(memory_space=vmem) for _ in range(n_resident)])
  out_specs = (
      pl.BlockSpec((num_layers, Bp_blk, Hp), lambda b, c: (0, b, 0)),
      pl.BlockSpec((num_layers, Bp_blk, Hp), lambda b, c: (0, b, 0)),
  )

  return pl.pallas_call(
      kernel,
      out_shape=(
          jax.ShapeDtypeStruct((num_layers, Bp, Hp), jnp.float32),
          jax.ShapeDtypeStruct((num_layers, Bp, Hp), jnp.float32),
      ),
      grid_spec=pltpu.PrefetchScalarGridSpec(
          num_scalar_prefetch=0,
          grid=(nb, num_chunks),
          in_specs=in_specs,
          out_specs=out_specs,
          scratch_shapes=[
              pltpu.VMEM((chunk_T * Bp_blk, Hp), jnp.bfloat16),     # y (next-layer in)
              pltpu.VMEM((chunk_T * Bp_blk, 4 * Hp), jnp.float32),  # chunk projection
          ]),
      compiler_params=pltpu.CompilerParams(
          dimension_semantics=("parallel", "arbitrary"),
          vmem_limit_bytes=_vmem_budget_bytes(num_layers, chunk_T, Bp_blk, Hp, Dp)),
  )(x_packed, packed["w_ih0_t"], *packed["wih"], *packed["whh"], *packed["b"])


# ---------------------------------------------------------------------------
# Parameter handling (PyTorch layout -> padded / transposed / bf16 kernel layout).
# ---------------------------------------------------------------------------
def init_encoder_params(key, input_dim, hidden_dim, num_layers):
  """PyTorch-style init: U(-1/sqrt(H), 1/sqrt(H)), PyTorch weight layout."""
  bound = 1.0 / np.sqrt(hidden_dim)
  params = []
  for layer in range(num_layers):
    d_in = input_dim if layer == 0 else hidden_dim
    key, k1, k2, k3, k4 = jax.random.split(key, 5)
    params.append(dict(
        w_ih=jax.random.uniform(k1, (4 * hidden_dim, d_in), jnp.float32,
                                -bound, bound),
        w_hh=jax.random.uniform(k2, (4 * hidden_dim, hidden_dim), jnp.float32,
                                -bound, bound),
        b_ih=jax.random.uniform(k3, (4 * hidden_dim,), jnp.float32,
                                -bound, bound),
        b_hh=jax.random.uniform(k4, (4 * hidden_dim,), jnp.float32,
                                -bound, bound),
    ))
  return params


def _pad_gates_t(w, H, Hp, d_in_p):
  """w: (4H, d_in) PyTorch layout -> (d_in_p, 4Hp) transposed, gate-padded bf16."""
  w = np.asarray(w, np.float32)
  d_in = w.shape[1]
  out = np.zeros((d_in_p, 4 * Hp), np.float32)
  for k in range(4):
    out[:d_in, k * Hp:k * Hp + H] = w[k * H:(k + 1) * H, :].T
  return jnp.asarray(out).astype(jnp.bfloat16)


def _pad_gates_bias(b, H, Hp):
  b = np.asarray(b, np.float32)
  out = np.zeros((1, 4 * Hp), np.float32)
  for k in range(4):
    out[0, k * Hp:k * Hp + H] = b[k * H:(k + 1) * H]
  return jnp.asarray(out)


def pack_encoder_params(raw_params, hidden_dim, input_dim):
  """Pads H to 128 lanes (gates to 4*128), D to 128; bf16 weights, f32 biases."""
  H = hidden_dim
  Hp = _round_up(max(H, 1), 128)
  Dp = _round_up(max(input_dim, 1), 128)
  packed = {"wih": [], "whh": [], "b": []}
  for layer, p in enumerate(raw_params):
    bias = np.asarray(p["b_ih"], np.float32) + np.asarray(p["b_hh"], np.float32)
    if layer == 0:
      packed["w_ih0_t"] = _pad_gates_t(p["w_ih"], H, Hp, Dp)    # (Dp, 4Hp) bf16
    else:
      packed["wih"].append(_pad_gates_t(p["w_ih"], H, Hp, Hp))  # (Hp, 4Hp) bf16
    packed["whh"].append(_pad_gates_t(p["w_hh"], H, Hp, Hp))    # (Hp, 4Hp) bf16
    packed["b"].append(_pad_gates_bias(bias, H, Hp))            # (1, 4Hp) f32
  return packed


# ---------------------------------------------------------------------------
# Forward pass (matches nn.LSTM(batch_first=True): returns (hidden, cell)).
# ---------------------------------------------------------------------------
@functools.partial(jax.jit, static_argnames=("hidden_dim", "time_chunk"))
def encoder_forward(x, packed, *, hidden_dim, time_chunk=None):
  """x: (B, T, input_dim). Returns (hidden, cell), each (num_layers, B, hidden)."""
  B, T, D = x.shape
  num_layers = len(packed["whh"])
  Hp = packed["whh"][0].shape[0]
  Dp = packed["w_ih0_t"].shape[0]

  Bp = _round_up(max(B, 1), 8)
  Bp_blk = _pick_batch_block(Bp)
  nb = Bp // Bp_blk

  chunk_T = int(time_chunk) if time_chunk is not None else min(T, 128)
  chunk_T = max(1, min(chunk_T, T))
  num_chunks = int(pl.cdiv(T, chunk_T))
  T_pad = num_chunks * chunk_T

  # Time-major, padded, batch-blocked bf16 layout: (nb, T_pad*Bp_blk, Dp), where
  # row index within a batch block is t*Bp_blk + b_in_block.
  x_t = jnp.transpose(x.astype(jnp.float32), (1, 0, 2))          # (T, B, D)
  x_t = jnp.pad(x_t, ((0, T_pad - T), (0, Bp - B), (0, Dp - D)))
  x_t = x_t.reshape(T_pad, nb, Bp_blk, Dp).transpose(1, 0, 2, 3)
  x_packed = x_t.reshape(nb, T_pad * Bp_blk, Dp).astype(jnp.bfloat16)

  h_pad, c_pad = _encoder_pallas(
      x_packed, packed, T_total=T, chunk_T=chunk_T, num_chunks=num_chunks,
      Bp=Bp, Bp_blk=Bp_blk, Hp=Hp, Dp=Dp, num_layers=num_layers)
  return h_pad[:, :B, :hidden_dim], c_pad[:, :B, :hidden_dim]


# ---------------------------------------------------------------------------
# Pure-JAX reference (lax.scan).  Mirrors the kernel's bf16 MXU inputs
# (weights / activations bf16, f32 accumulation, f32 gates & state).
# ---------------------------------------------------------------------------
def _reference_forward(x_btd, raw_params):
  x = jnp.transpose(x_btd.astype(jnp.float32), (1, 0, 2))
  B = x.shape[1]
  hs, cs = [], []
  for p in raw_params:
    H = p["w_hh"].shape[1]
    w_ih_t = p["w_ih"].astype(jnp.bfloat16).T
    w_hh_t = p["w_hh"].astype(jnp.bfloat16).T
    bias = (p["b_ih"] + p["b_hh"]).reshape(1, -1).astype(jnp.float32)

    def step(carry, x_t, w_ih_t=w_ih_t, w_hh_t=w_hh_t, bias=bias, H=H):
      h, c = carry
      gates = (jnp.dot(x_t.astype(jnp.bfloat16), w_ih_t,
                       preferred_element_type=jnp.float32)
               + jnp.dot(h.astype(jnp.bfloat16), w_hh_t,
                         preferred_element_type=jnp.float32)
               + bias)
      i = jax.nn.sigmoid(gates[:, 0 * H:1 * H])
      f = jax.nn.sigmoid(gates[:, 1 * H:2 * H])
      g = jnp.tanh(gates[:, 2 * H:3 * H])
      o = jax.nn.sigmoid(gates[:, 3 * H:4 * H])
      c_new = f * c + i * g
      h_new = o * jnp.tanh(c_new)
      return (h_new, c_new), h_new

    init = (jnp.zeros((B, H), jnp.float32), jnp.zeros((B, H), jnp.float32))
    (h, c), y = lax.scan(step, init, x)
    hs.append(h)
    cs.append(c)
    x = y
  return jnp.stack(hs, 0), jnp.stack(cs, 0)


if __name__ == "__main__":
  INPUT_DIM, HIDDEN_DIM, NUM_LAYERS = 4, 32, 2

  key = jax.random.PRNGKey(0)
  key, pkey = jax.random.split(key)
  raw_params = init_encoder_params(pkey, INPUT_DIM, HIDDEN_DIM, NUM_LAYERS)
  packed = pack_encoder_params(raw_params, HIDDEN_DIM, INPUT_DIM)

  # (B, T, time_chunk): exercises single-chunk unrolled, multi-chunk carry with
  # fori_loop + tail masking, and multiple 'parallel' batch blocks.
  configs = [
      (2, 8, None),
      (3, 40, 16),
      (20, 12, 8),
  ]
  for B, T, time_chunk in configs:
    key, xkey = jax.random.split(key)
    x = jax.random.normal(xkey, (B, T, INPUT_DIM), jnp.float32)

    hidden, cell = encoder_forward(x, packed, hidden_dim=HIDDEN_DIM,
                                   time_chunk=time_chunk)
    hidden, cell = jax.block_until_ready((hidden, cell))

    ref_h, ref_c = _reference_forward(x, raw_params)
    np.testing.assert_allclose(np.asarray(hidden), np.asarray(ref_h),
                               rtol=2e-3, atol=2e-3)
    np.testing.assert_allclose(np.asarray(cell), np.asarray(ref_c),
                               rtol=2e-3, atol=2e-3)
    assert hidden.shape == (NUM_LAYERS, B, HIDDEN_DIM)
    assert cell.shape == (NUM_LAYERS, B, HIDDEN_DIM)

  print("KERNEL_OK")
</pallas_src>

<mosaic_0001>
module attributes {stable_mosaic.version = 11 : i64} {
  func.func @kernel(%arg0: i32, %arg1: i32, %arg2: memref<1x64x128xbf16, #tpu.memory_space<vmem>>, %arg3: memref<128x512xbf16, #tpu.memory_space<vmem>>, %arg4: memref<128x512xbf16, #tpu.memory_space<vmem>>, %arg5: memref<128x512xbf16, #tpu.memory_space<vmem>>, %arg6: memref<128x512xbf16, #tpu.memory_space<vmem>>, %arg7: memref<1x512xf32, #tpu.memory_space<vmem>>, %arg8: memref<1x512xf32, #tpu.memory_space<vmem>>, %arg9: memref<2x8x128xf32, #tpu.memory_space<vmem>>, %arg10: memref<2x8x128xf32, #tpu.memory_space<vmem>>, %arg11: memref<64x128xbf16, #tpu.memory_space<vmem>>, %arg12: memref<64x512xf32, #tpu.memory_space<vmem>>) attributes {dimension_semantics = [#tpu.dimension_semantics<parallel>, #tpu.dimension_semantics<arbitrary>], iteration_bounds = array<i64: 1, 1>, scalar_prefetch = 0 : i64, scratch_operands = 2 : i64, tpu.core_type = #tpu.core_type<tc>, window_params = [{transform_indices = @transform_0, window_bounds = array<i64: 1, 64, 128>}, {pipeline_mode = #tpu.pipeline_mode<synchronous>, transform_indices = @transform_1, window_bounds = array<i64: 128, 512>}, {pipeline_mode = #tpu.pipeline_mode<synchronous>, transform_indices = @transform_2, window_bounds = array<i64: 128, 512>}, {pipeline_mode = #tpu.pipeline_mode<synchronous>, transform_indices = @transform_3, window_bounds = array<i64: 128, 512>}, {pipeline_mode = #tpu.pipeline_mode<synchronous>, transform_indices = @transform_4, window_bounds = array<i64: 128, 512>}, {pipeline_mode = #tpu.pipeline_mode<synchronous>, transform_indices = @transform_5, window_bounds = array<i64: 1, 512>}, {pipeline_mode = #tpu.pipeline_mode<synchronous>, transform_indices = @transform_6, window_bounds = array<i64: 1, 512>}, {transform_indices = @transform_7, window_bounds = array<i64: 2, 8, 128>}, {transform_indices = @transform_8, window_bounds = array<i64: 2, 8, 128>}]} {
    %c0_i32 = arith.constant 0 : i32
    %0 = arith.cmpi eq, %arg1, %c0_i32 : i32
    %1 = arith.extui %0 : i1 to i32
    %c0_i32_0 = arith.constant 0 : i32
    %2 = arith.cmpi ne, %1, %c0_i32_0 : i32
    scf.if %2 {
      %cst_246 = arith.constant 0.000000e+00 : f32
      %616 = vector.broadcast %cst_246 : f32 to vector<2x8x128xf32>
      %c0_247 = arith.constant 0 : index
      %c0_248 = arith.constant 0 : index
      %c0_249 = arith.constant 0 : index
      %617 = vector.load %arg9[%c0_247, %c0_248, %c0_249] : memref<2x8x128xf32, #tpu.memory_space<vmem>>, vector<2x8x128xf32>
      tpu.vector_store %arg9[%c0_247, %c0_248, %c0_249], %616 {strides = array<i32>} : memref<2x8x128xf32, #tpu.memory_space<vmem>>, vector<2x8x128xf32>,
      %cst_250 = arith.constant 0.000000e+00 : f32
      %618 = vector.broadcast %cst_250 : f32 to vector<2x8x128xf32>
      %c0_251 = arith.constant 0 : index
      %c0_252 = arith.constant 0 : index
      %c0_253 = arith.constant 0 : index
      %619 = vector.load %arg10[%c0_251, %c0_252, %c0_253] : memref<2x8x128xf32, #tpu.memory_space<vmem>>, vector<2x8x128xf32>
      tpu.vector_store %arg10[%c0_251, %c0_252, %c0_253], %618 {strides = array<i32>} : memref<2x8x128xf32, #tpu.memory_space<vmem>>, vector<2x8x128xf32>,
    } else {
    }
    %c0 = arith.constant 0 : index
    %c0_1 = arith.constant 0 : index
    %c0_2 = arith.constant 0 : index
    %3 = vector.load %arg2[%c0, %c0_1, %c0_2] : memref<1x64x128xbf16, #tpu.memory_space<vmem>>, vector<1x64x128xbf16>
    %4 = vector.shape_cast %3 : vector<1x64x128xbf16> to vector<64x128xbf16>
    %c0_3 = arith.constant 0 : index
    %c0_4 = arith.constant 0 : index
    %5 = vector.load %arg3[%c0_3, %c0_4] : memref<128x512xbf16, #tpu.memory_space<vmem>>, vector<128x512xbf16>
    %cst = arith.constant dense<0.000000e+00> : vector<64x512xf32>
    %6 = tpu.matmul %4, %5, %cst {dimension_numbers = #tpu.dot_dimension_numbers<[1], [0], [0], [1], [0, 0, 1, 1], [], []>} : vector<64x128xbf16>, vector<128x512xbf16>, vector<64x512xf32> -> vector<64x512xf32>
    %c0_5 = arith.constant 0 : index
    %c0_6 = arith.constant 0 : index
    %7 = vector.load %arg7[%c0_5, %c0_6] : memref<1x512xf32, #tpu.memory_space<vmem>>, vector<1x512xf32>
    %8 = vector.broadcast %7 : vector<1x512xf32> to vector<64x512xf32>
    %9 = arith.addf %6, %8 : vector<64x512xf32>
    %c0_7 = arith.constant 0 : index
    %c0_8 = arith.constant 0 : index
    %10 = vector.load %arg12[%c0_7, %c0_8] : memref<64x512xf32, #tpu.memory_space<vmem>>, vector<64x512xf32>
    tpu.vector_store %arg12[%c0_7, %c0_8], %9 {strides = array<i32>} : memref<64x512xf32, #tpu.memory_space<vmem>>, vector<64x512xf32>,
    %c0_9 = arith.constant 0 : index
    %c0_10 = arith.constant 0 : index
    %11 = vector.load %arg5[%c0_9, %c0_10] : memref<128x512xbf16, #tpu.memory_space<vmem>>, vector<128x512xbf16>
    %c0_11 = arith.constant 0 : index
    %c0_12 = arith.constant 0 : index
    %c0_13 = arith.constant 0 : index
    %12 = vector.load %arg9[%c0_11, %c0_12, %c0_13] : memref<2x8x128xf32, #tpu.memory_space<vmem>>, vector<1x8x128xf32>
    %13 = vector.shape_cast %12 : vector<1x8x128xf32> to vector<8x128xf32>
    %c0_14 = arith.constant 0 : index
    %c0_15 = arith.constant 0 : index
    %c0_16 = arith.constant 0 : index
    %14 = vector.load %arg10[%c0_14, %c0_15, %c0_16] : memref<2x8x128xf32, #tpu.memory_space<vmem>>, vector<1x8x128xf32>
    %15 = vector.shape_cast %14 : vector<1x8x128xf32> to vector<8x128xf32>
    %c0_17 = arith.constant 0 : index
    %c0_18 = arith.constant 0 : index
    %16 = vector.load %arg12[%c0_17, %c0_18] : memref<64x512xf32, #tpu.memory_space<vmem>>, vector<8x512xf32>
    %17 = arith.truncf %13 : vector<8x128xf32> to vector<8x128xbf16>
    %cst_19 = arith.constant dense<0.000000e+00> : vector<8x512xf32>
    %18 = tpu.matmul %17, %11, %cst_19 {dimension_numbers = #tpu.dot_dimension_numbers<[1], [0], [0], [1], [0, 0, 1, 1], [], []>} : vector<8x128xbf16>, vector<128x512xbf16>, vector<8x512xf32> -> vector<8x512xf32>
    %19 = arith.addf %16, %18 : vector<8x512xf32>
    %20 = vector.extract_strided_slice %19 {offsets = [0, 0], sizes = [8, 128], strides = [1, 1]} : vector<8x512xf32> to vector<8x128xf32>
    %cst_20 = arith.constant 5.000000e-01 : f32
    %21 = vector.broadcast %cst_20 : f32 to vector<8x128xf32>
    %22 = arith.mulf %21, %20 : vector<8x128xf32>
    %23 = math.tanh %22 : vector<8x128xf32>
    %cst_21 = arith.constant 5.000000e-01 : f32
    %24 = vector.broadcast %cst_21 : f32 to vector<8x128xf32>
    %25 = arith.mulf %24, %23 : vector<8x128xf32>
    %cst_22 = arith.constant 5.000000e-01 : f32
    %26 = vector.broadcast %cst_22 : f32 to vector<8x128xf32>
    %27 = arith.addf %25, %26 : vector<8x128xf32>
    %28 = vector.extract_strided_slice %19 {offsets = [0, 128], sizes = [8, 128], strides = [1, 1]} : vector<8x512xf32> to vector<8x128xf32>
    %cst_23 = arith.constant 5.000000e-01 : f32
    %29 = vector.broadcast %cst_23 : f32 to vector<8x128xf32>
    %30 = arith.mulf %29, %28 : vector<8x128xf32>
    %31 = math.tanh %30 : vector<8x128xf32>
    %cst_24 = arith.constant 5.000000e-01 : f32
    %32 = vector.broadcast %cst_24 : f32 to vector<8x128xf32>
    %33 = arith.mulf %32, %31 : vector<8x128xf32>
    %cst_25 = arith.constant 5.000000e-01 : f32
    %34 = vector.broadcast %cst_25 : f32 to vector<8x128xf32>
    %35 = arith.addf %33, %34 : vector<8x128xf32>
    %36 = vector.extract_strided_slice %19 {offsets = [0, 256], sizes = [8, 128], strides = [1, 1]} : vector<8x512xf32> to vector<8x128xf32>
    %37 = math.tanh %36 : vector<8x128xf32>
    %38 = vector.extract_strided_slice %19 {offsets = [0, 384], sizes = [8, 128], strides = [1, 1]} : vector<8x512xf32> to vector<8x128xf32>
    %cst_26 = arith.constant 5.000000e-01 : f32
    %39 = vector.broadcast %cst_26 : f32 to vector<8x128xf32>
    %40 = arith.mulf %39, %38 : vector<8x128xf32>
    %41 = math.tanh %40 : vector<8x128xf32>
    %cst_27 = arith.constant 5.000000e-01 : f32
    %42 = vector.broadcast %cst_27 : f32 to vector<8x128xf32>
    %43 = arith.mulf %42, %41 : vector<8x128xf32>
    %cst_28 = arith.constant 5.000000e-01 : f32
    %44 = vector.broadcast %cst_28 : f32 to vector<8x128xf32>
    %45 = arith.addf %43, %44 : vector<8x128xf32>
    %46 = arith.mulf %35, %15 : vector<8x128xf32>
    %47 = arith.mulf %27, %37 : vector<8x128xf32>
    %48 = arith.addf %46, %47 : vector<8x128xf32>
    %49 = math.tanh %48 : vector<8x128xf32>
    %50 = arith.mulf %45, %49 : vector<8x128xf32>
    %51 = arith.truncf %50 : vector<8x128xf32> to vector<8x128xbf16>
    %c0_29 = arith.constant 0 : index
    %c0_30 = arith.constant 0 : index
    %52 = vector.load %arg11[%c0_29, %c0_30] : memref<64x128xbf16, #tpu.memory_space<vmem>>, vector<8x128xbf16>
    tpu.vector_store %arg11[%c0_29, %c0_30], %51 {strides = array<i32>} : memref<64x128xbf16, #tpu.memory_space<vmem>>, vector<8x128xbf16>,
    %c8 = arith.constant 8 : index
    %c0_31 = arith.constant 0 : index
    %53 = vector.load %arg12[%c8, %c0_31] : memref<64x512xf32, #tpu.memory_space<vmem>>, vector<8x512xf32>
    %54 = arith.truncf %50 : vector<8x128xf32> to vector<8x128xbf16>
    %cst_32 = arith.constant dense<0.000000e+00> : vector<8x512xf32>
    %55 = tpu.matmul %54, %11, %cst_32 {dimension_numbers = #tpu.dot_dimension_numbers<[1], [0], [0], [1], [0, 0, 1, 1], [], []>} : vector<8x128xbf16>, vector<128x512xbf16>, vector<8x512xf32> -> vector<8x512xf32>
    %56 = arith.addf %53, %55 : vector<8x512xf32>
    %57 = vector.extract_strided_slice %56 {offsets = [0, 0], sizes = [8, 128], strides = [1, 1]} : vector<8x512xf32> to vector<8x128xf32>
    %cst_33 = arith.constant 5.000000e-01 : f32
    %58 = vector.broadcast %cst_33 : f32 to vector<8x128xf32>
    %59 = arith.mulf %58, %57 : vector<8x128xf32>
    %60 = math.tanh %59 : vector<8x128xf32>
    %cst_34 = arith.constant 5.000000e-01 : f32
    %61 = vector.broadcast %cst_34 : f32 to vector<8x128xf32>
    %62 = arith.mulf %61, %60 : vector<8x128xf32>
    %cst_35 = arith.constant 5.000000e-01 : f32
    %63 = vector.broadcast %cst_35 : f32 to vector<8x128xf32>
    %64 = arith.addf %62, %63 : vector<8x128xf32>
    %65 = vector.extract_strided_slice %56 {offsets = [0, 128], sizes = [8, 128], strides = [1, 1]} : vector<8x512xf32> to vector<8x128xf32>
    %cst_36 = arith.constant 5.000000e-01 : f32
    %66 = vector.broadcast %cst_36 : f32 to vector<8x128xf32>
    %67 = arith.mulf %66, %65 : vector<8x128xf32>
    %68 = math.tanh %67 : vector<8x128xf32>
    %cst_37 = arith.constant 5.000000e-01 : f32
    %69 = vector.broadcast %cst_37 : f32 to vector<8x128xf32>
    %70 = arith.mulf %69, %68 : vector<8x128xf32>
    %cst_38 = arith.constant 5.000000e-01 : f32
    %71 = vector.broadcast %cst_38 : f32 to vector<8x128xf32>
    %72 = arith.addf %70, %71 : vector<8x128xf32>
    %73 = vector.extract_strided_slice %56 {offsets = [0, 256], sizes = [8, 128], strides = [1, 1]} : vector<8x512xf32> to vector<8x128xf32>
    %74 = math.tanh %73 : vector<8x128xf32>
    %75 = vector.extract_strided_slice %56 {offsets = [0, 384], sizes = [8, 128], strides = [1, 1]} : vector<8x512xf32> to vector<8x128xf32>
    %cst_39 = arith.constant 5.000000e-01 : f32
    %76 = vector.broadcast %cst_39 : f32 to vector<8x128xf32>
    %77 = arith.mulf %76, %75 : vector<8x128xf32>
    %78 = math.tanh %77 : vector<8x128xf32>
    %cst_40 = arith.constant 5.000000e-01 : f32
    %79 = vector.broadcast %cst_40 : f32 to vector<8x128xf32>
    %80 = arith.mulf %79, %78 : vector<8x128xf32>
    %cst_41 = arith.constant 5.000000e-01 : f32
    %81 = vector.broadcast %cst_41 : f32 to vector<8x128xf32>
    %82 = arith.addf %80, %81 : vector<8x128xf32>
    %83 = arith.mulf %72, %48 : vector<8x128xf32>
    %84 = arith.mulf %64, %74 : vector<8x128xf32>
    %85 = arith.addf %83, %84 : vector<8x128xf32>
    %86 = math.tanh %85 : vector<8x128xf32>
    %87 = arith.mulf %82, %86 : vector<8x128xf32>
    %88 = arith.truncf %87 : vector<8x128xf32> to vector<8x128xbf16>
    %c8_42 = arith.constant 8 : index
    %c0_43 = arith.constant 0 : index
    %89 = vector.load %arg11[%c8_42, %c0_43] : memref<64x128xbf16, #tpu.memory_space<vmem>>, vector<8x128xbf16>
    tpu.vector_store %arg11[%c8_42, %c0_43], %88 {strides = array<i32>} : memref<64x128xbf16, #tpu.memory_space<vmem>>, vector<8x128xbf16>,
    %c16 = arith.constant 16 : index
    %c0_44 = arith.constant 0 : index
    %90 = vector.load %arg12[%c16, %c0_44] : memref<64x512xf32, #tpu.memory_space<vmem>>, vector<8x512xf32>
    %91 = arith.truncf %87 : vector<8x128xf32> to vector<8x128xbf16>
    %cst_45 = arith.constant dense<0.000000e+00> : vector<8x512xf32>
    %92 = tpu.matmul %91, %11, %cst_45 {dimension_numbers = #tpu.dot_dimension_numbers<[1], [0], [0], [1], [0, 0, 1, 1], [], []>} : vector<8x128xbf16>, vector<128x512xbf16>, vector<8x512xf32> -> vector<8x512xf32>
    %93 = arith.addf %90, %92 : vector<8x512xf32>
    %94 = vector.extract_strided_slice %93 {offsets = [0, 0], sizes = [8, 128], strides = [1, 1]} : vector<8x512xf32> to vector<8x128xf32>
    %cst_46 = arith.constant 5.000000e-01 : f32
    %95 = vector.broadcast %cst_46 : f32 to vector<8x128xf32>
    %96 = arith.mulf %95, %94 : vector<8x128xf32>
    %97 = math.tanh %96 : vector<8x128xf32>
    %cst_47 = arith.constant 5.000000e-01 : f32
    %98 = vector.broadcast %cst_47 : f32 to vector<8x128xf32>
    %99 = arith.mulf %98, %97 : vector<8x128xf32>
    %cst_48 = arith.constant 5.000000e-01 : f32
    %100 = vector.broadcast %cst_48 : f32 to vector<8x128xf32>
    %101 = arith.addf %99, %100 : vector<8x128xf32>
    %102 = vector.extract_strided_slice %93 {offsets = [0, 128], sizes = [8, 128], strides = [1, 1]} : vector<8x512xf32> to vector<8x128xf32>
    %cst_49 = arith.constant 5.000000e-01 : f32
    %103 = vector.broadcast %cst_49 : f32 to vector<8x128xf32>
    %104 = arith.mulf %103, %102 : vector<8x128xf32>
    %105 = math.tanh %104 : vector<8x128xf32>
    %cst_50 = arith.constant 5.000000e-01 : f32
    %106 = vector.broadcast %cst_50 : f32 to vector<8x128xf32>
    %107 = arith.mulf %106, %105 : vector<8x128xf32>
    %cst_51 = arith.constant 5.000000e-01 : f32
    %108 = vector.broadcast %cst_51 : f32 to vector<8x128xf32>
    %109 = arith.addf %107, %108 : vector<8x128xf32>
    %110 = vector.extract_strided_slice %93 {offsets = [0, 256], sizes = [8, 128], strides = [1, 1]} : vector<8x512xf32> to vector<8x128xf32>
    %111 = math.tanh %110 : vector<8x128xf32>
    %112 = vector.extract_strided_slice %93 {offsets = [0, 384], sizes = [8, 128], strides = [1, 1]} : vector<8x512xf32> to vector<8x128xf32>
    %cst_52 = arith.constant 5.000000e-01 : f32
    %113 = vector.broadcast %cst_52 : f32 to vector<8x128xf32>
    %114 = arith.mulf %113, %112 : vector<8x128xf32>
    %115 = math.tanh %114 : vector<8x128xf32>
    %cst_53 = arith.constant 5.000000e-01 : f32
    %116 = vector.broadcast %cst_53 : f32 to vector<8x128xf32>
    %117 = arith.mulf %116, %115 : vector<8x128xf32>
    %cst_54 = arith.constant 5.000000e-01 : f32
    %118 = vector.broadcast %cst_54 : f32 to vector<8x128xf32>
    %119 = arith.addf %117, %118 : vector<8x128xf32>
    %120 = arith.mulf %109, %85 : vector<8x128xf32>
    %121 = arith.mulf %101, %111 : vector<8x128xf32>
    %122 = arith.addf %120, %121 : vector<8x128xf32>
    %123 = math.tanh %122 : vector<8x128xf32>
    %124 = arith.mulf %119, %123 : vector<8x128xf32>
    %125 = arith.truncf %124 : vector<8x128xf32> to vector<8x128xbf16>
    %c16_55 = arith.constant 16 : index
    %c0_56 = arith.constant 0 : index
    %126 = vector.load %arg11[%c16_55, %c0_56] : memref<64x128xbf16, #tpu.memory_space<vmem>>, vector<8x128xbf16>
    tpu.vector_store %arg11[%c16_55, %c0_56], %125 {strides = array<i32>} : memref<64x128xbf16, #tpu.memory_space<vmem>>, vector<8x128xbf16>,
    %c24 = arith.constant 24 : index
    %c0_57 = arith.constant 0 : index
    %127 = vector.load %arg12[%c24, %c0_57] : memref<64x512xf32, #tpu.memory_space<vmem>>, vector<8x512xf32>
    %128 = arith.truncf %124 : vector<8x128xf32> to vector<8x128xbf16>
    %cst_58 = arith.constant dense<0.000000e+00> : vector<8x512xf32>
    %129 = tpu.matmul %128, %11, %cst_58 {dimension_numbers = #tpu.dot_dimension_numbers<[1], [0], [0], [1], [0, 0, 1, 1], [], []>} : vector<8x128xbf16>, vector<128x512xbf16>, vector<8x512xf32> -> vector<8x512xf32>
    %130 = arith.addf %127, %129 : vector<8x512xf32>
    %131 = vector.extract_strided_slice %130 {offsets = [0, 0], sizes = [8, 128], strides = [1, 1]} : vector<8x512xf32> to vector<8x128xf32>
    %cst_59 = arith.constant 5.000000e-01 : f32
    %132 = vector.broadcast %cst_59 : f32 to vector<8x128xf32>
    %133 = arith.mulf %132, %131 : vector<8x128xf32>
    %134 = math.tanh %133 : vector<8x128xf32>
    %cst_60 = arith.constant 5.000000e-01 : f32
    %135 = vector.broadcast %cst_60 : f32 to vector<8x128xf32>
    %136 = arith.mulf %135, %134 : vector<8x128xf32>
    %cst_61 = arith.constant 5.000000e-01 : f32
    %137 = vector.broadcast %cst_61 : f32 to vector<8x128xf32>
    %138 = arith.addf %136, %137 : vector<8x128xf32>
    %139 = vector.extract_strided_slice %130 {offsets = [0, 128], sizes = [8, 128], strides = [1, 1]} : vector<8x512xf32> to vector<8x128xf32>
    %cst_62 = arith.constant 5.000000e-01 : f32
    %140 = vector.broadcast %cst_62 : f32 to vector<8x128xf32>
    %141 = arith.mulf %140, %139 : vector<8x128xf32>
    %142 = math.tanh %141 : vector<8x128xf32>
    %cst_63 = arith.constant 5.000000e-01 : f32
    %143 = vector.broadcast %cst_63 : f32 to vector<8x128xf32>
    %144 = arith.mulf %143, %142 : vector<8x128xf32>
    %cst_64 = arith.constant 5.000000e-01 : f32
    %145 = vector.broadcast %cst_64 : f32 to vector<8x128xf32>
    %146 = arith.addf %144, %145 : vector<8x128xf32>
    %147 = vector.extract_strided_slice %130 {offsets = [0, 256], sizes = [8, 128], strides = [1, 1]} : vector<8x512xf32> to vector<8x128xf32>
    %148 = math.tanh %147 : vector<8x128xf32>
    %149 = vector.extract_strided_slice %130 {offsets = [0, 384], sizes = [8, 128], strides = [1, 1]} : vector<8x512xf32> to vector<8x128xf32>
    %cst_65 = arith.constant 5.000000e-01 : f32
    %150 = vector.broadcast %cst_65 : f32 to vector<8x128xf32>
    %151 = arith.mulf %150, %149 : vector<8x128xf32>
    %152 = math.tanh %151 : vector<8x128xf32>
    %cst_66 = arith.constant 5.000000e-01 : f32
    %153 = vector.broadcast %cst_66 : f32 to vector<8x128xf32>
    %154 = arith.mulf %153, %152 : vector<8x128xf32>
    %cst_67 = arith.constant 5.000000e-01 : f32
    %155 = vector.broadcast %cst_67 : f32 to vector<8x128xf32>
    %156 = arith.addf %154, %155 : vector<8x128xf32>
    %157 = arith.mulf %146, %122 : vector<8x128xf32>
    %158 = arith.mulf %138, %148 : vector<8x128xf32>
    %159 = arith.addf %157, %158 : vector<8x128xf32>
    %160 = math.tanh %159 : vector<8x128xf32>
    %161 = arith.mulf %156, %160 : vector<8x128xf32>
    %162 = arith.truncf %161 : vector<8x128xf32> to vector<8x128xbf16>
    %c24_68 = arith.constant 24 : index
    %c0_69 = arith.constant 0 : index
    %163 = vector.load %arg11[%c24_68, %c0_69] : memref<64x128xbf16, #tpu.memory_space<vmem>>, vector<8x128xbf16>
    tpu.vector_store %arg11[%c24_68, %c0_69], %162 {strides = array<i32>} : memref<64x128xbf16, #tpu.memory_space<vmem>>, vector<8x128xbf16>,
    %c32 = arith.constant 32 : index
    %c0_70 = arith.constant 0 : index
    %164 = vector.load %arg12[%c32, %c0_70] : memref<64x512xf32, #tpu.memory_space<vmem>>, vector<8x512xf32>
    %165 = arith.truncf %161 : vector<8x128xf32> to vector<8x128xbf16>
    %cst_71 = arith.constant dense<0.000000e+00> : vector<8x512xf32>
    %166 = tpu.matmul %165, %11, %cst_71 {dimension_numbers = #tpu.dot_dimension_numbers<[1], [0], [0], [1], [0, 0, 1, 1], [], []>} : vector<8x128xbf16>, vector<128x512xbf16>, vector<8x512xf32> -> vector<8x512xf32>
    %167 = arith.addf %164, %166 : vector<8x512xf32>
    %168 = vector.extract_strided_slice %167 {offsets = [0, 0], sizes = [8, 128], strides = [1, 1]} : vector<8x512xf32> to vector<8x128xf32>
    %cst_72 = arith.constant 5.000000e-01 : f32
    %169 = vector.broadcast %cst_72 : f32 to vector<8x128xf32>
    %170 = arith.mulf %169, %168 : vector<8x128xf32>
    %171 = math.tanh %170 : vector<8x128xf32>
    %cst_73 = arith.constant 5.000000e-01 : f32
    %172 = vector.broadcast %cst_73 : f32 to vector<8x128xf32>
    %173 = arith.mulf %172, %171 : vector<8x128xf32>
    %cst_74 = arith.constant 5.000000e-01 : f32
    %174 = vector.broadcast %cst_74 : f32 to vector<8x128xf32>
    %175 = arith.addf %173, %174 : vector<8x128xf32>
    %176 = vector.extract_strided_slice %167 {offsets = [0, 128], sizes = [8, 128], strides = [1, 1]} : vector<8x512xf32> to vector<8x128xf32>
    %cst_75 = arith.constant 5.000000e-01 : f32
    %177 = vector.broadcast %cst_75 : f32 to vector<8x128xf32>
    %178 = arith.mulf %177, %176 : vector<8x128xf32>
    %179 = math.tanh %178 : vector<8x128xf32>
    %cst_76 = arith.constant 5.000000e-01 : f32
    %180 = vector.broadcast %cst_76 : f32 to vector<8x128xf32>
    %181 = arith.mulf %180, %179 : vector<8x128xf32>
    %cst_77 = arith.constant 5.000000e-01 : f32
    %182 = vector.broadcast %cst_77 : f32 to vector<8x128xf32>
    %183 = arith.addf %181, %182 : vector<8x128xf32>
    %184 = vector.extract_strided_slice %167 {offsets = [0, 256], sizes = [8, 128], strides = [1, 1]} : vector<8x512xf32> to vector<8x128xf32>
    %185 = math.tanh %184 : vector<8x128xf32>
    %186 = vector.extract_strided_slice %167 {offsets = [0, 384], sizes = [8, 128], strides = [1, 1]} : vector<8x512xf32> to vector<8x128xf32>
    %cst_78 = arith.constant 5.000000e-01 : f32
    %187 = vector.broadcast %cst_78 : f32 to vector<8x128xf32>
    %188 = arith.mulf %187, %186 : vector<8x128xf32>
    %189 = math.tanh %188 : vector<8x128xf32>
    %cst_79 = arith.constant 5.000000e-01 : f32
    %190 = vector.broadcast %cst_79 : f32 to vector<8x128xf32>
    %191 = arith.mulf %190, %189 : vector<8x128xf32>
    %cst_80 = arith.constant 5.000000e-01 : f32
    %192 = vector.broadcast %cst_80 : f32 to vector<8x128xf32>
    %193 = arith.addf %191, %192 : vector<8x128xf32>
    %194 = arith.mulf %183, %159 : vector<8x128xf32>
    %195 = arith.mulf %175, %185 : vector<8x128xf32>
    %196 = arith.addf %194, %195 : vector<8x128xf32>
    %197 = math.tanh %196 : vector<8x128xf32>
    %198 = arith.mulf %193, %197 : vector<8x128xf32>
    %199 = arith.truncf %198 : vector<8x128xf32> to vector<8x128xbf16>
    %c32_81 = arith.constant 32 : index
    %c0_82 = arith.constant 0 : index
    %200 = vector.load %arg11[%c32_81, %c0_82] : memref<64x128xbf16, #tpu.memory_space<vmem>>, vector<8x128xbf16>
    tpu.vector_store %arg11[%c32_81, %c0_82], %199 {strides = array<i32>} : memref<64x128xbf16, #tpu.memory_space<vmem>>, vector<8x128xbf16>,
    %c40 = arith.constant 40 : index
    %c0_83 = arith.constant 0 : index
    %201 = vector.load %arg12[%c40, %c0_83] : memref<64x512xf32, #tpu.memory_space<vmem>>, vector<8x512xf32>
    %202 = arith.truncf %198 : vector<8x128xf32> to vector<8x128xbf16>
    %cst_84 = arith.constant dense<0.000000e+00> : vector<8x512xf32>
    %203 = tpu.matmul %202, %11, %cst_84 {dimension_numbers = #tpu.dot_dimension_numbers<[1], [0], [0], [1], [0, 0, 1, 1], [], []>} : vector<8x128xbf16>, vector<128x512xbf16>, vector<8x512xf32> -> vector<8x512xf32>
    %204 = arith.addf %201, %203 : vector<8x512xf32>
    %205 = vector.extract_strided_slice %204 {offsets = [0, 0], sizes = [8, 128], strides = [1, 1]} : vector<8x512xf32> to vector<8x128xf32>
    %cst_85 = arith.constant 5.000000e-01 : f32
    %206 = vector.broadcast %cst_85 : f32 to vector<8x128xf32>
    %207 = arith.mulf %206, %205 : vector<8x128xf32>
    %208 = math.tanh %207 : vector<8x128xf32>
    %cst_86 = arith.constant 5.000000e-01 : f32
    %209 = vector.broadcast %cst_86 : f32 to vector<8x128xf32>
    %210 = arith.mulf %209, %208 : vector<8x128xf32>
    %cst_87 = arith.constant 5.000000e-01 : f32
    %211 = vector.broadcast %cst_87 : f32 to vector<8x128xf32>
    %212 = arith.addf %210, %211 : vector<8x128xf32>
    %213 = vector.extract_strided_slice %204 {offsets = [0, 128], sizes = [8, 128], strides = [1, 1]} : vector<8x512xf32> to vector<8x128xf32>
    %cst_88 = arith.constant 5.000000e-01 : f32
    %214 = vector.broadcast %cst_88 : f32 to vector<8x128xf32>
    %215 = arith.mulf %214, %213 : vector<8x128xf32>
    %216 = math.tanh %215 : vector<8x128xf32>
    %cst_89 = arith.constant 5.000000e-01 : f32
    %217 = vector.broadcast %cst_89 : f32 to vector<8x128xf32>
    %218 = arith.mulf %217, %216 : vector<8x128xf32>
    %cst_90 = arith.constant 5.000000e-01 : f32
    %219 = vector.broadcast %cst_90 : f32 to vector<8x128xf32>
    %220 = arith.addf %218, %219 : vector<8x128xf32>
    %221 = vector.extract_strided_slice %204 {offsets = [0, 256], sizes = [8, 128], strides = [1, 1]} : vector<8x512xf32> to vector<8x128xf32>
    %222 = math.tanh %221 : vector<8x128xf32>
    %223 = vector.extract_strided_slice %204 {offsets = [0, 384], sizes = [8, 128], strides = [1, 1]} : vector<8x512xf32> to vector<8x128xf32>
    %cst_91 = arith.constant 5.000000e-01 : f32
    %224 = vector.broadcast %cst_91 : f32 to vector<8x128xf32>
    %225 = arith.mulf %224, %223 : vector<8x128xf32>
    %226 = math.tanh %225 : vector<8x128xf32>
    %cst_92 = arith.constant 5.000000e-01 : f32
    %227 = vector.broadcast %cst_92 : f32 to vector<8x128xf32>
    %228 = arith.mulf %227, %226 : vector<8x128xf32>
    %cst_93 = arith.constant 5.000000e-01 : f32
    %229 = vector.broadcast %cst_93 : f32 to vector<8x128xf32>
    %230 = arith.addf %228, %229 : vector<8x128xf32>
    %231 = arith.mulf %220, %196 : vector<8x128xf32>
    %232 = arith.mulf %212, %222 : vector<8x128xf32>
    %233 = arith.addf %231, %232 : vector<8x128xf32>
    %234 = math.tanh %233 : vector<8x128xf32>
    %235 = arith.mulf %230, %234 : vector<8x128xf32>
    %236 = arith.truncf %235 : vector<8x128xf32> to vector<8x128xbf16>
    %c40_94 = arith.constant 40 : index
    %c0_95 = arith.constant 0 : index
    %237 = vector.load %arg11[%c40_94, %c0_95] : memref<64x128xbf16, #tpu.memory_space<vmem>>, vector<8x128xbf16>
    tpu.vector_store %arg11[%c40_94, %c0_95], %236 {strides = array<i32>} : memref<64x128xbf16, #tpu.memory_space<vmem>>, vector<8x128xbf16>,
    %c48 = arith.constant 48 : index
    %c0_96 = arith.constant 0 : index
    %238 = vector.load %arg12[%c48, %c0_96] : memref<64x512xf32, #tpu.memory_space<vmem>>, vector<8x512xf32>
    %239 = arith.truncf %235 : vector<8x128xf32> to vector<8x128xbf16>
    %cst_97 = arith.constant dense<0.000000e+00> : vector<8x512xf32>
    %240 = tpu.matmul %239, %11, %cst_97 {dimension_numbers = #tpu.dot_dimension_numbers<[1], [0], [0], [1], [0, 0, 1, 1], [], []>} : vector<8x128xbf16>, vector<128x512xbf16>, vector<8x512xf32> -> vector<8x512xf32>
    %241 = arith.addf %238, %240 : vector<8x512xf32>
    %242 = vector.extract_strided_slice %241 {offsets = [0, 0], sizes = [8, 128], strides = [1, 1]} : vector<8x512xf32> to vector<8x128xf32>
    %cst_98 = arith.constant 5.000000e-01 : f32
    %243 = vector.broadcast %cst_98 : f32 to vector<8x128xf32>
    %244 = arith.mulf %243, %242 : vector<8x128xf32>
    %245 = math.tanh %244 : vector<8x128xf32>
    %cst_99 = arith.constant 5.000000e-01 : f32
    %246 = vector.broadcast %cst_99 : f32 to vector<8x128xf32>
    %247 = arith.mulf %246, %245 : vector<8x128xf32>
    %cst_100 = arith.constant 5.000000e-01 : f32
    %248 = vector.broadcast %cst_100 : f32 to vector<8x128xf32>
    %249 = arith.addf %247, %248 : vector<8x128xf32>
    %250 = vector.extract_strided_slice %241 {offsets = [0, 128], sizes = [8, 128], strides = [1, 1]} : vector<8x512xf32> to vector<8x128xf32>
    %cst_101 = arith.constant 5.000000e-01 : f32
    %251 = vector.broadcast %cst_101 : f32 to vector<8x128xf32>
    %252 = arith.mulf %251, %250 : vector<8x128xf32>
    %253 = math.tanh %252 : vector<8x128xf32>
    %cst_102 = arith.constant 5.000000e-01 : f32
    %254 = vector.broadcast %cst_102 : f32 to vector<8x128xf32>
    %255 = arith.mulf %254, %253 : vector<8x128xf32>
    %cst_103 = arith.constant 5.000000e-01 : f32
    %256 = vector.broadcast %cst_103 : f32 to vector<8x128xf32>
    %257 = arith.addf %255, %256 : vector<8x128xf32>
    %258 = vector.extract_strided_slice %241 {offsets = [0, 256], sizes = [8, 128], strides = [1, 1]} : vector<8x512xf32> to vector<8x128xf32>
    %259 = math.tanh %258 : vector<8x128xf32>
    %260 = vector.extract_strided_slice %241 {offsets = [0, 384], sizes = [8, 128], strides = [1, 1]} : vector<8x512xf32> to vector<8x128xf32>
    %cst_104 = arith.constant 5.000000e-01 : f32
    %261 = vector.broadcast %cst_104 : f32 to vector<8x128xf32>
    %262 = arith.mulf %261, %260 : vector<8x128xf32>
    %263 = math.tanh %262 : vector<8x128xf32>
    %cst_105 = arith.constant 5.000000e-01 : f32
    %264 = vector.broadcast %cst_105 : f32 to vector<8x128xf32>
    %265 = arith.mulf %264, %263 : vector<8x128xf32>
    %cst_106 = arith.constant 5.000000e-01 : f32
    %266 = vector.broadcast %cst_106 : f32 to vector<8x128xf32>
    %267 = arith.addf %265, %266 : vector<8x128xf32>
    %268 = arith.mulf %257, %233 : vector<8x128xf32>
    %269 = arith.mulf %249, %259 : vector<8x128xf32>
    %270 = arith.addf %268, %269 : vector<8x128xf32>
    %271 = math.tanh %270 : vector<8x128xf32>
    %272 = arith.mulf %267, %271 : vector<8x128xf32>
    %273 = arith.truncf %272 : vector<8x128xf32> to vector<8x128xbf16>
    %c48_107 = arith.constant 48 : index
    %c0_108 = arith.constant 0 : index
    %274 = vector.load %arg11[%c48_107, %c0_108] : memref<64x128xbf16, #tpu.memory_space<vmem>>, vector<8x128xbf16>
    tpu.vector_store %arg11[%c48_107, %c0_108], %273 {strides = array<i32>} : memref<64x128xbf16, #tpu.memory_space<vmem>>, vector<8x128xbf16>,
    %c56 = arith.constant 56 : index
    %c0_109 = arith.constant 0 : index
    %275 = vector.load %arg12[%c56, %c0_109] : memref<64x512xf32, #tpu.memory_space<vmem>>, vector<8x512xf32>
    %276 = arith.truncf %272 : vector<8x128xf32> to vector<8x128xbf16>
    %cst_110 = arith.constant dense<0.000000e+00> : vector<8x512xf32>
    %277 = tpu.matmul %276, %11, %cst_110 {dimension_numbers = #tpu.dot_dimension_numbers<[1], [0], [0], [1], [0, 0, 1, 1], [], []>} : vector<8x128xbf16>, vector<128x512xbf16>, vector<8x512xf32> -> vector<8x512xf32>
    %278 = arith.addf %275, %277 : vector<8x512xf32>
    %279 = vector.extract_strided_slice %278 {offsets = [0, 0], sizes = [8, 128], strides = [1, 1]} : vector<8x512xf32> to vector<8x128xf32>
    %cst_111 = arith.constant 5.000000e-01 : f32
    %280 = vector.broadcast %cst_111 : f32 to vector<8x128xf32>
    %281 = arith.mulf %280, %279 : vector<8x128xf32>
    %282 = math.tanh %281 : vector<8x128xf32>
    %cst_112 = arith.constant 5.000000e-01 : f32
    %283 = vector.broadcast %cst_112 : f32 to vector<8x128xf32>
    %284 = arith.mulf %283, %282 : vector<8x128xf32>
    %cst_113 = arith.constant 5.000000e-01 : f32
    %285 = vector.broadcast %cst_113 : f32 to vector<8x128xf32>
    %286 = arith.addf %284, %285 : vector<8x128xf32>
    %287 = vector.extract_strided_slice %278 {offsets = [0, 128], sizes = [8, 128], strides = [1, 1]} : vector<8x512xf32> to vector<8x128xf32>
    %cst_114 = arith.constant 5.000000e-01 : f32
    %288 = vector.broadcast %cst_114 : f32 to vector<8x128xf32>
    %289 = arith.mulf %288, %287 : vector<8x128xf32>
    %290 = math.tanh %289 : vector<8x128xf32>
    %cst_115 = arith.constant 5.000000e-01 : f32
    %291 = vector.broadcast %cst_115 : f32 to vector<8x128xf32>
    %292 = arith.mulf %291, %290 : vector<8x128xf32>
    %cst_116 = arith.constant 5.000000e-01 : f32
    %293 = vector.broadcast %cst_116 : f32 to vector<8x128xf32>
    %294 = arith.addf %292, %293 : vector<8x128xf32>
    %295 = vector.extract_strided_slice %278 {offsets = [0, 256], sizes = [8, 128], strides = [1, 1]} : vector<8x512xf32> to vector<8x128xf32>
    %296 = math.tanh %295 : vector<8x128xf32>
    %297 = vector.extract_strided_slice %278 {offsets = [0, 384], sizes = [8, 128], strides = [1, 1]} : vector<8x512xf32> to vector<8x128xf32>
    %cst_117 = arith.constant 5.000000e-01 : f32
    %298 = vector.broadcast %cst_117 : f32 to vector<8x128xf32>
    %299 = arith.mulf %298, %297 : vector<8x128xf32>
    %300 = math.tanh %299 : vector<8x128xf32>
    %cst_118 = arith.constant 5.000000e-01 : f32
    %301 = vector.broadcast %cst_118 : f32 to vector<8x128xf32>
    %302 = arith.mulf %301, %300 : vector<8x128xf32>
    %cst_119 = arith.constant 5.000000e-01 : f32
    %303 = vector.broadcast %cst_119 : f32 to vector<8x128xf32>
    %304 = arith.addf %302, %303 : vector<8x128xf32>
    %305 = arith.mulf %294, %270 : vector<8x128xf32>
    %306 = arith.mulf %286, %296 : vector<8x128xf32>
    %307 = arith.addf %305, %306 : vector<8x128xf32>
    %308 = math.tanh %307 : vector<8x128xf32>
    %309 = arith.mulf %304, %308 : vector<8x128xf32>
    %310 = arith.truncf %309 : vector<8x128xf32> to vector<8x128xbf16>
    %c56_120 = arith.constant 56 : index
    %c0_121 = arith.constant 0 : index
    %311 = vector.load %arg11[%c56_120, %c0_121] : memref<64x128xbf16, #tpu.memory_space<vmem>>, vector<8x128xbf16>
    tpu.vector_store %arg11[%c56_120, %c0_121], %310 {strides = array<i32>} : memref<64x128xbf16, #tpu.memory_space<vmem>>, vector<8x128xbf16>,
    %c0_122 = arith.constant 0 : index
    %c0_123 = arith.constant 0 : index
    %c0_124 = arith.constant 0 : index
    %312 = vector.load %arg9[%c0_122, %c0_123, %c0_124] : memref<2x8x128xf32, #tpu.memory_space<vmem>>, vector<1x8x128xf32>
    %313 = vector.shape_cast %312 : vector<1x8x128xf32> to vector<8x128xf32>
    %314 = vector.shape_cast %309 : vector<8x128xf32> to vector<1x8x128xf32>
    tpu.vector_store %arg9[%c0_122, %c0_123, %c0_124], %314 {strides = array<i32>} : memref<2x8x128xf32, #tpu.memory_space<vmem>>, vector<1x8x128xf32>,
    %c0_125 = arith.constant 0 : index
    %c0_126 = arith.constant 0 : index
    %c0_127 = arith.constant 0 : index
    %315 = vector.load %arg10[%c0_125, %c0_126, %c0_127] : memref<2x8x128xf32, #tpu.memory_space<vmem>>, vector<1x8x128xf32>
    %316 = vector.shape_cast %315 : vector<1x8x128xf32> to vector<8x128xf32>
    %317 = vector.shape_cast %307 : vector<8x128xf32> to vector<1x8x128xf32>
    tpu.vector_store %arg10[%c0_125, %c0_126, %c0_127], %317 {strides = array<i32>} : memref<2x8x128xf32, #tpu.memory_space<vmem>>, vector<1x8x128xf32>,
    %c0_128 = arith.constant 0 : index
    %c0_129 = arith.constant 0 : index
    %318 = vector.load %arg11[%c0_128, %c0_129] : memref<64x128xbf16, #tpu.memory_space<vmem>>, vector<64x128xbf16>
    %c0_130 = arith.constant 0 : index
    %c0_131 = arith.constant 0 : index
    %319 = vector.load %arg4[%c0_130, %c0_131] : memref<128x512xbf16, #tpu.memory_space<vmem>>, vector<128x512xbf16>
    %cst_132 = arith.constant dense<0.000000e+00> : vector<64x512xf32>
    %320 = tpu.matmul %318, %319, %cst_132 {dimension_numbers = #tpu.dot_dimension_numbers<[1], [0], [0], [1], [0, 0, 1, 1], [], []>} : vector<64x128xbf16>, vector<128x512xbf16>, vector<64x512xf32> -> vector<64x512xf32>
    %c0_133 = arith.constant 0 : index
    %c0_134 = arith.constant 0 : index
    %321 = vector.load %arg8[%c0_133, %c0_134] : memref<1x512xf32, #tpu.memory_space<vmem>>, vector<1x512xf32>
    %322 = vector.broadcast %321 : vector<1x512xf32> to vector<64x512xf32>
    %323 = arith.addf %320, %322 : vector<64x512xf32>
    %c0_135 = arith.constant 0 : index
    %c0_136 = arith.constant 0 : index
    %324 = vector.load %arg12[%c0_135, %c0_136] : memref<64x512xf32, #tpu.memory_space<vmem>>, vector<64x512xf32>
    tpu.vector_store %arg12[%c0_135, %c0_136], %323 {strides = array<i32>} : memref<64x512xf32, #tpu.memory_space<vmem>>, vector<64x512xf32>,
    %c0_137 = arith.constant 0 : index
    %c0_138 = arith.constant 0 : index
    %325 = vector.load %arg6[%c0_137, %c0_138] : memref<128x512xbf16, #tpu.memory_space<vmem>>, vector<128x512xbf16>
    %c1 = arith.constant 1 : index
    %c0_139 = arith.constant 0 : index
    %c0_140 = arith.constant 0 : index
    %326 = vector.load %arg9[%c1, %c0_139, %c0_140] : memref<2x8x128xf32, #tpu.memory_space<vmem>>, vector<1x8x128xf32>
    %327 = vector.shape_cast %326 : vector<1x8x128xf32> to vector<8x128xf32>
    %c1_141 = arith.constant 1 : index
    %c0_142 = arith.constant 0 : index
    %c0_143 = arith.constant 0 : index
    %328 = vector.load %arg10[%c1_141, %c0_142, %c0_143] : memref<2x8x128xf32, #tpu.memory_space<vmem>>, vector<1x8x128xf32>
    %329 = vector.shape_cast %328 : vector<1x8x128xf32> to vector<8x128xf32>
    %c0_144 = arith.constant 0 : index
    %c0_145 = arith.constant 0 : index
    %330 = vector.load %arg12[%c0_144, %c0_145] : memref<64x512xf32, #tpu.memory_space<vmem>>, vector<8x512xf32>
    %331 = arith.truncf %327 : vector<8x128xf32> to vector<8x128xbf16>
    %cst_146 = arith.constant dense<0.000000e+00> : vector<8x512xf32>
    %332 = tpu.matmul %331, %325, %cst_146 {dimension_numbers = #tpu.dot_dimension_numbers<[1], [0], [0], [1], [0, 0, 1, 1], [], []>} : vector<8x128xbf16>, vector<128x512xbf16>, vector<8x512xf32> -> vector<8x512xf32>
    %333 = arith.addf %330, %332 : vector<8x512xf32>
    %334 = vector.extract_strided_slice %333 {offsets = [0, 0], sizes = [8, 128], strides = [1, 1]} : vector<8x512xf32> to vector<8x128xf32>
    %cst_147 = arith.constant 5.000000e-01 : f32
    %335 = vector.broadcast %cst_147 : f32 to vector<8x128xf32>
    %336 = arith.mulf %335, %334 : vector<8x128xf32>
    %337 = math.tanh %336 : vector<8x128xf32>
    %cst_148 = arith.constant 5.000000e-01 : f32
    %338 = vector.broadcast %cst_148 : f32 to vector<8x128xf32>
    %339 = arith.mulf %338, %337 : vector<8x128xf32>
    %cst_149 = arith.constant 5.000000e-01 : f32
    %340 = vector.broadcast %cst_149 : f32 to vector<8x128xf32>
    %341 = arith.addf %339, %340 : vector<8x128xf32>
    %342 = vector.extract_strided_slice %333 {offsets = [0, 128], sizes = [8, 128], strides = [1, 1]} : vector<8x512xf32> to vector<8x128xf32>
    %cst_150 = arith.constant 5.000000e-01 : f32
    %343 = vector.broadcast %cst_150 : f32 to vector<8x128xf32>
    %344 = arith.mulf %343, %342 : vector<8x128xf32>
    %345 = math.tanh %344 : vector<8x128xf32>
    %cst_151 = arith.constant 5.000000e-01 : f32
    %346 = vector.broadcast %cst_151 : f32 to vector<8x128xf32>
    %347 = arith.mulf %346, %345 : vector<8x128xf32>
    %cst_152 = arith.constant 5.000000e-01 : f32
    %348 = vector.broadcast %cst_152 : f32 to vector<8x128xf32>
    %349 = arith.addf %347, %348 : vector<8x128xf32>
    %350 = vector.extract_strided_slice %333 {offsets = [0, 256], sizes = [8, 128], strides = [1, 1]} : vector<8x512xf32> to vector<8x128xf32>
    %351 = math.tanh %350 : vector<8x128xf32>
    %352 = vector.extract_strided_slice %333 {offsets = [0, 384], sizes = [8, 128], strides = [1, 1]} : vector<8x512xf32> to vector<8x128xf32>
    %cst_153 = arith.constant 5.000000e-01 : f32
    %353 = vector.broadcast %cst_153 : f32 to vector<8x128xf32>
    %354 = arith.mulf %353, %352 : vector<8x128xf32>
    %355 = math.tanh %354 : vector<8x128xf32>
    %cst_154 = arith.constant 5.000000e-01 : f32
    %356 = vector.broadcast %cst_154 : f32 to vector<8x128xf32>
    %357 = arith.mulf %356, %355 : vector<8x128xf32>
    %cst_155 = arith.constant 5.000000e-01 : f32
    %358 = vector.broadcast %cst_155 : f32 to vector<8x128xf32>
    %359 = arith.addf %357, %358 : vector<8x128xf32>
    %360 = arith.mulf %349, %329 : vector<8x128xf32>
    %361 = arith.mulf %341, %351 : vector<8x128xf32>
    %362 = arith.addf %360, %361 : vector<8x128xf32>
    %363 = math.tanh %362 : vector<8x128xf32>
    %364 = arith.mulf %359, %363 : vector<8x128xf32>
    %c8_156 = arith.constant 8 : index
    %c0_157 = arith.constant 0 : index
    %365 = vector.load %arg12[%c8_156, %c0_157] : memref<64x512xf32, #tpu.memory_space<vmem>>, vector<8x512xf32>
    %366 = arith.truncf %364 : vector<8x128xf32> to vector<8x128xbf16>
    %cst_158 = arith.constant dense<0.000000e+00> : vector<8x512xf32>
    %367 = tpu.matmul %366, %325, %cst_158 {dimension_numbers = #tpu.dot_dimension_numbers<[1], [0], [0], [1], [0, 0, 1, 1], [], []>} : vector<8x128xbf16>, vector<128x512xbf16>, vector<8x512xf32> -> vector<8x512xf32>
    %368 = arith.addf %365, %367 : vector<8x512xf32>
    %369 = vector.extract_strided_slice %368 {offsets = [0, 0], sizes = [8, 128], strides = [1, 1]} : vector<8x512xf32> to vector<8x128xf32>
    %cst_159 = arith.constant 5.000000e-01 : f32
    %370 = vector.broadcast %cst_159 : f32 to vector<8x128xf32>
    %371 = arith.mulf %370, %369 : vector<8x128xf32>
    %372 = math.tanh %371 : vector<8x128xf32>
    %cst_160 = arith.constant 5.000000e-01 : f32
    %373 = vector.broadcast %cst_160 : f32 to vector<8x128xf32>
    %374 = arith.mulf %373, %372 : vector<8x128xf32>
    %cst_161 = arith.constant 5.000000e-01 : f32
    %375 = vector.broadcast %cst_161 : f32 to vector<8x128xf32>
    %376 = arith.addf %374, %375 : vector<8x128xf32>
    %377 = vector.extract_strided_slice %368 {offsets = [0, 128], sizes = [8, 128], strides = [1, 1]} : vector<8x512xf32> to vector<8x128xf32>
    %cst_162 = arith.constant 5.000000e-01 : f32
    %378 = vector.broadcast %cst_162 : f32 to vector<8x128xf32>
    %379 = arith.mulf %378, %377 : vector<8x128xf32>
    %380 = math.tanh %379 : vector<8x128xf32>
    %cst_163 = arith.constant 5.000000e-01 : f32
    %381 = vector.broadcast %cst_163 : f32 to vector<8x128xf32>
    %382 = arith.mulf %381, %380 : vector<8x128xf32>
    %cst_164 = arith.constant 5.000000e-01 : f32
    %383 = vector.broadcast %cst_164 : f32 to vector<8x128xf32>
    %384 = arith.addf %382, %383 : vector<8x128xf32>
    %385 = vector.extract_strided_slice %368 {offsets = [0, 256], sizes = [8, 128], strides = [1, 1]} : vector<8x512xf32> to vector<8x128xf32>
    %386 = math.tanh %385 : vector<8x128xf32>
    %387 = vector.extract_strided_slice %368 {offsets = [0, 384], sizes = [8, 128], strides = [1, 1]} : vector<8x512xf32> to vector<8x128xf32>
    %cst_165 = arith.constant 5.000000e-01 : f32
    %388 = vector.broadcast %cst_165 : f32 to vector<8x128xf32>
    %389 = arith.mulf %388, %387 : vector<8x128xf32>
    %390 = math.tanh %389 : vector<8x128xf32>
    %cst_166 = arith.constant 5.000000e-01 : f32
    %391 = vector.broadcast %cst_166 : f32 to vector<8x128xf32>
    %392 = arith.mulf %391, %390 : vector<8x128xf32>
    %cst_167 = arith.constant 5.000000e-01 : f32
    %393 = vector.broadcast %cst_167 : f32 to vector<8x128xf32>
    %394 = arith.addf %392, %393 : vector<8x128xf32>
    %395 = arith.mulf %384, %362 : vector<8x128xf32>
    %396 = arith.mulf %376, %386 : vector<8x128xf32>
    %397 = arith.addf %395, %396 : vector<8x128xf32>
    %398 = math.tanh %397 : vector<8x128xf32>
    %399 = arith.mulf %394, %398 : vector<8x128xf32>
    %c16_168 = arith.constant 16 : index
    %c0_169 = arith.constant 0 : index
    %400 = vector.load %arg12[%c16_168, %c0_169] : memref<64x512xf32, #tpu.memory_space<vmem>>, vector<8x512xf32>
    %401 = arith.truncf %399 : vector<8x128xf32> to vector<8x128xbf16>
    %cst_170 = arith.constant dense<0.000000e+00> : vector<8x512xf32>
    %402 = tpu.matmul %401, %325, %cst_170 {dimension_numbers = #tpu.dot_dimension_numbers<[1], [0], [0], [1], [0, 0, 1, 1], [], []>} : vector<8x128xbf16>, vector<128x512xbf16>, vector<8x512xf32> -> vector<8x512xf32>
    %403 = arith.addf %400, %402 : vector<8x512xf32>
    %404 = vector.extract_strided_slice %403 {offsets = [0, 0], sizes = [8, 128], strides = [1, 1]} : vector<8x512xf32> to vector<8x128xf32>
    %cst_171 = arith.constant 5.000000e-01 : f32
    %405 = vector.broadcast %cst_171 : f32 to vector<8x128xf32>
    %406 = arith.mulf %405, %404 : vector<8x128xf32>
    %407 = math.tanh %406 : vector<8x128xf32>
    %cst_172 = arith.constant 5.000000e-01 : f32
    %408 = vector.broadcast %cst_172 : f32 to vector<8x128xf32>
    %409 = arith.mulf %408, %407 : vector<8x128xf32>
    %cst_173 = arith.constant 5.000000e-01 : f32
    %410 = vector.broadcast %cst_173 : f32 to vector<8x128xf32>
    %411 = arith.addf %409, %410 : vector<8x128xf32>
    %412 = vector.extract_strided_slice %403 {offsets = [0, 128], sizes = [8, 128], strides = [1, 1]} : vector<8x512xf32> to vector<8x128xf32>
    %cst_174 = arith.constant 5.000000e-01 : f32
    %413 = vector.broadcast %cst_174 : f32 to vector<8x128xf32>
    %414 = arith.mulf %413, %412 : vector<8x128xf32>
    %415 = math.tanh %414 : vector<8x128xf32>
    %cst_175 = arith.constant 5.000000e-01 : f32
    %416 = vector.broadcast %cst_175 : f32 to vector<8x128xf32>
    %417 = arith.mulf %416, %415 : vector<8x128xf32>
    %cst_176 = arith.constant 5.000000e-01 : f32
    %418 = vector.broadcast %cst_176 : f32 to vector<8x128xf32>
    %419 = arith.addf %417, %418 : vector<8x128xf32>
    %420 = vector.extract_strided_slice %403 {offsets = [0, 256], sizes = [8, 128], strides = [1, 1]} : vector<8x512xf32> to vector<8x128xf32>
    %421 = math.tanh %420 : vector<8x128xf32>
    %422 = vector.extract_strided_slice %403 {offsets = [0, 384], sizes = [8, 128], strides = [1, 1]} : vector<8x512xf32> to vector<8x128xf32>
    %cst_177 = arith.constant 5.000000e-01 : f32
    %423 = vector.broadcast %cst_177 : f32 to vector<8x128xf32>
    %424 = arith.mulf %423, %422 : vector<8x128xf32>
    %425 = math.tanh %424 : vector<8x128xf32>
    %cst_178 = arith.constant 5.000000e-01 : f32
    %426 = vector.broadcast %cst_178 : f32 to vector<8x128xf32>
    %427 = arith.mulf %426, %425 : vector<8x128xf32>
    %cst_179 = arith.constant 5.000000e-01 : f32
    %428 = vector.broadcast %cst_179 : f32 to vector<8x128xf32>
    %429 = arith.addf %427, %428 : vector<8x128xf32>
    %430 = arith.mulf %419, %397 : vector<8x128xf32>
    %431 = arith.mulf %411, %421 : vector<8x128xf32>
    %432 = arith.addf %430, %431 : vector<8x128xf32>
    %433 = math.tanh %432 : vector<8x128xf32>
    %434 = arith.mulf %429, %433 : vector<8x128xf32>
    %c24_180 = arith.constant 24 : index
    %c0_181 = arith.constant 0 : index
    %435 = vector.load %arg12[%c24_180, %c0_181] : memref<64x512xf32, #tpu.memory_space<vmem>>, vector<8x512xf32>
    %436 = arith.truncf %434 : vector<8x128xf32> to vector<8x128xbf16>
    %cst_182 = arith.constant dense<0.000000e+00> : vector<8x512xf32>
    %437 = tpu.matmul %436, %325, %cst_182 {dimension_numbers = #tpu.dot_dimension_numbers<[1], [0], [0], [1], [0, 0, 1, 1], [], []>} : vector<8x128xbf16>, vector<128x512xbf16>, vector<8x512xf32> -> vector<8x512xf32>
    %438 = arith.addf %435, %437 : vector<8x512xf32>
    %439 = vector.extract_strided_slice %438 {offsets = [0, 0], sizes = [8, 128], strides = [1, 1]} : vector<8x512xf32> to vector<8x128xf32>
    %cst_183 = arith.constant 5.000000e-01 : f32
    %440 = vector.broadcast %cst_183 : f32 to vector<8x128xf32>
    %441 = arith.mulf %440, %439 : vector<8x128xf32>
    %442 = math.tanh %441 : vector<8x128xf32>
    %cst_184 = arith.constant 5.000000e-01 : f32
    %443 = vector.broadcast %cst_184 : f32 to vector<8x128xf32>
    %444 = arith.mulf %443, %442 : vector<8x128xf32>
    %cst_185 = arith.constant 5.000000e-01 : f32
    %445 = vector.broadcast %cst_185 : f32 to vector<8x128xf32>
    %446 = arith.addf %444, %445 : vector<8x128xf32>
    %447 = vector.extract_strided_slice %438 {offsets = [0, 128], sizes = [8, 128], strides = [1, 1]} : vector<8x512xf32> to vector<8x128xf32>
    %cst_186 = arith.constant 5.000000e-01 : f32
    %448 = vector.broadcast %cst_186 : f32 to vector<8x128xf32>
    %449 = arith.mulf %448, %447 : vector<8x128xf32>
    %450 = math.tanh %449 : vector<8x128xf32>
    %cst_187 = arith.constant 5.000000e-01 : f32
    %451 = vector.broadcast %cst_187 : f32 to vector<8x128xf32>
    %452 = arith.mulf %451, %450 : vector<8x128xf32>
    %cst_188 = arith.constant 5.000000e-01 : f32
    %453 = vector.broadcast %cst_188 : f32 to vector<8x128xf32>
    %454 = arith.addf %452, %453 : vector<8x128xf32>
    %455 = vector.extract_strided_slice %438 {offsets = [0, 256], sizes = [8, 128], strides = [1, 1]} : vector<8x512xf32> to vector<8x128xf32>
    %456 = math.tanh %455 : vector<8x128xf32>
    %457 = vector.extract_strided_slice %438 {offsets = [0, 384], sizes = [8, 128], strides = [1, 1]} : vector<8x512xf32> to vector<8x128xf32>
    %cst_189 = arith.constant 5.000000e-01 : f32
    %458 = vector.broadcast %cst_189 : f32 to vector<8x128xf32>
    %459 = arith.mulf %458, %457 : vector<8x128xf32>
    %460 = math.tanh %459 : vector<8x128xf32>
    %cst_190 = arith.constant 5.000000e-01 : f32
    %461 = vector.broadcast %cst_190 : f32 to vector<8x128xf32>
    %462 = arith.mulf %461, %460 : vector<8x128xf32>
    %cst_191 = arith.constant 5.000000e-01 : f32
    %463 = vector.broadcast %cst_191 : f32 to vector<8x128xf32>
    %464 = arith.addf %462, %463 : vector<8x128xf32>
    %465 = arith.mulf %454, %432 : vector<8x128xf32>
    %466 = arith.mulf %446, %456 : vector<8x128xf32>
    %467 = arith.addf %465, %466 : vector<8x128xf32>
    %468 = math.tanh %467 : vector<8x128xf32>
    %469 = arith.mulf %464, %468 : vector<8x128xf32>
    %c32_192 = arith.constant 32 : index
    %c0_193 = arith.constant 0 : index
    %470 = vector.load %arg12[%c32_192, %c0_193] : memref<64x512xf32, #tpu.memory_space<vmem>>, vector<8x512xf32>
    %471 = arith.truncf %469 : vector<8x128xf32> to vector<8x128xbf16>
    %cst_194 = arith.constant dense<0.000000e+00> : vector<8x512xf32>
    %472 = tpu.matmul %471, %325, %cst_194 {dimension_numbers = #tpu.dot_dimension_numbers<[1], [0], [0], [1], [0, 0, 1, 1], [], []>} : vector<8x128xbf16>, vector<128x512xbf16>, vector<8x512xf32> -> vector<8x512xf32>
    %473 = arith.addf %470, %472 : vector<8x512xf32>
    %474 = vector.extract_strided_slice %473 {offsets = [0, 0], sizes = [8, 128], strides = [1, 1]} : vector<8x512xf32> to vector<8x128xf32>
    %cst_195 = arith.constant 5.000000e-01 : f32
    %475 = vector.broadcast %cst_195 : f32 to vector<8x128xf32>
    %476 = arith.mulf %475, %474 : vector<8x128xf32>
    %477 = math.tanh %476 : vector<8x128xf32>
    %cst_196 = arith.constant 5.000000e-01 : f32
    %478 = vector.broadcast %cst_196 : f32 to vector<8x128xf32>
    %479 = arith.mulf %478, %477 : vector<8x128xf32>
    %cst_197 = arith.constant 5.000000e-01 : f32
    %480 = vector.broadcast %cst_197 : f32 to vector<8x128xf32>
    %481 = arith.addf %479, %480 : vector<8x128xf32>
    %482 = vector.extract_strided_slice %473 {offsets = [0, 128], sizes = [8, 128], strides = [1, 1]} : vector<8x512xf32> to vector<8x128xf32>
    %cst_198 = arith.constant 5.000000e-01 : f32
    %483 = vector.broadcast %cst_198 : f32 to vector<8x128xf32>
    %484 = arith.mulf %483, %482 : vector<8x128xf32>
    %485 = math.tanh %484 : vector<8x128xf32>
    %cst_199 = arith.constant 5.000000e-01 : f32
    %486 = vector.broadcast %cst_199 : f32 to vector<8x128xf32>
    %487 = arith.mulf %486, %485 : vector<8x128xf32>
    %cst_200 = arith.constant 5.000000e-01 : f32
    %488 = vector.broadcast %cst_200 : f32 to vector<8x128xf32>
    %489 = arith.addf %487, %488 : vector<8x128xf32>
    %490 = vector.extract_strided_slice %473 {offsets = [0, 256], sizes = [8, 128], strides = [1, 1]} : vector<8x512xf32> to vector<8x128xf32>
    %491 = math.tanh %490 : vector<8x128xf32>
    %492 = vector.extract_strided_slice %473 {offsets = [0, 384], sizes = [8, 128], strides = [1, 1]} : vector<8x512xf32> to vector<8x128xf32>
    %cst_201 = arith.constant 5.000000e-01 : f32
    %493 = vector.broadcast %cst_201 : f32 to vector<8x128xf32>
    %494 = arith.mulf %493, %492 : vector<8x128xf32>
    %495 = math.tanh %494 : vector<8x128xf32>
    %cst_202 = arith.constant 5.000000e-01 : f32
    %496 = vector.broadcast %cst_202 : f32 to vector<8x128xf32>
    %497 = arith.mulf %496, %495 : vector<8x128xf32>
    %cst_203 = arith.constant 5.000000e-01 : f32
    %498 = vector.broadcast %cst_203 : f32 to vector<8x128xf32>
    %499 = arith.addf %497, %498 : vector<8x128xf32>
    %500 = arith.mulf %489, %467 : vector<8x128xf32>
    %501 = arith.mulf %481, %491 : vector<8x128xf32>
    %502 = arith.addf %500, %501 : vector<8x128xf32>
    %503 = math.tanh %502 : vector<8x128xf32>
    %504 = arith.mulf %499, %503 : vector<8x128xf32>
    %c40_204 = arith.constant 40 : index
    %c0_205 = arith.constant 0 : index
    %505 = vector.load %arg12[%c40_204, %c0_205] : memref<64x512xf32, #tpu.memory_space<vmem>>, vector<8x512xf32>
    %506 = arith.truncf %504 : vector<8x128xf32> to vector<8x128xbf16>
    %cst_206 = arith.constant dense<0.000000e+00> : vector<8x512xf32>
    %507 = tpu.matmul %506, %325, %cst_206 {dimension_numbers = #tpu.dot_dimension_numbers<[1], [0], [0], [1], [0, 0, 1, 1], [], []>} : vector<8x128xbf16>, vector<128x512xbf16>, vector<8x512xf32> -> vector<8x512xf32>
    %508 = arith.addf %505, %507 : vector<8x512xf32>
    %509 = vector.extract_strided_slice %508 {offsets = [0, 0], sizes = [8, 128], strides = [1, 1]} : vector<8x512xf32> to vector<8x128xf32>
    %cst_207 = arith.constant 5.000000e-01 : f32
    %510 = vector.broadcast %cst_207 : f32 to vector<8x128xf32>
    %511 = arith.mulf %510, %509 : vector<8x128xf32>
    %512 = math.tanh %511 : vector<8x128xf32>
    %cst_208 = arith.constant 5.000000e-01 : f32
    %513 = vector.broadcast %cst_208 : f32 to vector<8x128xf32>
    %514 = arith.mulf %513, %512 : vector<8x128xf32>
    %cst_209 = arith.constant 5.000000e-01 : f32
    %515 = vector.broadcast %cst_209 : f32 to vector<8x128xf32>
    %516 = arith.addf %514, %515 : vector<8x128xf32>
    %517 = vector.extract_strided_slice %508 {offsets = [0, 128], sizes = [8, 128], strides = [1, 1]} : vector<8x512xf32> to vector<8x128xf32>
    %cst_210 = arith.constant 5.000000e-01 : f32
    %518 = vector.broadcast %cst_210 : f32 to vector<8x128xf32>
    %519 = arith.mulf %518, %517 : vector<8x128xf32>
    %520 = math.tanh %519 : vector<8x128xf32>
    %cst_211 = arith.constant 5.000000e-01 : f32
    %521 = vector.broadcast %cst_211 : f32 to vector<8x128xf32>
    %522 = arith.mulf %521, %520 : vector<8x128xf32>
    %cst_212 = arith.constant 5.000000e-01 : f32
    %523 = vector.broadcast %cst_212 : f32 to vector<8x128xf32>
    %524 = arith.addf %522, %523 : vector<8x128xf32>
    %525 = vector.extract_strided_slice %508 {offsets = [0, 256], sizes = [8, 128], strides = [1, 1]} : vector<8x512xf32> to vector<8x128xf32>
    %526 = math.tanh %525 : vector<8x128xf32>
    %527 = vector.extract_strided_slice %508 {offsets = [0, 384], sizes = [8, 128], strides = [1, 1]} : vector<8x512xf32> to vector<8x128xf32>
    %cst_213 = arith.constant 5.000000e-01 : f32
    %528 = vector.broadcast %cst_213 : f32 to vector<8x128xf32>
    %529 = arith.mulf %528, %527 : vector<8x128xf32>
    %530 = math.tanh %529 : vector<8x128xf32>
    %cst_214 = arith.constant 5.000000e-01 : f32
    %531 = vector.broadcast %cst_214 : f32 to vector<8x128xf32>
    %532 = arith.mulf %531, %530 : vector<8x128xf32>
    %cst_215 = arith.constant 5.000000e-01 : f32
    %533 = vector.broadcast %cst_215 : f32 to vector<8x128xf32>
    %534 = arith.addf %532, %533 : vector<8x128xf32>
    %535 = arith.mulf %524, %502 : vector<8x128xf32>
    %536 = arith.mulf %516, %526 : vector<8x128xf32>
    %537 = arith.addf %535, %536 : vector<8x128xf32>
    %538 = math.tanh %537 : vector<8x128xf32>
    %539 = arith.mulf %534, %538 : vector<8x128xf32>
    %c48_216 = arith.constant 48 : index
    %c0_217 = arith.constant 0 : index
    %540 = vector.load %arg12[%c48_216, %c0_217] : memref<64x512xf32, #tpu.memory_space<vmem>>, vector<8x512xf32>
    %541 = arith.truncf %539 : vector<8x128xf32> to vector<8x128xbf16>
    %cst_218 = arith.constant dense<0.000000e+00> : vector<8x512xf32>
    %542 = tpu.matmul %541, %325, %cst_218 {dimension_numbers = #tpu.dot_dimension_numbers<[1], [0], [0], [1], [0, 0, 1, 1], [], []>} : vector<8x128xbf16>, vector<128x512xbf16>, vector<8x512xf32> -> vector<8x512xf32>
    %543 = arith.addf %540, %542 : vector<8x512xf32>
    %544 = vector.extract_strided_slice %543 {offsets = [0, 0], sizes = [8, 128], strides = [1, 1]} : vector<8x512xf32> to vector<8x128xf32>
    %cst_219 = arith.constant 5.000000e-01 : f32
    %545 = vector.broadcast %cst_219 : f32 to vector<8x128xf32>
    %546 = arith.mulf %545, %544 : vector<8x128xf32>
    %547 = math.tanh %546 : vector<8x128xf32>
    %cst_220 = arith.constant 5.000000e-01 : f32
    %548 = vector.broadcast %cst_220 : f32 to vector<8x128xf32>
    %549 = arith.mulf %548, %547 : vector<8x128xf32>
    %cst_221 = arith.constant 5.000000e-01 : f32
    %550 = vector.broadcast %cst_221 : f32 to vector<8x128xf32>
    %551 = arith.addf %549, %550 : vector<8x128xf32>
    %552 = vector.extract_strided_slice %543 {offsets = [0, 128], sizes = [8, 128], strides = [1, 1]} : vector<8x512xf32> to vector<8x128xf32>
    %cst_222 = arith.constant 5.000000e-01 : f32
    %553 = vector.broadcast %cst_222 : f32 to vector<8x128xf32>
    %554 = arith.mulf %553, %552 : vector<8x128xf32>
    %555 = math.tanh %554 : vector<8x128xf32>
    %cst_223 = arith.constant 5.000000e-01 : f32
    %556 = vector.broadcast %cst_223 : f32 to vector<8x128xf32>
    %557 = arith.mulf %556, %555 : vector<8x128xf32>
    %cst_224 = arith.constant 5.000000e-01 : f32
    %558 = vector.broadcast %cst_224 : f32 to vector<8x128xf32>
    %559 = arith.addf %557, %558 : vector<8x128xf32>
    %560 = vector.extract_strided_slice %543 {offsets = [0, 256], sizes = [8, 128], strides = [1, 1]} : vector<8x512xf32> to vector<8x128xf32>
    %561 = math.tanh %560 : vector<8x128xf32>
    %562 = vector.extract_strided_slice %543 {offsets = [0, 384], sizes = [8, 128], strides = [1, 1]} : vector<8x512xf32> to vector<8x128xf32>
    %cst_225 = arith.constant 5.000000e-01 : f32
    %563 = vector.broadcast %cst_225 : f32 to vector<8x128xf32>
    %564 = arith.mulf %563, %562 : vector<8x128xf32>
    %565 = math.tanh %564 : vector<8x128xf32>
    %cst_226 = arith.constant 5.000000e-01 : f32
    %566 = vector.broadcast %cst_226 : f32 to vector<8x128xf32>
    %567 = arith.mulf %566, %565 : vector<8x128xf32>
    %cst_227 = arith.constant 5.000000e-01 : f32
    %568 = vector.broadcast %cst_227 : f32 to vector<8x128xf32>
    %569 = arith.addf %567, %568 : vector<8x128xf32>
    %570 = arith.mulf %559, %537 : vector<8x128xf32>
    %571 = arith.mulf %551, %561 : vector<8x128xf32>
    %572 = arith.addf %570, %571 : vector<8x128xf32>
    %573 = math.tanh %572 : vector<8x128xf32>
    %574 = arith.mulf %569, %573 : vector<8x128xf32>
    %c56_228 = arith.constant 56 : index
    %c0_229 = arith.constant 0 : index
    %575 = vector.load %arg12[%c56_228, %c0_229] : memref<64x512xf32, #tpu.memory_space<vmem>>, vector<8x512xf32>
    %576 = arith.truncf %574 : vector<8x128xf32> to vector<8x128xbf16>
    %cst_230 = arith.constant dense<0.000000e+00> : vector<8x512xf32>
    %577 = tpu.matmul %576, %325, %cst_230 {dimension_numbers = #tpu.dot_dimension_numbers<[1], [0], [0], [1], [0, 0, 1, 1], [], []>} : vector<8x128xbf16>, vector<128x512xbf16>, vector<8x512xf32> -> vector<8x512xf32>
    %578 = arith.addf %575, %577 : vector<8x512xf32>
    %579 = vector.extract_strided_slice %578 {offsets = [0, 0], sizes = [8, 128], strides = [1, 1]} : vector<8x512xf32> to vector<8x128xf32>
    %cst_231 = arith.constant 5.000000e-01 : f32
    %580 = vector.broadcast %cst_231 : f32 to vector<8x128xf32>
    %581 = arith.mulf %580, %579 : vector<8x128xf32>
    %582 = math.tanh %581 : vector<8x128xf32>
    %cst_232 = arith.constant 5.000000e-01 : f32
    %583 = vector.broadcast %cst_232 : f32 to vector<8x128xf32>
    %584 = arith.mulf %583, %582 : vector<8x128xf32>
    %cst_233 = arith.constant 5.000000e-01 : f32
    %585 = vector.broadcast %cst_233 : f32 to vector<8x128xf32>
    %586 = arith.addf %584, %585 : vector<8x128xf32>
    %587 = vector.extract_strided_slice %578 {offsets = [0, 128], sizes = [8, 128], strides = [1, 1]} : vector<8x512xf32> to vector<8x128xf32>
    %cst_234 = arith.constant 5.000000e-01 : f32
    %588 = vector.broadcast %cst_234 : f32 to vector<8x128xf32>
    %589 = arith.mulf %588, %587 : vector<8x128xf32>
    %590 = math.tanh %589 : vector<8x128xf32>
    %cst_235 = arith.constant 5.000000e-01 : f32
    %591 = vector.broadcast %cst_235 : f32 to vector<8x128xf32>
    %592 = arith.mulf %591, %590 : vector<8x128xf32>
    %cst_236 = arith.constant 5.000000e-01 : f32
    %593 = vector.broadcast %cst_236 : f32 to vector<8x128xf32>
    %594 = arith.addf %592, %593 : vector<8x128xf32>
    %595 = vector.extract_strided_slice %578 {offsets = [0, 256], sizes = [8, 128], strides = [1, 1]} : vector<8x512xf32> to vector<8x128xf32>
    %596 = math.tanh %595 : vector<8x128xf32>
    %597 = vector.extract_strided_slice %578 {offsets = [0, 384], sizes = [8, 128], strides = [1, 1]} : vector<8x512xf32> to vector<8x128xf32>
    %cst_237 = arith.constant 5.000000e-01 : f32
    %598 = vector.broadcast %cst_237 : f32 to vector<8x128xf32>
    %599 = arith.mulf %598, %597 : vector<8x128xf32>
    %600 = math.tanh %599 : vector<8x128xf32>
    %cst_238 = arith.constant 5.000000e-01 : f32
    %601 = vector.broadcast %cst_238 : f32 to vector<8x128xf32>
    %602 = arith.mulf %601, %600 : vector<8x128xf32>
    %cst_239 = arith.constant 5.000000e-01 : f32
    %603 = vector.broadcast %cst_239 : f32 to vector<8x128xf32>
    %604 = arith.addf %602, %603 : vector<8x128xf32>
    %605 = arith.mulf %594, %572 : vector<8x128xf32>
    %606 = arith.mulf %586, %596 : vector<8x128xf32>
    %607 = arith.addf %605, %606 : vector<8x128xf32>
    %608 = math.tanh %607 : vector<8x128xf32>
    %609 = arith.mulf %604, %608 : vector<8x128xf32>
    %c1_240 = arith.constant 1 : index
    %c0_241 = arith.constant 0 : index
    %c0_242 = arith.constant 0 : index
    %610 = vector.load %arg9[%c1_240, %c0_241, %c0_242] : memref<2x8x128xf32, #tpu.memory_space<vmem>>, vector<1x8x128xf32>
    %611 = vector.shape_cast %610 : vector<1x8x128xf32> to vector<8x128xf32>
    %612 = vector.shape_cast %609 : vector<8x128xf32> to vector<1x8x128xf32>
    tpu.vector_store %arg9[%c1_240, %c0_241, %c0_242], %612 {strides = array<i32>} : memref<2x8x128xf32, #tpu.memory_space<vmem>>, vector<1x8x128xf32>,
    %c1_243 = arith.constant 1 : index
    %c0_244 = arith.constant 0 : index
    %c0_245 = arith.constant 0 : index
    %613 = vector.load %arg10[%c1_243, %c0_244, %c0_245] : memref<2x8x128xf32, #tpu.memory_space<vmem>>, vector<1x8x128xf32>
    %614 = vector.shape_cast %613 : vector<1x8x128xf32> to vector<8x128xf32>
    %615 = vector.shape_cast %607 : vector<8x128xf32> to vector<1x8x128xf32>
    tpu.vector_store %arg10[%c1_243, %c0_244, %c0_245], %615 {strides = array<i32>} : memref<2x8x128xf32, #tpu.memory_space<vmem>>, vector<1x8x128xf32>,
    return
  }
  func.func @transform_0(%arg0: i32, %arg1: i32) -> (i32, i32, i32) {
    %c0_i32 = arith.constant 0 : i32
    %c0_i32_0 = arith.constant 0 : i32
    return %arg0, %arg1, %c0_i32 : i32, i32, i32
  }
  func.func @transform_1(%arg0: i32, %arg1: i32) -> (i32, i32) {
    %c0_i32 = arith.constant 0 : i32
    %c0_i32_0 = arith.constant 0 : i32
    %c0_i32_1 = arith.constant 0 : i32
    return %c0_i32, %c0_i32_0 : i32, i32
  }
  func.func @transform_2(%arg0: i32, %arg1: i32) -> (i32, i32) {
    %c0_i32 = arith.constant 0 : i32
    %c0_i32_0 = arith.constant 0 : i32
    %c0_i32_1 = arith.constant 0 : i32
    return %c0_i32, %c0_i32_0 : i32, i32
  }
  func.func @transform_3(%arg0: i32, %arg1: i32) -> (i32, i32) {
    %c0_i32 = arith.constant 0 : i32
    %c0_i32_0 = arith.constant 0 : i32
    %c0_i32_1 = arith.constant 0 : i32
    return %c0_i32, %c0_i32_0 : i32, i32
  }
  func.func @transform_4(%arg0: i32, %arg1: i32) -> (i32, i32) {
    %c0_i32 = arith.constant 0 : i32
    %c0_i32_0 = arith.constant 0 : i32
    %c0_i32_1 = arith.constant 0 : i32
    return %c0_i32, %c0_i32_0 : i32, i32
  }
  func.func @transform_5(%arg0: i32, %arg1: i32) -> (i32, i32) {
    %c0_i32 = arith.constant 0 : i32
    %c0_i32_0 = arith.constant 0 : i32
    %c0_i32_1 = arith.constant 0 : i32
    return %c0_i32, %c0_i32_0 : i32, i32
  }
  func.func @transform_6(%arg0: i32, %arg1: i32) -> (i32, i32) {
    %c0_i32 = arith.constant 0 : i32
    %c0_i32_0 = arith.constant 0 : i32
    %c0_i32_1 = arith.constant 0 : i32
    return %c0_i32, %c0_i32_0 : i32, i32
  }
  func.func @transform_7(%arg0: i32, %arg1: i32) -> (i32, i32, i32) {
    %c0_i32 = arith.constant 0 : i32
    %c0_i32_0 = arith.constant 0 : i32
    %c0_i32_1 = arith.constant 0 : i32
    return %c0_i32, %arg0, %c0_i32_0 : i32, i32, i32
  }
  func.func @transform_8(%arg0: i32, %arg1: i32) -> (i32, i32, i32) {
    %c0_i32 = arith.constant 0 : i32
    %c0_i32_0 = arith.constant 0 : i32
    %c0_i32_1 = arith.constant 0 : i32
    return %c0_i32, %arg0, %c0_i32_0 : i32, i32, i32
  }
}

</mosaic_0001>

<llo_original>
// kernel: encoder_forward.1
$region0: #{encoder_forward.1}
  #allocation0 [shape = 'u32[]', space=smem, size = 0x4, offset = 0x4, fixed_abs, tag = 'smem constant byte address 0x4 - core index']
  #allocation1 [shape = 'u32[144,128]{1,0:T(1,128)}', space=vmem, size = 0x12000, scoped, tag = 'internal scratch']
  #allocation2 [shape = 'bf16[64,128]{1,0:T(8,128)(2,1)}', space=vmem, size = 0x4000, scoped, tag = 'scratch operand']
  #allocation3 [shape = 'f32[64,512]{1,0:T(8,128)}', space=vmem, size = 0x20000, scoped, tag = 'scratch operand']
  %s0 = inlined_call_operand.vmem [shape: bf16[1,64,128], index: 0, kind: input, shape index: {}]
  %s1 = inlined_call_operand.hbm [shape: bf16[128,512], index: 1, kind: input, shape index: {}]
  %s2 = inlined_call_operand.hbm [shape: bf16[128,512], index: 2, kind: input, shape index: {}]
  %s3 = inlined_call_operand.hbm [shape: bf16[128,512], index: 3, kind: input, shape index: {}]
  %s4 = inlined_call_operand.hbm [shape: bf16[128,512], index: 4, kind: input, shape index: {}]
  %s5 = inlined_call_operand.vmem [shape: f32[1,512], index: 5, kind: input, shape index: {}]
  %s6 = inlined_call_operand.vmem [shape: f32[1,512], index: 6, kind: input, shape index: {}]
  %s7 = inlined_call_operand.vmem [shape: f32[2,8,128], index: 7, kind: output, shape index: {0}]
  %s8 = inlined_call_operand.vmem [shape: f32[2,8,128], index: 8, kind: output, shape index: {1}]
  %9 = xla_tuple %s7, %s8
  %s10 = sld [smem:[#allocation0]]
  $region66: #{encoder_forward.1} parent=0
    _
  %s12 = ssub.s32 1, %s10
  %s13 = scalar_select 0, %s12, %s10
  $region1: #{encoder_forward.1} parent=0
    #allocation4 [shape = 'u8[131072]{0}', space=vmem, size = 0x20000, scoped, tag = 'input window, operand 1, single buffered']
    #allocation5 [shape = 's32[1]{0}', space=sflag, size = 0x4, scoped, tag = 'scoped memory for encoder_forward.1']
    #allocation6 [shape = 'u8[131072]{0}', space=vmem, size = 0x20000, scoped, tag = 'input window, operand 2, single buffered']
    #allocation7 [shape = 's32[1]{0}', space=sflag, size = 0x4, scoped, tag = 'scoped memory for encoder_forward.1']
    #allocation8 [shape = 'u8[131072]{0}', space=vmem, size = 0x20000, scoped, tag = 'input window, operand 3, single buffered']
    #allocation9 [shape = 'u8[131072]{0}', space=vmem, size = 0x20000, scoped, tag = 'input window, operand 4, single buffered']
    #allocation10 [shape = 's32[1]{0}', space=sflag, size = 0x4, scoped, tag = 'scoped memory for encoder_forward.1']
    %14 = vsyncpa [#allocation5], 0
    %15 = vsyncpa [#allocation7], 0
    %16 = vsyncpa [#allocation10], 0
    // Predicated region
    $region2: #{encoder_forward.1} parent=1 // pred_check
      _
    $region3: #{encoder_forward.1} parent=1 // pred_check_branch
      %18 = sbr.rel (0) target = $region5
    $region4: #{encoder_forward.1} parent=1 // pred_region
      _
    $region5: #{encoder_forward.1} parent=1 // pred_fallthru
      _
    // Predicated region
    $region6: #{encoder_forward.1} parent=1 // pred_check
      _
    $region7: #{encoder_forward.1} parent=1 // pred_check_branch
      %20 = sbr.rel (0) target = $region9
    $region8: #{encoder_forward.1} parent=1 // pred_region
      %s22 = ssub.s32 4096, 4096
      %23 = vsyncadd [#allocation5], %s22
      %s24 = sshll.u32 [#allocation4], 4
      %s25 = int_to_ptr.vmem [resolvable:$true] %s24
      %30 = dma.hbm_to_vmem [thread:$0]  %s1, 4096, %s25, [#allocation5], 256, 256, 16
    $region9: #{encoder_forward.1} parent=1 // pred_fallthru
      _
    // Predicated region
    $region10: #{encoder_forward.1} parent=1 // pred_check
      _
    $region11: #{encoder_forward.1} parent=1 // pred_check_branch
      %32 = sbr.rel (0) target = $region13
    $region12: #{encoder_forward.1} parent=1 // pred_region
      %s34 = ssub.s32 4096, 4096
      %35 = vsyncadd [#allocation7], %s34
      %s36 = sshll.u32 [#allocation6], 4
      %s37 = int_to_ptr.vmem [resolvable:$true] %s36
      %42 = dma.hbm_to_vmem [thread:$0]  %s2, 4096, %s37, [#allocation7], 256, 256, 16
    $region13: #{encoder_forward.1} parent=1 // pred_fallthru
      _
    // Predicated region
    $region14: #{encoder_forward.1} parent=1 // pred_check
      _
    $region15: #{encoder_forward.1} parent=1 // pred_check_branch
      %44 = sbr.rel (0) target = $region17
    $region16: #{encoder_forward.1} parent=1 // pred_region
      %s46 = ssub.s32 4096, 4096
      %47 = vsyncadd [#allocation7], %s46
      %s48 = sshll.u32 [#allocation8], 4
      %s49 = int_to_ptr.vmem [resolvable:$true] %s48
      %54 = dma.hbm_to_vmem [thread:$0]  %s3, 4096, %s49, [#allocation7], 256, 256, 16
    $region17: #{encoder_forward.1} parent=1 // pred_fallthru
      _
    // Predicated region
    $region18: #{encoder_forward.1} parent=1 // pred_check
      _
    $region19: #{encoder_forward.1} parent=1 // pred_check_branch
      %56 = sbr.rel (0) target = $region21
    $region20: #{encoder_forward.1} parent=1 // pred_region
      %s58 = ssub.s32 4096, 4096
      %59 = vsyncadd [#allocation10], %s58
      %s60 = sshll.u32 [#allocation9], 4
      %s61 = int_to_ptr.vmem [resolvable:$true] %s60
      %66 = dma.hbm_to_vmem [thread:$0]  %s4, 4096, %s61, [#allocation10], 256, 256, 16
    $region21: #{encoder_forward.1} parent=1 // pred_fallthru
      _
    // Predicated region
    $region22: #{encoder_forward.1} parent=1 // pred_check
      _
    $region23: #{encoder_forward.1} parent=1 // pred_check_branch
      %68 = sbr.rel (0) target = $region25
    $region24: #{encoder_forward.1} parent=1 // pred_region
      _
    $region25: #{encoder_forward.1} parent=1 // pred_fallthru
      _
    // Predicated region
    $region26: #{encoder_forward.1} parent=1 // pred_check
      _
    $region27: #{encoder_forward.1} parent=1 // pred_check_branch
      %70 = sbr.rel (0) target = $region29
    $region28: #{encoder_forward.1} parent=1 // pred_region
      _
    $region29: #{encoder_forward.1} parent=1 // pred_fallthru
      _
    // Predicated region
    $region30: #{encoder_forward.1} parent=1 // pred_check
      _
    $region31: #{encoder_forward.1} parent=1 // pred_check_branch
      %72 = sbr.rel (0) target = $region33
    $region32: #{encoder_forward.1} parent=1 // pred_region
      %73 = dma.done [#allocation5], 4096
    $region33: #{encoder_forward.1} parent=1 // pred_fallthru
      _
    // Predicated region
    $region34: #{encoder_forward.1} parent=1 // pred_check
      _
    $region35: #{encoder_forward.1} parent=1 // pred_check_branch
      %75 = sbr.rel (0) target = $region37
    $region36: #{encoder_forward.1} parent=1 // pred_region
      %76 = dma.done [#allocation7], 4096
    $region37: #{encoder_forward.1} parent=1 // pred_fallthru
      _
    // Predicated region
    $region38: #{encoder_forward.1} parent=1 // pred_check
      _
    $region39: #{encoder_forward.1} parent=1 // pred_check_branch
      %78 = sbr.rel (0) target = $region41
    $region40: #{encoder_forward.1} parent=1 // pred_region
      %79 = dma.done [#allocation7], 4096
    $region41: #{encoder_forward.1} parent=1 // pred_fallthru
      _
    // Predicated region
    $region42: #{encoder_forward.1} parent=1 // pred_check
      _
    $region43: #{encoder_forward.1} parent=1 // pred_check_branch
      %81 = sbr.rel (0) target = $region45
    $region44: #{encoder_forward.1} parent=1 // pred_region
      %82 = dma.done [#allocation10], 4096
    $region45: #{encoder_forward.1} parent=1 // pred_fallthru
      _
    %p84 = scmp.eq.s32.totalorder 0, 0
    // Predicated region
    $region46: #{encoder_forward.1} parent=1 // pred_check
      %p85 = pneg %p84
    $region47: #{encoder_forward.1} parent=1 // pred_check_branch
      %87 = sbr.rel (%p85) target = $region49
    $region48: #{encoder_forward.1} parent=1 // pred_region
      %88 = vst [vmem:[%s7] sm:$0xff] 0.0
      %89 = vst [vmem:[%s7 + $0x8] sm:$0xff] 0.0
      %90 = vst [vmem:[%s8] sm:$0xff] 0.0
      %91 = vst [vmem:[%s8 + $0x8] sm:$0xff] 0.0
    $region49: #{encoder_forward.1} parent=1 // pred_fallthru
      _
    %v92 = vld [vmem:[%s0] sm:$0xf]
    %v93 = vld [vmem:[%s0 + $0x4] sm:$0xf]
    %v94 = vld [vmem:[%s0 + $0x8] sm:$0xf]
    %v95 = vld [vmem:[%s0 + $0xc] sm:$0xf]
    %v96 = vld [vmem:[%s0 + $0x10] sm:$0xf]
    %v97 = vld [vmem:[%s0 + $0x14] sm:$0xf]
    %v98 = vld [vmem:[%s0 + $0x18] sm:$0xf]
    %v99 = vld [vmem:[%s0 + $0x1c] sm:$0xf]
    %v100 = vld [vmem:[#allocation4] sm:$0xff]
    %v101 = vld [vmem:[#allocation4 + $0x8] sm:$0xff]
    %v102 = vld [vmem:[#allocation4 + $0x10] sm:$0xff]
    %v103 = vld [vmem:[#allocation4 + $0x18] sm:$0xff]
    %v104 = vld [vmem:[#allocation4 + $0x20] sm:$0xff]
    %v105 = vld [vmem:[#allocation4 + $0x28] sm:$0xff]
    %v106 = vld [vmem:[#allocation4 + $0x30] sm:$0xff]
    %v107 = vld [vmem:[#allocation4 + $0x38] sm:$0xff]
    %v108 = vld [vmem:[#allocation4 + $0x40] sm:$0xff]
    %v109 = vld [vmem:[#allocation4 + $0x48] sm:$0xff]
    %v110 = vld [vmem:[#allocation4 + $0x50] sm:$0xff]
    %v111 = vld [vmem:[#allocation4 + $0x58] sm:$0xff]
    %v112 = vld [vmem:[#allocation4 + $0x60] sm:$0xff]
    %v113 = vld [vmem:[#allocation4 + $0x68] sm:$0xff]
    %v114 = vld [vmem:[#allocation4 + $0x70] sm:$0xff]
    %v115 = vld [vmem:[#allocation4 + $0x78] sm:$0xff]
    %v116 = vld [vmem:[#allocation4 + $0x80] sm:$0xff]
    %v117 = vld [vmem:[#allocation4 + $0x88] sm:$0xff]
    %v118 = vld [vmem:[#allocation4 + $0x90] sm:$0xff]
    %v119 = vld [vmem:[#allocation4 + $0x98] sm:$0xff]
    %v120 = vld [vmem:[#allocation4 + $0xa0] sm:$0xff]
    %v121 = vld [vmem:[#allocation4 + $0xa8] sm:$0xff]
    %v122 = vld [vmem:[#allocation4 + $0xb0] sm:$0xff]
    %v123 = vld [vmem:[#allocation4 + $0xb8] sm:$0xff]
    %v124 = vld [vmem:[#allocation4 + $0xc0] sm:$0xff]
    %v125 = vld [vmem:[#allocation4 + $0xc8] sm:$0xff]
    %v126 = vld [vmem:[#allocation4 + $0xd0] sm:$0xff]
    %v127 = vld [vmem:[#allocation4 + $0xd8] sm:$0xff]
    %v128 = vld [vmem:[#allocation4 + $0xe0] sm:$0xff]
    %v129 = vld [vmem:[#allocation4 + $0xe8] sm:$0xff]
    %v130 = vld [vmem:[#allocation4 + $0xf0] sm:$0xff]
    %v131 = vld [vmem:[#allocation4 + $0xf8] sm:$0xff]
    %v132 = vld [vmem:[%s5] sm:$0xf]
    %v134 = vlaneseq
    %v135 = vshrl.u32 %v134, 7
    %v136 = vsub.s32 0, %v135
    %v137 = vrot.slane %v132, %v136
    %v138 = vlaneseq
    %v139 = vshrl.u32 %v138, 7
    %v140 = vsub.s32 1, %v139
    %v141 = vrot.slane %v132, %v140
    %v142 = vlaneseq
    %v143 = vshrl.u32 %v142, 7
    %v144 = vsub.s32 2, %v143
    %v145 = vrot.slane %v132, %v144
    %v146 = vlaneseq
    %v147 = vshrl.u32 %v146, 7
    %v148 = vsub.s32 3, %v147
    %v149 = vrot.slane %v132, %v148
    %v162 = vunpack.c.l.b16 %v92
    %v163 = vunpack.c.l.b16 %v93
    %v164 = vunpack.c.l.b16 %v94
    %v165 = vunpack.c.l.b16 %v95
    %v166 = vunpack.c.l.b16 %v96
    %v167 = vunpack.c.l.b16 %v97
    %v168 = vunpack.c.l.b16 %v98
    %v169 = vunpack.c.l.b16 %v99
    %v170 = vpack.c.b16 %v163, %v162
    %v171 = vpack.c.b16 %v165, %v164
    %v172 = vpack.c.b16 %v167, %v166
    %v173 = vpack.c.b16 %v169, %v168
    %v210 = vunpack.c.l.b16 %v100
    %v211 = vunpack.c.h.b16 %v100
    %v212 = vunpack.c.l.b16 %v101
    %v213 = vunpack.c.h.b16 %v101
    %v214 = vunpack.c.l.b16 %v102
    %v215 = vunpack.c.h.b16 %v102
    %v216 = vunpack.c.l.b16 %v103
    %v217 = vunpack.c.h.b16 %v103
    %v218 = vunpack.c.l.b16 %v104
    %v219 = vunpack.c.h.b16 %v104
    %v220 = vunpack.c.l.b16 %v105
    %v221 = vunpack.c.h.b16 %v105
    %v222 = vunpack.c.l.b16 %v106
    %v223 = vunpack.c.h.b16 %v106
    %v224 = vunpack.c.l.b16 %v107
    %v225 = vunpack.c.h.b16 %v107
    %v226 = vunpack.c.l.b16 %v108
    %v227 = vunpack.c.h.b16 %v108
    %v228 = vunpack.c.l.b16 %v109
    %v229 = vunpack.c.h.b16 %v109
    %v230 = vunpack.c.l.b16 %v110
    %v231 = vunpack.c.h.b16 %v110
    %v232 = vunpack.c.l.b16 %v111
    %v233 = vunpack.c.h.b16 %v111
    %v234 = vunpack.c.l.b16 %v112
    %v235 = vunpack.c.h.b16 %v112
    %v236 = vunpack.c.l.b16 %v113
    %v237 = vunpack.c.h.b16 %v113
    %v238 = vunpack.c.l.b16 %v114
    %v239 = vunpack.c.h.b16 %v114
    %v240 = vunpack.c.l.b16 %v115
    %v241 = vunpack.c.h.b16 %v115
    %v242 = vunpack.c.l.b16 %v116
    %v243 = vunpack.c.h.b16 %v116
    %v244 = vunpack.c.l.b16 %v117
    %v245 = vunpack.c.h.b16 %v117
    %v246 = vunpack.c.l.b16 %v118
    %v247 = vunpack.c.h.b16 %v118
    %v248 = vunpack.c.l.b16 %v119
    %v249 = vunpack.c.h.b16 %v119
    %v250 = vunpack.c.l.b16 %v120
    %v251 = vunpack.c.h.b16 %v120
    %v252 = vunpack.c.l.b16 %v121
    %v253 = vunpack.c.h.b16 %v121
    %v254 = vunpack.c.l.b16 %v122
    %v255 = vunpack.c.h.b16 %v122
    %v256 = vunpack.c.l.b16 %v123
    %v257 = vunpack.c.h.b16 %v123
    %v258 = vunpack.c.l.b16 %v124
    %v259 = vunpack.c.h.b16 %v124
    %v260 = vunpack.c.l.b16 %v125
    %v261 = vunpack.c.h.b16 %v125
    %v262 = vunpack.c.l.b16 %v126
    %v263 = vunpack.c.h.b16 %v126
    %v264 = vunpack.c.l.b16 %v127
    %v265 = vunpack.c.h.b16 %v127
    %v266 = vunpack.c.l.b16 %v128
    %v267 = vunpack.c.h.b16 %v128
    %v268 = vunpack.c.l.b16 %v129
    %v269 = vunpack.c.h.b16 %v129
    %v270 = vunpack.c.l.b16 %v130
    %v271 = vunpack.c.h.b16 %v130
    %v272 = vunpack.c.l.b16 %v131
    %v273 = vunpack.c.h.b16 %v131
    %v274 = vpack.c.b16 %v214, %v210
    %v275 = vpack.c.b16 %v215, %v211
    %v276 = vpack.c.b16 %v216, %v212
    %v277 = vpack.c.b16 %v217, %v213
    %v278 = vpack.c.b16 %v222, %v218
    %v279 = vpack.c.b16 %v223, %v219
    %v280 = vpack.c.b16 %v224, %v220
    %v281 = vpack.c.b16 %v225, %v221
    %v282 = vpack.c.b16 %v230, %v226
    %v283 = vpack.c.b16 %v231, %v227
    %v284 = vpack.c.b16 %v232, %v228
    %v285 = vpack.c.b16 %v233, %v229
    %v286 = vpack.c.b16 %v238, %v234
    %v287 = vpack.c.b16 %v239, %v235
    %v288 = vpack.c.b16 %v240, %v236
    %v289 = vpack.c.b16 %v241, %v237
    %v290 = vpack.c.b16 %v246, %v242
    %v291 = vpack.c.b16 %v247, %v243
    %v292 = vpack.c.b16 %v248, %v244
    %v293 = vpack.c.b16 %v249, %v245
    %v294 = vpack.c.b16 %v254, %v250
    %v295 = vpack.c.b16 %v255, %v251
    %v296 = vpack.c.b16 %v256, %v252
    %v297 = vpack.c.b16 %v257, %v253
    %v298 = vpack.c.b16 %v262, %v258
    %v299 = vpack.c.b16 %v263, %v259
    %v300 = vpack.c.b16 %v264, %v260
    %v301 = vpack.c.b16 %v265, %v261
    %v302 = vpack.c.b16 %v270, %v266
    %v303 = vpack.c.b16 %v271, %v267
    %v304 = vpack.c.b16 %v272, %v268
    %v305 = vpack.c.b16 %v273, %v269
    %338 = vmatprep.subr.bf16.mxu0 %v303
    %339 = vmatpush1.bf16.msra.mxu0 %v302
    %340 = vmatprep.subr.bf16.mxu0 %v299
    %341 = vmatpush1.bf16.msra.mxu0 %v298
    %342 = vmatprep.subr.bf16.mxu0 %v295
    %343 = vmatpush1.bf16.msra.mxu0 %v294
    %344 = vmatprep.subr.bf16.mxu0 %v291
    %345 = vmatpush1.bf16.msra.mxu0 %v290
    %346 = vmatprep.subr.bf16.mxu0 %v287
    %347 = vmatpush1.bf16.msra.mxu0 %v286
    %348 = vmatprep.subr.bf16.mxu0 %v283
    %349 = vmatpush1.bf16.msra.mxu0 %v282
    %350 = vmatprep.subr.bf16.mxu0 %v279
    %351 = vmatpush1.bf16.msra.mxu0 %v278
    %352 = vmatprep.subr.bf16.mxu0 %v275
    %353 = vmatpush1.bf16.msra.mxu0 %v274
    %354 = vmatprep.subr.bf16.mxu0 0
    %355 = vmatpush2.bf16.msra.mxu0 0
    %356 = vmatprep.subr.bf16.mxu0 0
    %357 = vmatpush2.bf16.msra.mxu0 0
    %358 = vmatprep.subr.bf16.mxu0 0
    %359 = vmatpush2.bf16.msra.mxu0 0
    %360 = vmatprep.subr.bf16.mxu0 0
    %361 = vmatpush2.bf16.msra.mxu0 0
    %362 = vmatprep.subr.bf16.mxu0 0
    %363 = vmatpush2.bf16.msra.mxu0 0
    %364 = vmatprep.subr.bf16.mxu0 0
    %365 = vmatpush2.bf16.msra.mxu0 0
    %366 = vmatprep.subr.bf16.mxu0 0
    %367 = vmatpush2.bf16.msra.mxu0 0
    %368 = vmatprep.subr.bf16.mxu0 0
    %369 = vmatpush2.bf16.msra.mxu0 0
    %370 = vmatprep.mubr.bf16.mxu0 0
    %371 = vmatmul.mubr.bf16.gmra.mxu0 %v170
    %v372 = vpop.f32.mrf.mxu0
    %v373 = vadd.f32 %v137, %v372
    %v374 = vpop.f32.mrf.mxu0
    %v375 = vadd.f32 %v141, %v374
    %v376 = vpop.f32.mrf.mxu0
    %v377 = vadd.f32 %v137, %v376
    %v378 = vpop.f32.mrf.mxu0
    %v379 = vadd.f32 %v141, %v378
    %380 = vmatprep.mubr.bf16.mxu0 0
    %381 = vmatmul.mubr.bf16.gmra.mxu0 %v171
    %v382 = vpop.f32.mrf.mxu0
    %v383 = vadd.f32 %v137, %v382
    %v384 = vpop.f32.mrf.mxu0
    %v385 = vadd.f32 %v141, %v384
    %v386 = vpop.f32.mrf.mxu0
    %v387 = vadd.f32 %v137, %v386
    %v388 = vpop.f32.mrf.mxu0
    %v389 = vadd.f32 %v141, %v388
    %390 = vmatprep.mubr.bf16.mxu0 0
    %391 = vmatmul.mubr.bf16.gmra.mxu0 %v172
    %v392 = vpop.f32.mrf.mxu0
    %v393 = vadd.f32 %v137, %v392
    %v394 = vpop.f32.mrf.mxu0
    %v395 = vadd.f32 %v141, %v394
    %v396 = vpop.f32.mrf.mxu0
    %v397 = vadd.f32 %v137, %v396
    %v398 = vpop.f32.mrf.mxu0
    %v399 = vadd.f32 %v141, %v398
    %400 = vmatprep.mubr.bf16.mxu0 0
    %401 = vmatmul.mubr.bf16.gmra.mxu0 %v173
    %v402 = vpop.f32.mrf.mxu0
    %v403 = vadd.f32 %v137, %v402
    %v404 = vpop.f32.mrf.mxu0
    %v405 = vadd.f32 %v141, %v404
    %v406 = vpop.f32.mrf.mxu0
    %v407 = vadd.f32 %v137, %v406
    %v408 = vpop.f32.mrf.mxu0
    %v409 = vadd.f32 %v141, %v408
    %410 = vdwg.mxu0
    %411 = vmatprep.subr.bf16.mxu0 %v305
    %412 = vmatpush1.bf16.msra.mxu0 %v304
    %413 = vmatprep.subr.bf16.mxu0 %v301
    %414 = vmatpush1.bf16.msra.mxu0 %v300
    %415 = vmatprep.subr.bf16.mxu0 %v297
    %416 = vmatpush1.bf16.msra.mxu0 %v296
    %417 = vmatprep.subr.bf16.mxu0 %v293
    %418 = vmatpush1.bf16.msra.mxu0 %v292
    %419 = vmatprep.subr.bf16.mxu0 %v289
    %420 = vmatpush1.bf16.msra.mxu0 %v288
    %421 = vmatprep.subr.bf16.mxu0 %v285
    %422 = vmatpush1.bf16.msra.mxu0 %v284
    %423 = vmatprep.subr.bf16.mxu0 %v281
    %424 = vmatpush1.bf16.msra.mxu0 %v280
    %425 = vmatprep.subr.bf16.mxu0 %v277
    %426 = vmatpush1.bf16.msra.mxu0 %v276
    %427 = vmatprep.subr.bf16.mxu0 0
    %428 = vmatpush2.bf16.msra.mxu0 0
    %429 = vmatprep.subr.bf16.mxu0 0
    %430 = vmatpush2.bf16.msra.mxu0 0
    %431 = vmatprep.subr.bf16.mxu0 0
    %432 = vmatpush2.bf16.msra.mxu0 0
    %433 = vmatprep.subr.bf16.mxu0 0
    %434 = vmatpush2.bf16.msra.mxu0 0
    %435 = vmatprep.subr.bf16.mxu0 0
    %436 = vmatpush2.bf16.msra.mxu0 0
    %437 = vmatprep.subr.bf16.mxu0 0
    %438 = vmatpush2.bf16.msra.mxu0 0
    %439 = vmatprep.subr.bf16.mxu0 0
    %440 = vmatpush2.bf16.msra.mxu0 0
    %441 = vmatprep.subr.bf16.mxu0 0
    %442 = vmatpush2.bf16.msra.mxu0 0
    %443 = vmatprep.mubr.bf16.mxu0 0
    %444 = vmatmul.mubr.bf16.gmra.mxu0 %v170
    %v445 = vpop.f32.mrf.mxu0
    %v446 = vadd.f32 %v145, %v445
    %v447 = vpop.f32.mrf.mxu0
    %v448 = vadd.f32 %v149, %v447
    %v449 = vpop.f32.mrf.mxu0
    %v450 = vadd.f32 %v145, %v449
    %v451 = vpop.f32.mrf.mxu0
    %v452 = vadd.f32 %v149, %v451
    %453 = vmatprep.mubr.bf16.mxu0 0
    %454 = vmatmul.mubr.bf16.gmra.mxu0 %v171
    %v455 = vpop.f32.mrf.mxu0
    %v456 = vadd.f32 %v145, %v455
    %v457 = vpop.f32.mrf.mxu0
    %v458 = vadd.f32 %v149, %v457
    %v459 = vpop.f32.mrf.mxu0
    %v460 = vadd.f32 %v145, %v459
    %v461 = vpop.f32.mrf.mxu0
    %v462 = vadd.f32 %v149, %v461
    %463 = vmatprep.mubr.bf16.mxu0 0
    %464 = vmatmul.mubr.bf16.gmra.mxu0 %v172
    %v465 = vpop.f32.mrf.mxu0
    %v466 = vadd.f32 %v145, %v465
    %v467 = vpop.f32.mrf.mxu0
    %v468 = vadd.f32 %v149, %v467
    %v469 = vpop.f32.mrf.mxu0
    %v470 = vadd.f32 %v145, %v469
    %v471 = vpop.f32.mrf.mxu0
    %v472 = vadd.f32 %v149, %v471
    %473 = vmatprep.mubr.bf16.mxu0 0
    %474 = vmatmul.mubr.bf16.gmra.mxu0 %v173
    %v475 = vpop.f32.mrf.mxu0
    %v476 = vadd.f32 %v145, %v475
    %v477 = vpop.f32.mrf.mxu0
    %v478 = vadd.f32 %v149, %v477
    %v479 = vpop.f32.mrf.mxu0
    %v480 = vadd.f32 %v145, %v479
    %v481 = vpop.f32.mrf.mxu0
    %v482 = vadd.f32 %v149, %v481
    %483 = vdwg.mxu0
    %484 = vst [vmem:[#allocation3] sm:$0xff] %v373
    %485 = vst [vmem:[#allocation3 + $0x8] sm:$0xff] %v375
    %486 = vst [vmem:[#allocation3 + $0x10] sm:$0xff] %v446
    %487 = vst [vmem:[#allocation3 + $0x18] sm:$0xff] %v448
    %488 = vst [vmem:[#allocation3 + $0x20] sm:$0xff] %v377
    %489 = vst [vmem:[#allocation3 + $0x28] sm:$0xff] %v379
    %490 = vst [vmem:[#allocation3 + $0x30] sm:$0xff] %v450
    %491 = vst [vmem:[#allocation3 + $0x38] sm:$0xff] %v452
    %492 = vst [vmem:[#allocation3 + $0x40] sm:$0xff] %v383
    %493 = vst [vmem:[#allocation3 + $0x48] sm:$0xff] %v385
    %494 = vst [vmem:[#allocation3 + $0x50] sm:$0xff] %v456
    %495 = vst [vmem:[#allocation3 + $0x58] sm:$0xff] %v458
    %496 = vst [vmem:[#allocation3 + $0x60] sm:$0xff] %v387
    %497 = vst [vmem:[#allocation3 + $0x68] sm:$0xff] %v389
    %498 = vst [vmem:[#allocation3 + $0x70] sm:$0xff] %v460
    %499 = vst [vmem:[#allocation3 + $0x78] sm:$0xff] %v462
    %500 = vst [vmem:[#allocation3 + $0x80] sm:$0xff] %v393
    %501 = vst [vmem:[#allocation3 + $0x88] sm:$0xff] %v395
    %502 = vst [vmem:[#allocation3 + $0x90] sm:$0xff] %v466
    %503 = vst [vmem:[#allocation3 + $0x98] sm:$0xff] %v468
    %504 = vst [vmem:[#allocation3 + $0xa0] sm:$0xff] %v397
    %505 = vst [vmem:[#allocation3 + $0xa8] sm:$0xff] %v399
    %506 = vst [vmem:[#allocation3 + $0xb0] sm:$0xff] %v470
    %507 = vst [vmem:[#allocation3 + $0xb8] sm:$0xff] %v472
    %508 = vst [vmem:[#allocation3 + $0xc0] sm:$0xff] %v403
    %509 = vst [vmem:[#allocation3 + $0xc8] sm:$0xff] %v405
    %510 = vst [vmem:[#allocation3 + $0xd0] sm:$0xff] %v476
    %511 = vst [vmem:[#allocation3 + $0xd8] sm:$0xff] %v478
    %512 = vst [vmem:[#allocation3 + $0xe0] sm:$0xff] %v407
    %513 = vst [vmem:[#allocation3 + $0xe8] sm:$0xff] %v409
    %514 = vst [vmem:[#allocation3 + $0xf0] sm:$0xff] %v480
    %515 = vst [vmem:[#allocation3 + $0xf8] sm:$0xff] %v482
    %v516 = vld [vmem:[#allocation8] sm:$0xff]
    %v517 = vld [vmem:[#allocation8 + $0x8] sm:$0xff]
    %v518 = vld [vmem:[#allocation8 + $0x10] sm:$0xff]
    %v519 = vld [vmem:[#allocation8 + $0x18] sm:$0xff]
    %v520 = vld [vmem:[#allocation8 + $0x20] sm:$0xff]
    %v521 = vld [vmem:[#allocation8 + $0x28] sm:$0xff]
    %v522 = vld [vmem:[#allocation8 + $0x30] sm:$0xff]
    %v523 = vld [vmem:[#allocation8 + $0x38] sm:$0xff]
    %v524 = vld [vmem:[#allocation8 + $0x40] sm:$0xff]
    %v525 = vld [vmem:[#allocation8 + $0x48] sm:$0xff]
    %v526 = vld [vmem:[#allocation8 + $0x50] sm:$0xff]
    %v527 = vld [vmem:[#allocation8 + $0x58] sm:$0xff]
    %v528 = vld [vmem:[#allocation8 + $0x60] sm:$0xff]
    %v529 = vld [vmem:[#allocation8 + $0x68] sm:$0xff]
    %v530 = vld [vmem:[#allocation8 + $0x70] sm:$0xff]
    %v531 = vld [vmem:[#allocation8 + $0x78] sm:$0xff]
    %v532 = vld [vmem:[#allocation8 + $0x80] sm:$0xff]
    %v533 = vld [vmem:[#allocation8 + $0x88] sm:$0xff]
    %v534 = vld [vmem:[#allocation8 + $0x90] sm:$0xff]
    %v535 = vld [vmem:[#allocation8 + $0x98] sm:$0xff]
    %v536 = vld [vmem:[#allocation8 + $0xa0] sm:$0xff]
    %v537 = vld [vmem:[#allocation8 + $0xa8] sm:$0xff]
    %v538 = vld [vmem:[#allocation8 + $0xb0] sm:$0xff]
    %v539 = vld [vmem:[#allocation8 + $0xb8] sm:$0xff]
    %v540 = vld [vmem:[#allocation8 + $0xc0] sm:$0xff]
    %v541 = vld [vmem:[#allocation8 + $0xc8] sm:$0xff]
    %v542 = vld [vmem:[#allocation8 + $0xd0] sm:$0xff]
    %v543 = vld [vmem:[#allocation8 + $0xd8] sm:$0xff]
    %v544 = vld [vmem:[#allocation8 + $0xe0] sm:$0xff]
    %v545 = vld [vmem:[#allocation8 + $0xe8] sm:$0xff]
    %v546 = vld [vmem:[#allocation8 + $0xf0] sm:$0xff]
    %v547 = vld [vmem:[#allocation8 + $0xf8] sm:$0xff]
    %v548 = vld [vmem:[%s7] sm:$0xff]
    %v549 = vld [vmem:[%s8] sm:$0xff]
    %v550 = vld [vmem:[#allocation3] sm:$0xff]
    %v551 = vld [vmem:[#allocation3 + $0x8] sm:$0xff]
    %v552 = vld [vmem:[#allocation3 + $0x10] sm:$0xff]
    %v553 = vld [vmem:[#allocation3 + $0x18] sm:$0xff]
    %v554 = vpack.c.bf16 %v548, %v548
    %v587 = vunpack.c.l.b16 %v516
    %v588 = vunpack.c.h.b16 %v516
    %v589 = vunpack.c.l.b16 %v517
    %v590 = vunpack.c.h.b16 %v517
    %v591 = vunpack.c.l.b16 %v518
    %v592 = vunpack.c.h.b16 %v518
    %v593 = vunpack.c.l.b16 %v519
    %v594 = vunpack.c.h.b16 %v519
    %v595 = vunpack.c.l.b16 %v520
    %v596 = vunpack.c.h.b16 %v520
    %v597 = vunpack.c.l.b16 %v521
    %v598 = vunpack.c.h.b16 %v521
    %v599 = vunpack.c.l.b16 %v522
    %v600 = vunpack.c.h.b16 %v522
    %v601 = vunpack.c.l.b16 %v523
    %v602 = vunpack.c.h.b16 %v523
    %v603 = vunpack.c.l.b16 %v524
    %v604 = vunpack.c.h.b16 %v524
    %v605 = vunpack.c.l.b16 %v525
    %v606 = vunpack.c.h.b16 %v525
    %v607 = vunpack.c.l.b16 %v526
    %v608 = vunpack.c.h.b16 %v526
    %v609 = vunpack.c.l.b16 %v527
    %v610 = vunpack.c.h.b16 %v527
    %v611 = vunpack.c.l.b16 %v528
    %v612 = vunpack.c.h.b16 %v528
    %v613 = vunpack.c.l.b16 %v529
    %v614 = vunpack.c.h.b16 %v529
    %v615 = vunpack.c.l.b16 %v530
    %v616 = vunpack.c.h.b16 %v530
    %v617 = vunpack.c.l.b16 %v531
    %v618 = vunpack.c.h.b16 %v531
    %v619 = vunpack.c.l.b16 %v532
    %v620 = vunpack.c.h.b16 %v532
    %v621 = vunpack.c.l.b16 %v533
    %v622 = vunpack.c.h.b16 %v533
    %v623 = vunpack.c.l.b16 %v534
    %v624 = vunpack.c.h.b16 %v534
    %v625 = vunpack.c.l.b16 %v535
    %v626 = vunpack.c.h.b16 %v535
    %v627 = vunpack.c.l.b16 %v536
    %v628 = vunpack.c.h.b16 %v536
    %v629 = vunpack.c.l.b16 %v537
    %v630 = vunpack.c.h.b16 %v537
    %v631 = vunpack.c.l.b16 %v538
    %v632 = vunpack.c.h.b16 %v538
    %v633 = vunpack.c.l.b16 %v539
    %v634 = vunpack.c.h.b16 %v539
    %v635 = vunpack.c.l.b16 %v540
    %v636 = vunpack.c.h.b16 %v540
    %v637 = vunpack.c.l.b16 %v541
    %v638 = vunpack.c.h.b16 %v541
    %v639 = vunpack.c.l.b16 %v542
    %v640 = vunpack.c.h.b16 %v542
    %v641 = vunpack.c.l.b16 %v543
    %v642 = vunpack.c.h.b16 %v543
    %v643 = vunpack.c.l.b16 %v544
    %v644 = vunpack.c.h.b16 %v544
    %v645 = vunpack.c.l.b16 %v545
    %v646 = vunpack.c.h.b16 %v545
    %v647 = vunpack.c.l.b16 %v546
    %v648 = vunpack.c.h.b16 %v546
    %v649 = vunpack.c.l.b16 %v547
    %v650 = vunpack.c.h.b16 %v547
    %v651 = vpack.c.b16 %v591, %v587
    %v652 = vpack.c.b16 %v592, %v588
    %v653 = vpack.c.b16 %v593, %v589
    %v654 = vpack.c.b16 %v594, %v590
    %v655 = vpack.c.b16 %v599, %v595
    %v656 = vpack.c.b16 %v600, %v596
    %v657 = vpack.c.b16 %v601, %v597
    %v658 = vpack.c.b16 %v602, %v598
    %v659 = vpack.c.b16 %v607, %v603
    %v660 = vpack.c.b16 %v608, %v604
    %v661 = vpack.c.b16 %v609, %v605
    %v662 = vpack.c.b16 %v610, %v606
    %v663 = vpack.c.b16 %v615, %v611
    %v664 = vpack.c.b16 %v616, %v612
    %v665 = vpack.c.b16 %v617, %v613
    %v666 = vpack.c.b16 %v618, %v614
    %v667 = vpack.c.b16 %v623, %v619
    %v668 = vpack.c.b16 %v624, %v620
    %v669 = vpack.c.b16 %v625, %v621
    %v670 = vpack.c.b16 %v626, %v622
    %v671 = vpack.c.b16 %v631, %v627
    %v672 = vpack.c.b16 %v632, %v628
    %v673 = vpack.c.b16 %v633, %v629
    %v674 = vpack.c.b16 %v634, %v630
    %v675 = vpack.c.b16 %v639, %v635
    %v676 = vpack.c.b16 %v640, %v636
    %v677 = vpack.c.b16 %v641, %v637
    %v678 = vpack.c.b16 %v642, %v638
    %v679 = vpack.c.b16 %v647, %v643
    %v680 = vpack.c.b16 %v648, %v644
    %v681 = vpack.c.b16 %v649, %v645
    %v682 = vpack.c.b16 %v650, %v646
    %715 = vmatprep.subr.bf16.mxu0 %v680
    %716 = vmatpush1.bf16.msra.mxu0 %v679
    %717 = vmatprep.subr.bf16.mxu0 %v676
    %718 = vmatpush1.bf16.msra.mxu0 %v675
    %719 = vmatprep.subr.bf16.mxu0 %v672
    %720 = vmatpush1.bf16.msra.mxu0 %v671
    %721 = vmatprep.subr.bf16.mxu0 %v668
    %722 = vmatpush1.bf16.msra.mxu0 %v667
    %723 = vmatprep.subr.bf16.mxu0 %v664
    %724 = vmatpush1.bf16.msra.mxu0 %v663
    %725 = vmatprep.subr.bf16.mxu0 %v660
    %726 = vmatpush1.bf16.msra.mxu0 %v659
    %727 = vmatprep.subr.bf16.mxu0 %v656
    %728 = vmatpush1.bf16.msra.mxu0 %v655
    %729 = vmatprep.subr.bf16.mxu0 %v652
    %730 = vmatpush1.bf16.msra.mxu0 %v651
    %731 = vmatprep.subr.bf16.mxu0 0
    %732 = vmatpush2.bf16.msra.mxu0 0
    %733 = vmatprep.subr.bf16.mxu0 0
    %734 = vmatpush2.bf16.msra.mxu0 0
    %735 = vmatprep.subr.bf16.mxu0 0
    %736 = vmatpush2.bf16.msra.mxu0 0
    %737 = vmatprep.subr.bf16.mxu0 0
    %738 = vmatpush2.bf16.msra.mxu0 0
    %739 = vmatprep.subr.bf16.mxu0 0
    %740 = vmatpush2.bf16.msra.mxu0 0
    %741 = vmatprep.subr.bf16.mxu0 0
    %742 = vmatpush2.bf16.msra.mxu0 0
    %743 = vmatprep.subr.bf16.mxu0 0
    %744 = vmatpush2.bf16.msra.mxu0 0
    %745 = vmatprep.subr.bf16.mxu0 0
    %746 = vmatpush2.bf16.msra.mxu0 0
    %747 = vmatprep.mubr.bf16.mxu0 0
    %748 = vmatmul.mubr.bf16.gmra.mxu0 %v554
    %v749 = vpop.f32.mrf.mxu0
    %v750 = vadd.f32 0.0, %v749
    %v751 = vpop.f32.mrf.mxu0
    %v752 = vadd.f32 0.0, %v751
    %v753 = vpop.f32.mrf.mxu0
    %v754 = vpop.f32.mrf.mxu0
    %755 = vdwg.mxu0
    %756 = vmatprep.subr.bf16.mxu0 %v682
    %757 = vmatpush1.bf16.msra.mxu0 %v681
    %758 = vmatprep.subr.bf16.mxu0 %v678
    %759 = vmatpush1.bf16.msra.mxu0 %v677
    %760 = vmatprep.subr.bf16.mxu0 %v674
    %761 = vmatpush1.bf16.msra.mxu0 %v673
    %762 = vmatprep.subr.bf16.mxu0 %v670
    %763 = vmatpush1.bf16.msra.mxu0 %v669
    %764 = vmatprep.subr.bf16.mxu0 %v666
    %765 = vmatpush1.bf16.msra.mxu0 %v665
    %766 = vmatprep.subr.bf16.mxu0 %v662
    %767 = vmatpush1.bf16.msra.mxu0 %v661
    %768 = vmatprep.subr.bf16.mxu0 %v658
    %769 = vmatpush1.bf16.msra.mxu0 %v657
    %770 = vmatprep.subr.bf16.mxu0 %v654
    %771 = vmatpush1.bf16.msra.mxu0 %v653
    %772 = vmatprep.subr.bf16.mxu0 0
    %773 = vmatpush2.bf16.msra.mxu0 0
    %774 = vmatprep.subr.bf16.mxu0 0
    %775 = vmatpush2.bf16.msra.mxu0 0
    %776 = vmatprep.subr.bf16.mxu0 0
    %777 = vmatpush2.bf16.msra.mxu0 0
    %778 = vmatprep.subr.bf16.mxu0 0
    %779 = vmatpush2.bf16.msra.mxu0 0
    %780 = vmatprep.subr.bf16.mxu0 0
    %781 = vmatpush2.bf16.msra.mxu0 0
    %782 = vmatprep.subr.bf16.mxu0 0
    %783 = vmatpush2.bf16.msra.mxu0 0
    %784 = vmatprep.subr.bf16.mxu0 0
    %785 = vmatpush2.bf16.msra.mxu0 0
    %786 = vmatprep.subr.bf16.mxu0 0
    %787 = vmatpush2.bf16.msra.mxu0 0
    %788 = vmatprep.mubr.bf16.mxu0 0
    %789 = vmatmul.mubr.bf16.gmra.mxu0 %v554
    %v790 = vpop.f32.mrf.mxu0
    %v791 = vadd.f32 0.0, %v790
    %v792 = vpop.f32.mrf.mxu0
    %v793 = vadd.f32 0.0, %v792
    %v794 = vpop.f32.mrf.mxu0
    %v795 = vpop.f32.mrf.mxu0
    %796 = vdwg.mxu0
    %v797 = vadd.f32 %v550, %v750
    %v798 = vadd.f32 %v551, %v752
    %v799 = vadd.f32 %v552, %v791
    %v800 = vadd.f32 %v553, %v793
    %v801 = vmul.f32 %v797, 0.5
    %v802 = vtanh.pop %v801
    %v803 = vmul.f32 %v802, 0.5
    %v804 = vadd.f32 %v803, 0.5
    %v805 = vmul.f32 %v798, 0.5
    %v806 = vtanh.pop %v805
    %v807 = vmul.f32 %v806, 0.5
    %v808 = vadd.f32 %v807, 0.5
    %v809 = vtanh.pop %v799
    %v810 = vmul.f32 %v800, 0.5
    %v811 = vtanh.pop %v810
    %v812 = vmul.f32 %v811, 0.5
    %v813 = vadd.f32 %v812, 0.5
    %v814 = vmul.f32 %v808, %v549
    %v815 = vmul.f32 %v804, %v809
    %v816 = vadd.f32 %v814, %v815
    %v817 = vtanh.pop %v816
    %v818 = vmul.f32 %v813, %v817
    %v819 = vpack.c.bf16 %v818, %v818
    %820 = vst [vmem:[#allocation2] sm:$0xf] %v819
    %v821 = vld [vmem:[#allocation3 + $0x20] sm:$0xff]
    %v822 = vld [vmem:[#allocation3 + $0x28] sm:$0xff]
    %v823 = vld [vmem:[#allocation3 + $0x30] sm:$0xff]
    %v824 = vld [vmem:[#allocation3 + $0x38] sm:$0xff]
    %825 = vmatprep.subr.bf16.mxu0 %v680
    %826 = vmatpush1.bf16.msra.mxu0 %v679
    %827 = vmatprep.subr.bf16.mxu0 %v676
    %828 = vmatpush1.bf16.msra.mxu0 %v675
    %829 = vmatprep.subr.bf16.mxu0 %v672
    %830 = vmatpush1.bf16.msra.mxu0 %v671
    %831 = vmatprep.subr.bf16.mxu0 %v668
    %832 = vmatpush1.bf16.msra.mxu0 %v667
    %833 = vmatprep.subr.bf16.mxu0 %v664
    %834 = vmatpush1.bf16.msra.mxu0 %v663
    %835 = vmatprep.subr.bf16.mxu0 %v660
    %836 = vmatpush1.bf16.msra.mxu0 %v659
    %837 = vmatprep.subr.bf16.mxu0 %v656
    %838 = vmatpush1.bf16.msra.mxu0 %v655
    %839 = vmatprep.subr.bf16.mxu0 %v652
    %840 = vmatpush1.bf16.msra.mxu0 %v651
    %841 = vmatprep.subr.bf16.mxu0 0
    %842 = vmatpush2.bf16.msra.mxu0 0
    %843 = vmatprep.subr.bf16.mxu0 0
    %844 = vmatpush2.bf16.msra.mxu0 0
    %845 = vmatprep.subr.bf16.mxu0 0
    %846 = vmatpush2.bf16.msra.mxu0 0
    %847 = vmatprep.subr.bf16.mxu0 0
    %848 = vmatpush2.bf16.msra.mxu0 0
    %849 = vmatprep.subr.bf16.mxu0 0
    %850 = vmatpush2.bf16.msra.mxu0 0
    %851 = vmatprep.subr.bf16.mxu0 0
    %852 = vmatpush2.bf16.msra.mxu0 0
    %853 = vmatprep.subr.bf16.mxu0 0
    %854 = vmatpush2.bf16.msra.mxu0 0
    %855 = vmatprep.subr.bf16.mxu0 0
    %856 = vmatpush2.bf16.msra.mxu0 0
    %857 = vmatprep.mubr.bf16.mxu0 0
    %858 = vmatmul.mubr.bf16.gmra.mxu0 %v819
    %v859 = vpop.f32.mrf.mxu0
    %v860 = vadd.f32 0.0, %v859
    %v861 = vpop.f32.mrf.mxu0
    %v862 = vadd.f32 0.0, %v861
    %v863 = vpop.f32.mrf.mxu0
    %v864 = vpop.f32.mrf.mxu0
    %865 = vdwg.mxu0
    %866 = vmatprep.subr.bf16.mxu0 %v682
    %867 = vmatpush1.bf16.msra.mxu0 %v681
    %868 = vmatprep.subr.bf16.mxu0 %v678
    %869 = vmatpush1.bf16.msra.mxu0 %v677
    %870 = vmatprep.subr.bf16.mxu0 %v674
    %871 = vmatpush1.bf16.msra.mxu0 %v673
    %872 = vmatprep.subr.bf16.mxu0 %v670
    %873 = vmatpush1.bf16.msra.mxu0 %v669
    %874 = vmatprep.subr.bf16.mxu0 %v666
    %875 = vmatpush1.bf16.msra.mxu0 %v665
    %876 = vmatprep.subr.bf16.mxu0 %v662
    %877 = vmatpush1.bf16.msra.mxu0 %v661
    %878 = vmatprep.subr.bf16.mxu0 %v658
    %879 = vmatpush1.bf16.msra.mxu0 %v657
    %880 = vmatprep.subr.bf16.mxu0 %v654
    %881 = vmatpush1.bf16.msra.mxu0 %v653
    %882 = vmatprep.subr.bf16.mxu0 0
    %883 = vmatpush2.bf16.msra.mxu0 0
    %884 = vmatprep.subr.bf16.mxu0 0
    %885 = vmatpush2.bf16.msra.mxu0 0
    %886 = vmatprep.subr.bf16.mxu0 0
    %887 = vmatpush2.bf16.msra.mxu0 0
    %888 = vmatprep.subr.bf16.mxu0 0
    %889 = vmatpush2.bf16.msra.mxu0 0
    %890 = vmatprep.subr.bf16.mxu0 0
    %891 = vmatpush2.bf16.msra.mxu0 0
    %892 = vmatprep.subr.bf16.mxu0 0
    %893 = vmatpush2.bf16.msra.mxu0 0
    %894 = vmatprep.subr.bf16.mxu0 0
    %895 = vmatpush2.bf16.msra.mxu0 0
    %896 = vmatprep.subr.bf16.mxu0 0
    %897 = vmatpush2.bf16.msra.mxu0 0
    %898 = vmatprep.mubr.bf16.mxu0 0
    %899 = vmatmul.mubr.bf16.gmra.mxu0 %v819
    %v900 = vpop.f32.mrf.mxu0
    %v901 = vadd.f32 0.0, %v900
    %v902 = vpop.f32.mrf.mxu0
    %v903 = vadd.f32 0.0, %v902
    %v904 = vpop.f32.mrf.mxu0
    %v905 = vpop.f32.mrf.mxu0
    %906 = vdwg.mxu0
    %v907 = vadd.f32 %v821, %v860
    %v908 = vadd.f32 %v822, %v862
    %v909 = vadd.f32 %v823, %v901
    %v910 = vadd.f32 %v824, %v903
    %v911 = vmul.f32 %v907, 0.5
    %v912 = vtanh.pop %v911
    %v913 = vmul.f32 %v912, 0.5
    %v914 = vadd.f32 %v913, 0.5
    %v915 = vmul.f32 %v908, 0.5
    %v916 = vtanh.pop %v915
    %v917 = vmul.f32 %v916, 0.5
    %v918 = vadd.f32 %v917, 0.5
    %v919 = vtanh.pop %v909
    %v920 = vmul.f32 %v910, 0.5
    %v921 = vtanh.pop %v920
    %v922 = vmul.f32 %v921, 0.5
    %v923 = vadd.f32 %v922, 0.5
    %v924 = vmul.f32 %v918, %v816
    %v925 = vmul.f32 %v914, %v919
    %v926 = vadd.f32 %v924, %v925
    %v927 = vtanh.pop %v926
    %v928 = vmul.f32 %v923, %v927
    %v929 = vpack.c.bf16 %v928, %v928
    %930 = vst [vmem:[#allocation2 + $0x4] sm:$0xf] %v929
    %v931 = vld [vmem:[#allocation3 + $0x40] sm:$0xff]
    %v932 = vld [vmem:[#allocation3 + $0x48] sm:$0xff]
    %v933 = vld [vmem:[#allocation3 + $0x50] sm:$0xff]
    %v934 = vld [vmem:[#allocation3 + $0x58] sm:$0xff]
    %935 = vmatprep.subr.bf16.mxu0 %v680
    %936 = vmatpush1.bf16.msra.mxu0 %v679
    %937 = vmatprep.subr.bf16.mxu0 %v676
    %938 = vmatpush1.bf16.msra.mxu0 %v675
    %939 = vmatprep.subr.bf16.mxu0 %v672
    %940 = vmatpush1.bf16.msra.mxu0 %v671
    %941 = vmatprep.subr.bf16.mxu0 %v668
    %942 = vmatpush1.bf16.msra.mxu0 %v667
    %943 = vmatprep.subr.bf16.mxu0 %v664
    %944 = vmatpush1.bf16.msra.mxu0 %v663
    %945 = vmatprep.subr.bf16.mxu0 %v660
    %946 = vmatpush1.bf16.msra.mxu0 %v659
    %947 = vmatprep.subr.bf16.mxu0 %v656
    %948 = vmatpush1.bf16.msra.mxu0 %v655
    %949 = vmatprep.subr.bf16.mxu0 %v652
    %950 = vmatpush1.bf16.msra.mxu0 %v651
    %951 = vmatprep.subr.bf16.mxu0 0
    %952 = vmatpush2.bf16.msra.mxu0 0
    %953 = vmatprep.subr.bf16.mxu0 0
    %954 = vmatpush2.bf16.msra.mxu0 0
    %955 = vmatprep.subr.bf16.mxu0 0
    %956 = vmatpush2.bf16.msra.mxu0 0
    %957 = vmatprep.subr.bf16.mxu0 0
    %958 = vmatpush2.bf16.msra.mxu0 0
    %959 = vmatprep.subr.bf16.mxu0 0
    %960 = vmatpush2.bf16.msra.mxu0 0
    %961 = vmatprep.subr.bf16.mxu0 0
    %962 = vmatpush2.bf16.msra.mxu0 0
    %963 = vmatprep.subr.bf16.mxu0 0
    %964 = vmatpush2.bf16.msra.mxu0 0
    %965 = vmatprep.subr.bf16.mxu0 0
    %966 = vmatpush2.bf16.msra.mxu0 0
    %967 = vmatprep.mubr.bf16.mxu0 0
    %968 = vmatmul.mubr.bf16.gmra.mxu0 %v929
    %v969 = vpop.f32.mrf.mxu0
    %v970 = vadd.f32 0.0, %v969
    %v971 = vpop.f32.mrf.mxu0
    %v972 = vadd.f32 0.0, %v971
    %v973 = vpop.f32.mrf.mxu0
    %v974 = vpop.f32.mrf.mxu0
    %975 = vdwg.mxu0
    %976 = vmatprep.subr.bf16.mxu0 %v682
    %977 = vmatpush1.bf16.msra.mxu0 %v681
    %978 = vmatprep.subr.bf16.mxu0 %v678
    %979 = vmatpush1.bf16.msra.mxu0 %v677
    %980 = vmatprep.subr.bf16.mxu0 %v674
    %981 = vmatpush1.bf16.msra.mxu0 %v673
    %982 = vmatprep.subr.bf16.mxu0 %v670
    %983 = vmatpush1.bf16.msra.mxu0 %v669
    %984 = vmatprep.subr.bf16.mxu0 %v666
    %985 = vmatpush1.bf16.msra.mxu0 %v665
    %986 = vmatprep.subr.bf16.mxu0 %v662
    %987 = vmatpush1.bf16.msra.mxu0 %v661
    %988 = vmatprep.subr.bf16.mxu0 %v658
    %989 = vmatpush1.bf16.msra.mxu0 %v657
    %990 = vmatprep.subr.bf16.mxu0 %v654
    %991 = vmatpush1.bf16.msra.mxu0 %v653
    %992 = vmatprep.subr.bf16.mxu0 0
    %993 = vmatpush2.bf16.msra.mxu0 0
    %994 = vmatprep.subr.bf16.mxu0 0
    %995 = vmatpush2.bf16.msra.mxu0 0
    %996 = vmatprep.subr.bf16.mxu0 0
    %997 = vmatpush2.bf16.msra.mxu0 0
    %998 = vmatprep.subr.bf16.mxu0 0
    %999 = vmatpush2.bf16.msra.mxu0 0
    %1000 = vmatprep.subr.bf16.mxu0 0
    %1001 = vmatpush2.bf16.msra.mxu0 0
    %1002 = vmatprep.subr.bf16.mxu0 0
    %1003 = vmatpush2.bf16.msra.mxu0 0
    %1004 = vmatprep.subr.bf16.mxu0 0
    %1005 = vmatpush2.bf16.msra.mxu0 0
    %1006 = vmatprep.subr.bf16.mxu0 0
    %1007 = vmatpush2.bf16.msra.mxu0 0
    %1008 = vmatprep.mubr.bf16.mxu0 0
    %1009 = vmatmul.mubr.bf16.gmra.mxu0 %v929
    %v1010 = vpop.f32.mrf.mxu0
    %v1011 = vadd.f32 0.0, %v1010
    %v1012 = vpop.f32.mrf.mxu0
    %v1013 = vadd.f32 0.0, %v1012
    %v1014 = vpop.f32.mrf.mxu0
    %v1015 = vpop.f32.mrf.mxu0
    %1016 = vdwg.mxu0
    %v1017 = vadd.f32 %v931, %v970
    %v1018 = vadd.f32 %v932, %v972
    %v1019 = vadd.f32 %v933, %v1011
    %v1020 = vadd.f32 %v934, %v1013
    %v1021 = vmul.f32 %v1017, 0.5
    %v1022 = vtanh.pop %v1021
    %v1023 = vmul.f32 %v1022, 0.5
    %v1024 = vadd.f32 %v1023, 0.5
    %v1025 = vmul.f32 %v1018, 0.5
    %v1026 = vtanh.pop %v1025
    %v1027 = vmul.f32 %v1026, 0.5
    %v1028 = vadd.f32 %v1027, 0.5
    %v1029 = vtanh.pop %v1019
    %v1030 = vmul.f32 %v1020, 0.5
    %v1031 = vtanh.pop %v1030
    %v1032 = vmul.f32 %v1031, 0.5
    %v1033 = vadd.f32 %v1032, 0.5
    %v1034 = vmul.f32 %v1028, %v926
    %v1035 = vmul.f32 %v1024, %v1029
    %v1036 = vadd.f32 %v1034, %v1035
    %v1037 = vtanh.pop %v1036
    %v1038 = vmul.f32 %v1033, %v1037
    %v1039 = vpack.c.bf16 %v1038, %v1038
    %1040 = vst [vmem:[#allocation2 + $0x8] sm:$0xf] %v1039
    %v1041 = vld [vmem:[#allocation3 + $0x60] sm:$0xff]
    %v1042 = vld [vmem:[#allocation3 + $0x68] sm:$0xff]
    %v1043 = vld [vmem:[#allocation3 + $0x70] sm:$0xff]
    %v1044 = vld [vmem:[#allocation3 + $0x78] sm:$0xff]
    %1045 = vmatprep.subr.bf16.mxu0 %v680
    %1046 = vmatpush1.bf16.msra.mxu0 %v679
    %1047 = vmatprep.subr.bf16.mxu0 %v676
    %1048 = vmatpush1.bf16.msra.mxu0 %v675
    %1049 = vmatprep.subr.bf16.mxu0 %v672
    %1050 = vmatpush1.bf16.msra.mxu0 %v671
    %1051 = vmatprep.subr.bf16.mxu0 %v668
    %1052 = vmatpush1.bf16.msra.mxu0 %v667
    %1053 = vmatprep.subr.bf16.mxu0 %v664
    %1054 = vmatpush1.bf16.msra.mxu0 %v663
    %1055 = vmatprep.subr.bf16.mxu0 %v660
    %1056 = vmatpush1.bf16.msra.mxu0 %v659
    %1057 = vmatprep.subr.bf16.mxu0 %v656
    %1058 = vmatpush1.bf16.msra.mxu0 %v655
    %1059 = vmatprep.subr.bf16.mxu0 %v652
    %1060 = vmatpush1.bf16.msra.mxu0 %v651
    %1061 = vmatprep.subr.bf16.mxu0 0
    %1062 = vmatpush2.bf16.msra.mxu0 0
    %1063 = vmatprep.subr.bf16.mxu0 0
    %1064 = vmatpush2.bf16.msra.mxu0 0
    %1065 = vmatprep.subr.bf16.mxu0 0
    %1066 = vmatpush2.bf16.msra.mxu0 0
    %1067 = vmatprep.subr.bf16.mxu0 0
    %1068 = vmatpush2.bf16.msra.mxu0 0
    %1069 = vmatprep.subr.bf16.mxu0 0
    %1070 = vmatpush2.bf16.msra.mxu0 0
    %1071 = vmatprep.subr.bf16.mxu0 0
    %1072 = vmatpush2.bf16.msra.mxu0 0
    %1073 = vmatprep.subr.bf16.mxu0 0
    %1074 = vmatpush2.bf16.msra.mxu0 0
    %1075 = vmatprep.subr.bf16.mxu0 0
    %1076 = vmatpush2.bf16.msra.mxu0 0
    %1077 = vmatprep.mubr.bf16.mxu0 0
    %1078 = vmatmul.mubr.bf16.gmra.mxu0 %v1039
    %v1079 = vpop.f32.mrf.mxu0
    %v1080 = vadd.f32 0.0, %v1079
    %v1081 = vpop.f32.mrf.mxu0
    %v1082 = vadd.f32 0.0, %v1081
    %v1083 = vpop.f32.mrf.mxu0
    %v1084 = vpop.f32.mrf.mxu0
    %1085 = vdwg.mxu0
    %1086 = vmatprep.subr.bf16.mxu0 %v682
    %1087 = vmatpush1.bf16.msra.mxu0 %v681
    %1088 = vmatprep.subr.bf16.mxu0 %v678
    %1089 = vmatpush1.bf16.msra.mxu0 %v677
    %1090 = vmatprep.subr.bf16.mxu0 %v674
    %1091 = vmatpush1.bf16.msra.mxu0 %v673
    %1092 = vmatprep.subr.bf16.mxu0 %v670
    %1093 = vmatpush1.bf16.msra.mxu0 %v669
    %1094 = vmatprep.subr.bf16.mxu0 %v666
    %1095 = vmatpush1.bf16.msra.mxu0 %v665
    %1096 = vmatprep.subr.bf16.mxu0 %v662
    %1097 = vmatpush1.bf16.msra.mxu0 %v661
    %1098 = vmatprep.subr.bf16.mxu0 %v658
    %1099 = vmatpush1.bf16.msra.mxu0 %v657
    %1100 = vmatprep.subr.bf16.mxu0 %v654
    %1101 = vmatpush1.bf16.msra.mxu0 %v653
    %1102 = vmatprep.subr.bf16.mxu0 0
    %1103 = vmatpush2.bf16.msra.mxu0 0
    %1104 = vmatprep.subr.bf16.mxu0 0
    %1105 = vmatpush2.bf16.msra.mxu0 0
    %1106 = vmatprep.subr.bf16.mxu0 0
    %1107 = vmatpush2.bf16.msra.mxu0 0
    %1108 = vmatprep.subr.bf16.mxu0 0
    %1109 = vmatpush2.bf16.msra.mxu0 0
    %1110 = vmatprep.subr.bf16.mxu0 0
    %1111 = vmatpush2.bf16.msra.mxu0 0
    %1112 = vmatprep.subr.bf16.mxu0 0
    %1113 = vmatpush2.bf16.msra.mxu0 0
    %1114 = vmatprep.subr.bf16.mxu0 0
    %1115 = vmatpush2.bf16.msra.mxu0 0
    %1116 = vmatprep.subr.bf16.mxu0 0
    %1117 = vmatpush2.bf16.msra.mxu0 0
    %1118 = vmatprep.mubr.bf16.mxu0 0
    %1119 = vmatmul.mubr.bf16.gmra.mxu0 %v1039
    %v1120 = vpop.f32.mrf.mxu0
    %v1121 = vadd.f32 0.0, %v1120
    %v1122 = vpop.f32.mrf.mxu0
    %v1123 = vadd.f32 0.0, %v1122
    %v1124 = vpop.f32.mrf.mxu0
    %v1125 = vpop.f32.mrf.mxu0
    %1126 = vdwg.mxu0
    %v1127 = vadd.f32 %v1041, %v1080
    %v1128 = vadd.f32 %v1042, %v1082
    %v1129 = vadd.f32 %v1043, %v1121
    %v1130 = vadd.f32 %v1044, %v1123
    %v1131 = vmul.f32 %v1127, 0.5
    %v1132 = vtanh.pop %v1131
    %v1133 = vmul.f32 %v1132, 0.5
    %v1134 = vadd.f32 %v1133, 0.5
    %v1135 = vmul.f32 %v1128, 0.5
    %v1136 = vtanh.pop %v1135
    %v1137 = vmul.f32 %v1136, 0.5
    %v1138 = vadd.f32 %v1137, 0.5
    %v1139 = vtanh.pop %v1129
    %v1140 = vmul.f32 %v1130, 0.5
    %v1141 = vtanh.pop %v1140
    %v1142 = vmul.f32 %v1141, 0.5
    %v1143 = vadd.f32 %v1142, 0.5
    %v1144 = vmul.f32 %v1138, %v1036
    %v1145 = vmul.f32 %v1134, %v1139
    %v1146 = vadd.f32 %v1144, %v1145
    %v1147 = vtanh.pop %v1146
    %v1148 = vmul.f32 %v1143, %v1147
    %v1149 = vpack.c.bf16 %v1148, %v1148
    %1150 = vst [vmem:[#allocation2 + $0xc] sm:$0xf] %v1149
    %v1151 = vld [vmem:[#allocation3 + $0x80] sm:$0xff]
    %v1152 = vld [vmem:[#allocation3 + $0x88] sm:$0xff]
    %v1153 = vld [vmem:[#allocation3 + $0x90] sm:$0xff]
    %v1154 = vld [vmem:[#allocation3 + $0x98] sm:$0xff]
    %1155 = vmatprep.subr.bf16.mxu0 %v680
    %1156 = vmatpush1.bf16.msra.mxu0 %v679
    %1157 = vmatprep.subr.bf16.mxu0 %v676
    %1158 = vmatpush1.bf16.msra.mxu0 %v675
    %1159 = vmatprep.subr.bf16.mxu0 %v672
    %1160 = vmatpush1.bf16.msra.mxu0 %v671
    %1161 = vmatprep.subr.bf16.mxu0 %v668
    %1162 = vmatpush1.bf16.msra.mxu0 %v667
    %1163 = vmatprep.subr.bf16.mxu0 %v664
    %1164 = vmatpush1.bf16.msra.mxu0 %v663
    %1165 = vmatprep.subr.bf16.mxu0 %v660
    %1166 = vmatpush1.bf16.msra.mxu0 %v659
    %1167 = vmatprep.subr.bf16.mxu0 %v656
    %1168 = vmatpush1.bf16.msra.mxu0 %v655
    %1169 = vmatprep.subr.bf16.mxu0 %v652
    %1170 = vmatpush1.bf16.msra.mxu0 %v651
    %1171 = vmatprep.subr.bf16.mxu0 0
    %1172 = vmatpush2.bf16.msra.mxu0 0
    %1173 = vmatprep.subr.bf16.mxu0 0
    %1174 = vmatpush2.bf16.msra.mxu0 0
    %1175 = vmatprep.subr.bf16.mxu0 0
    %1176 = vmatpush2.bf16.msra.mxu0 0
    %1177 = vmatprep.subr.bf16.mxu0 0
    %1178 = vmatpush2.bf16.msra.mxu0 0
    %1179 = vmatprep.subr.bf16.mxu0 0
    %1180 = vmatpush2.bf16.msra.mxu0 0
    %1181 = vmatprep.subr.bf16.mxu0 0
    %1182 = vmatpush2.bf16.msra.mxu0 0
    %1183 = vmatprep.subr.bf16.mxu0 0
    %1184 = vmatpush2.bf16.msra.mxu0 0
    %1185 = vmatprep.subr.bf16.mxu0 0
    %1186 = vmatpush2.bf16.msra.mxu0 0
    %1187 = vmatprep.mubr.bf16.mxu0 0
    %1188 = vmatmul.mubr.bf16.gmra.mxu0 %v1149
    %v1189 = vpop.f32.mrf.mxu0
    %v1190 = vadd.f32 0.0, %v1189
    %v1191 = vpop.f32.mrf.mxu0
    %v1192 = vadd.f32 0.0, %v1191
    %v1193 = vpop.f32.mrf.mxu0
    %v1194 = vpop.f32.mrf.mxu0
    %1195 = vdwg.mxu0
    %1196 = vmatprep.subr.bf16.mxu0 %v682
    %1197 = vmatpush1.bf16.msra.mxu0 %v681
    %1198 = vmatprep.subr.bf16.mxu0 %v678
    %1199 = vmatpush1.bf16.msra.mxu0 %v677
    %1200 = vmatprep.subr.bf16.mxu0 %v674
    %1201 = vmatpush1.bf16.msra.mxu0 %v673
    %1202 = vmatprep.subr.bf16.mxu0 %v670
    %1203 = vmatpush1.bf16.msra.mxu0 %v669
    %1204 = vmatprep.subr.bf16.mxu0 %v666
    %1205 = vmatpush1.bf16.msra.mxu0 %v665
    %1206 = vmatprep.subr.bf16.mxu0 %v662
    %1207 = vmatpush1.bf16.msra.mxu0 %v661
    %1208 = vmatprep.subr.bf16.mxu0 %v658
    %1209 = vmatpush1.bf16.msra.mxu0 %v657
    %1210 = vmatprep.subr.bf16.mxu0 %v654
    %1211 = vmatpush1.bf16.msra.mxu0 %v653
    %1212 = vmatprep.subr.bf16.mxu0 0
    %1213 = vmatpush2.bf16.msra.mxu0 0
    %1214 = vmatprep.subr.bf16.mxu0 0
    %1215 = vmatpush2.bf16.msra.mxu0 0
    %1216 = vmatprep.subr.bf16.mxu0 0
    %1217 = vmatpush2.bf16.msra.mxu0 0
    %1218 = vmatprep.subr.bf16.mxu0 0
    %1219 = vmatpush2.bf16.msra.mxu0 0
    %1220 = vmatprep.subr.bf16.mxu0 0
    %1221 = vmatpush2.bf16.msra.mxu0 0
    %1222 = vmatprep.subr.bf16.mxu0 0
    %1223 = vmatpush2.bf16.msra.mxu0 0
    %1224 = vmatprep.subr.bf16.mxu0 0
    %1225 = vmatpush2.bf16.msra.mxu0 0
    %1226 = vmatprep.subr.bf16.mxu0 0
    %1227 = vmatpush2.bf16.msra.mxu0 0
    %1228 = vmatprep.mubr.bf16.mxu0 0
    %1229 = vmatmul.mubr.bf16.gmra.mxu0 %v1149
    %v1230 = vpop.f32.mrf.mxu0
    %v1231 = vadd.f32 0.0, %v1230
    %v1232 = vpop.f32.mrf.mxu0
    %v1233 = vadd.f32 0.0, %v1232
    %v1234 = vpop.f32.mrf.mxu0
    %v1235 = vpop.f32.mrf.mxu0
    %1236 = vdwg.mxu0
    %v1237 = vadd.f32 %v1151, %v1190
    %v1238 = vadd.f32 %v1152, %v1192
    %v1239 = vadd.f32 %v1153, %v1231
    %v1240 = vadd.f32 %v1154, %v1233
    %v1241 = vmul.f32 %v1237, 0.5
    %v1242 = vtanh.pop %v1241
    %v1243 = vmul.f32 %v1242, 0.5
    %v1244 = vadd.f32 %v1243, 0.5
    %v1245 = vmul.f32 %v1238, 0.5
    %v1246 = vtanh.pop %v1245
    %v1247 = vmul.f32 %v1246, 0.5
    %v1248 = vadd.f32 %v1247, 0.5
    %v1249 = vtanh.pop %v1239
    %v1250 = vmul.f32 %v1240, 0.5
    %v1251 = vtanh.pop %v1250
    %v1252 = vmul.f32 %v1251, 0.5
    %v1253 = vadd.f32 %v1252, 0.5
    %v1254 = vmul.f32 %v1248, %v1146
    %v1255 = vmul.f32 %v1244, %v1249
    %v1256 = vadd.f32 %v1254, %v1255
    %v1257 = vtanh.pop %v1256
    %v1258 = vmul.f32 %v1253, %v1257
    %v1259 = vpack.c.bf16 %v1258, %v1258
    %1260 = vst [vmem:[#allocation2 + $0x10] sm:$0xf] %v1259
    %v1261 = vld [vmem:[#allocation3 + $0xa0] sm:$0xff]
    %v1262 = vld [vmem:[#allocation3 + $0xa8] sm:$0xff]
    %v1263 = vld [vmem:[#allocation3 + $0xb0] sm:$0xff]
    %v1264 = vld [vmem:[#allocation3 + $0xb8] sm:$0xff]
    %1265 = vmatprep.subr.bf16.mxu0 %v680
    %1266 = vmatpush1.bf16.msra.mxu0 %v679
    %1267 = vmatprep.subr.bf16.mxu0 %v676
    %1268 = vmatpush1.bf16.msra.mxu0 %v675
    %1269 = vmatprep.subr.bf16.mxu0 %v672
    %1270 = vmatpush1.bf16.msra.mxu0 %v671
    %1271 = vmatprep.subr.bf16.mxu0 %v668
    %1272 = vmatpush1.bf16.msra.mxu0 %v667
    %1273 = vmatprep.subr.bf16.mxu0 %v664
    %1274 = vmatpush1.bf16.msra.mxu0 %v663
    %1275 = vmatprep.subr.bf16.mxu0 %v660
    %1276 = vmatpush1.bf16.msra.mxu0 %v659
    %1277 = vmatprep.subr.bf16.mxu0 %v656
    %1278 = vmatpush1.bf16.msra.mxu0 %v655
    %1279 = vmatprep.subr.bf16.mxu0 %v652
    %1280 = vmatpush1.bf16.msra.mxu0 %v651
    %1281 = vmatprep.subr.bf16.mxu0 0
    %1282 = vmatpush2.bf16.msra.mxu0 0
    %1283 = vmatprep.subr.bf16.mxu0 0
    %1284 = vmatpush2.bf16.msra.mxu0 0
    %1285 = vmatprep.subr.bf16.mxu0 0
    %1286 = vmatpush2.bf16.msra.mxu0 0
    %1287 = vmatprep.subr.bf16.mxu0 0
    %1288 = vmatpush2.bf16.msra.mxu0 0
    %1289 = vmatprep.subr.bf16.mxu0 0
    %1290 = vmatpush2.bf16.msra.mxu0 0
    %1291 = vmatprep.subr.bf16.mxu0 0
    %1292 = vmatpush2.bf16.msra.mxu0 0
    %1293 = vmatprep.subr.bf16.mxu0 0
    %1294 = vmatpush2.bf16.msra.mxu0 0
    %1295 = vmatprep.subr.bf16.mxu0 0
    %1296 = vmatpush2.bf16.msra.mxu0 0
    %1297 = vmatprep.mubr.bf16.mxu0 0
    %1298 = vmatmul.mubr.bf16.gmra.mxu0 %v1259
    %v1299 = vpop.f32.mrf.mxu0
    %v1300 = vadd.f32 0.0, %v1299
    %v1301 = vpop.f32.mrf.mxu0
    %v1302 = vadd.f32 0.0, %v1301
    %v1303 = vpop.f32.mrf.mxu0
    %v1304 = vpop.f32.mrf.mxu0
    %1305 = vdwg.mxu0
    %1306 = vmatprep.subr.bf16.mxu0 %v682
    %1307 = vmatpush1.bf16.msra.mxu0 %v681
    %1308 = vmatprep.subr.bf16.mxu0 %v678
    %1309 = vmatpush1.bf16.msra.mxu0 %v677
    %1310 = vmatprep.subr.bf16.mxu0 %v674
    %1311 = vmatpush1.bf16.msra.mxu0 %v673
    %1312 = vmatprep.subr.bf16.mxu0 %v670
    %1313 = vmatpush1.bf16.msra.mxu0 %v669
    %1314 = vmatprep.subr.bf16.mxu0 %v666
    %1315 = vmatpush1.bf16.msra.mxu0 %v665
    %1316 = vmatprep.subr.bf16.mxu0 %v662
    %1317 = vmatpush1.bf16.msra.mxu0 %v661
    %1318 = vmatprep.subr.bf16.mxu0 %v658
    %1319 = vmatpush1.bf16.msra.mxu0 %v657
    %1320 = vmatprep.subr.bf16.mxu0 %v654
    %1321 = vmatpush1.bf16.msra.mxu0 %v653
    %1322 = vmatprep.subr.bf16.mxu0 0
    %1323 = vmatpush2.bf16.msra.mxu0 0
    %1324 = vmatprep.subr.bf16.mxu0 0
    %1325 = vmatpush2.bf16.msra.mxu0 0
    %1326 = vmatprep.subr.bf16.mxu0 0
    %1327 = vmatpush2.bf16.msra.mxu0 0
    %1328 = vmatprep.subr.bf16.mxu0 0
    %1329 = vmatpush2.bf16.msra.mxu0 0
    %1330 = vmatprep.subr.bf16.mxu0 0
    %1331 = vmatpush2.bf16.msra.mxu0 0
    %1332 = vmatprep.subr.bf16.mxu0 0
    %1333 = vmatpush2.bf16.msra.mxu0 0
    %1334 = vmatprep.subr.bf16.mxu0 0
    %1335 = vmatpush2.bf16.msra.mxu0 0
    %1336 = vmatprep.subr.bf16.mxu0 0
    %1337 = vmatpush2.bf16.msra.mxu0 0
    %1338 = vmatprep.mubr.bf16.mxu0 0
    %1339 = vmatmul.mubr.bf16.gmra.mxu0 %v1259
    %v1340 = vpop.f32.mrf.mxu0
    %v1341 = vadd.f32 0.0, %v1340
    %v1342 = vpop.f32.mrf.mxu0
    %v1343 = vadd.f32 0.0, %v1342
    %v1344 = vpop.f32.mrf.mxu0
    %v1345 = vpop.f32.mrf.mxu0
    %1346 = vdwg.mxu0
    %v1347 = vadd.f32 %v1261, %v1300
    %v1348 = vadd.f32 %v1262, %v1302
    %v1349 = vadd.f32 %v1263, %v1341
    %v1350 = vadd.f32 %v1264, %v1343
    %v1351 = vmul.f32 %v1347, 0.5
    %v1352 = vtanh.pop %v1351
    %v1353 = vmul.f32 %v1352, 0.5
    %v1354 = vadd.f32 %v1353, 0.5
    %v1355 = vmul.f32 %v1348, 0.5
    %v1356 = vtanh.pop %v1355
    %v1357 = vmul.f32 %v1356, 0.5
    %v1358 = vadd.f32 %v1357, 0.5
    %v1359 = vtanh.pop %v1349
    %v1360 = vmul.f32 %v1350, 0.5
    %v1361 = vtanh.pop %v1360
    %v1362 = vmul.f32 %v1361, 0.5
    %v1363 = vadd.f32 %v1362, 0.5
    %v1364 = vmul.f32 %v1358, %v1256
    %v1365 = vmul.f32 %v1354, %v1359
    %v1366 = vadd.f32 %v1364, %v1365
    %v1367 = vtanh.pop %v1366
    %v1368 = vmul.f32 %v1363, %v1367
    %v1369 = vpack.c.bf16 %v1368, %v1368
    %1370 = vst [vmem:[#allocation2 + $0x14] sm:$0xf] %v1369
    %v1371 = vld [vmem:[#allocation3 + $0xc0] sm:$0xff]
    %v1372 = vld [vmem:[#allocation3 + $0xc8] sm:$0xff]
    %v1373 = vld [vmem:[#allocation3 + $0xd0] sm:$0xff]
    %v1374 = vld [vmem:[#allocation3 + $0xd8] sm:$0xff]
    %1375 = vmatprep.subr.bf16.mxu0 %v680
    %1376 = vmatpush1.bf16.msra.mxu0 %v679
    %1377 = vmatprep.subr.bf16.mxu0 %v676
    %1378 = vmatpush1.bf16.msra.mxu0 %v675
    %1379 = vmatprep.subr.bf16.mxu0 %v672
    %1380 = vmatpush1.bf16.msra.mxu0 %v671
    %1381 = vmatprep.subr.bf16.mxu0 %v668
    %1382 = vmatpush1.bf16.msra.mxu0 %v667
    %1383 = vmatprep.subr.bf16.mxu0 %v664
    %1384 = vmatpush1.bf16.msra.mxu0 %v663
    %1385 = vmatprep.subr.bf16.mxu0 %v660
    %1386 = vmatpush1.bf16.msra.mxu0 %v659
    %1387 = vmatprep.subr.bf16.mxu0 %v656
    %1388 = vmatpush1.bf16.msra.mxu0 %v655
    %1389 = vmatprep.subr.bf16.mxu0 %v652
    %1390 = vmatpush1.bf16.msra.mxu0 %v651
    %1391 = vmatprep.subr.bf16.mxu0 0
    %1392 = vmatpush2.bf16.msra.mxu0 0
    %1393 = vmatprep.subr.bf16.mxu0 0
    %1394 = vmatpush2.bf16.msra.mxu0 0
    %1395 = vmatprep.subr.bf16.mxu0 0
    %1396 = vmatpush2.bf16.msra.mxu0 0
    %1397 = vmatprep.subr.bf16.mxu0 0
    %1398 = vmatpush2.bf16.msra.mxu0 0
    %1399 = vmatprep.subr.bf16.mxu0 0
    %1400 = vmatpush2.bf16.msra.mxu0 0
    %1401 = vmatprep.subr.bf16.mxu0 0
    %1402 = vmatpush2.bf16.msra.mxu0 0
    %1403 = vmatprep.subr.bf16.mxu0 0
    %1404 = vmatpush2.bf16.msra.mxu0 0
    %1405 = vmatprep.subr.bf16.mxu0 0
    %1406 = vmatpush2.bf16.msra.mxu0 0
    %1407 = vmatprep.mubr.bf16.mxu0 0
    %1408 = vmatmul.mubr.bf16.gmra.mxu0 %v1369
    %v1409 = vpop.f32.mrf.mxu0
    %v1410 = vadd.f32 0.0, %v1409
    %v1411 = vpop.f32.mrf.mxu0
    %v1412 = vadd.f32 0.0, %v1411
    %v1413 = vpop.f32.mrf.mxu0
    %v1414 = vpop.f32.mrf.mxu0
    %1415 = vdwg.mxu0
    %1416 = vmatprep.subr.bf16.mxu0 %v682
    %1417 = vmatpush1.bf16.msra.mxu0 %v681
    %1418 = vmatprep.subr.bf16.mxu0 %v678
    %1419 = vmatpush1.bf16.msra.mxu0 %v677
    %1420 = vmatprep.subr.bf16.mxu0 %v674
    %1421 = vmatpush1.bf16.msra.mxu0 %v673
    %1422 = vmatprep.subr.bf16.mxu0 %v670
    %1423 = vmatpush1.bf16.msra.mxu0 %v669
    %1424 = vmatprep.subr.bf16.mxu0 %v666
    %1425 = vmatpush1.bf16.msra.mxu0 %v665
    %1426 = vmatprep.subr.bf16.mxu0 %v662
    %1427 = vmatpush1.bf16.msra.mxu0 %v661
    %1428 = vmatprep.subr.bf16.mxu0 %v658
    %1429 = vmatpush1.bf16.msra.mxu0 %v657
    %1430 = vmatprep.subr.bf16.mxu0 %v654
    %1431 = vmatpush1.bf16.msra.mxu0 %v653
    %1432 = vmatprep.subr.bf16.mxu0 0
    %1433 = vmatpush2.bf16.msra.mxu0 0
    %1434 = vmatprep.subr.bf16.mxu0 0
    %1435 = vmatpush2.bf16.msra.mxu0 0
    %1436 = vmatprep.subr.bf16.mxu0 0
    %1437 = vmatpush2.bf16.msra.mxu0 0
    %1438 = vmatprep.subr.bf16.mxu0 0
    %1439 = vmatpush2.bf16.msra.mxu0 0
    %1440 = vmatprep.subr.bf16.mxu0 0
    %1441 = vmatpush2.bf16.msra.mxu0 0
    %1442 = vmatprep.subr.bf16.mxu0 0
    %1443 = vmatpush2.bf16.msra.mxu0 0
    %1444 = vmatprep.subr.bf16.mxu0 0
    %1445 = vmatpush2.bf16.msra.mxu0 0
    %1446 = vmatprep.subr.bf16.mxu0 0
    %1447 = vmatpush2.bf16.msra.mxu0 0
    %1448 = vmatprep.mubr.bf16.mxu0 0
    %1449 = vmatmul.mubr.bf16.gmra.mxu0 %v1369
    %v1450 = vpop.f32.mrf.mxu0
    %v1451 = vadd.f32 0.0, %v1450
    %v1452 = vpop.f32.mrf.mxu0
    %v1453 = vadd.f32 0.0, %v1452
    %v1454 = vpop.f32.mrf.mxu0
    %v1455 = vpop.f32.mrf.mxu0
    %1456 = vdwg.mxu0
    %v1457 = vadd.f32 %v1371, %v1410
    %v1458 = vadd.f32 %v1372, %v1412
    %v1459 = vadd.f32 %v1373, %v1451
    %v1460 = vadd.f32 %v1374, %v1453
    %v1461 = vmul.f32 %v1457, 0.5
    %v1462 = vtanh.pop %v1461
    %v1463 = vmul.f32 %v1462, 0.5
    %v1464 = vadd.f32 %v1463, 0.5
    %v1465 = vmul.f32 %v1458, 0.5
    %v1466 = vtanh.pop %v1465
    %v1467 = vmul.f32 %v1466, 0.5
    %v1468 = vadd.f32 %v1467, 0.5
    %v1469 = vtanh.pop %v1459
    %v1470 = vmul.f32 %v1460, 0.5
    %v1471 = vtanh.pop %v1470
    %v1472 = vmul.f32 %v1471, 0.5
    %v1473 = vadd.f32 %v1472, 0.5
    %v1474 = vmul.f32 %v1468, %v1366
    %v1475 = vmul.f32 %v1464, %v1469
    %v1476 = vadd.f32 %v1474, %v1475
    %v1477 = vtanh.pop %v1476
    %v1478 = vmul.f32 %v1473, %v1477
    %v1479 = vpack.c.bf16 %v1478, %v1478
    %1480 = vst [vmem:[#allocation2 + $0x18] sm:$0xf] %v1479
    %v1481 = vld [vmem:[#allocation3 + $0xe0] sm:$0xff]
    %v1482 = vld [vmem:[#allocation3 + $0xe8] sm:$0xff]
    %v1483 = vld [vmem:[#allocation3 + $0xf0] sm:$0xff]
    %v1484 = vld [vmem:[#allocation3 + $0xf8] sm:$0xff]
    %1485 = vmatprep.subr.bf16.mxu0 %v680
    %1486 = vmatpush1.bf16.msra.mxu0 %v679
    %1487 = vmatprep.subr.bf16.mxu0 %v676
    %1488 = vmatpush1.bf16.msra.mxu0 %v675
    %1489 = vmatprep.subr.bf16.mxu0 %v672
    %1490 = vmatpush1.bf16.msra.mxu0 %v671
    %1491 = vmatprep.subr.bf16.mxu0 %v668
    %1492 = vmatpush1.bf16.msra.mxu0 %v667
    %1493 = vmatprep.subr.bf16.mxu0 %v664
    %1494 = vmatpush1.bf16.msra.mxu0 %v663
    %1495 = vmatprep.subr.bf16.mxu0 %v660
    %1496 = vmatpush1.bf16.msra.mxu0 %v659
    %1497 = vmatprep.subr.bf16.mxu0 %v656
    %1498 = vmatpush1.bf16.msra.mxu0 %v655
    %1499 = vmatprep.subr.bf16.mxu0 %v652
    %1500 = vmatpush1.bf16.msra.mxu0 %v651
    %1501 = vmatprep.subr.bf16.mxu0 0
    %1502 = vmatpush2.bf16.msra.mxu0 0
    %1503 = vmatprep.subr.bf16.mxu0 0
    %1504 = vmatpush2.bf16.msra.mxu0 0
    %1505 = vmatprep.subr.bf16.mxu0 0
    %1506 = vmatpush2.bf16.msra.mxu0 0
    %1507 = vmatprep.subr.bf16.mxu0 0
    %1508 = vmatpush2.bf16.msra.mxu0 0
    %1509 = vmatprep.subr.bf16.mxu0 0
    %1510 = vmatpush2.bf16.msra.mxu0 0
    %1511 = vmatprep.subr.bf16.mxu0 0
    %1512 = vmatpush2.bf16.msra.mxu0 0
    %1513 = vmatprep.subr.bf16.mxu0 0
    %1514 = vmatpush2.bf16.msra.mxu0 0
    %1515 = vmatprep.subr.bf16.mxu0 0
    %1516 = vmatpush2.bf16.msra.mxu0 0
    %1517 = vmatprep.mubr.bf16.mxu0 0
    %1518 = vmatmul.mubr.bf16.gmra.mxu0 %v1479
    %v1519 = vpop.f32.mrf.mxu0
    %v1520 = vadd.f32 0.0, %v1519
    %v1521 = vpop.f32.mrf.mxu0
    %v1522 = vadd.f32 0.0, %v1521
    %v1523 = vpop.f32.mrf.mxu0
    %v1524 = vpop.f32.mrf.mxu0
    %1525 = vdwg.mxu0
    %1526 = vmatprep.subr.bf16.mxu0 %v682
    %1527 = vmatpush1.bf16.msra.mxu0 %v681
    %1528 = vmatprep.subr.bf16.mxu0 %v678
    %1529 = vmatpush1.bf16.msra.mxu0 %v677
    %1530 = vmatprep.subr.bf16.mxu0 %v674
    %1531 = vmatpush1.bf16.msra.mxu0 %v673
    %1532 = vmatprep.subr.bf16.mxu0 %v670
    %1533 = vmatpush1.bf16.msra.mxu0 %v669
    %1534 = vmatprep.subr.bf16.mxu0 %v666
    %1535 = vmatpush1.bf16.msra.mxu0 %v665
    %1536 = vmatprep.subr.bf16.mxu0 %v662
    %1537 = vmatpush1.bf16.msra.mxu0 %v661
    %1538 = vmatprep.subr.bf16.mxu0 %v658
    %1539 = vmatpush1.bf16.msra.mxu0 %v657
    %1540 = vmatprep.subr.bf16.mxu0 %v654
    %1541 = vmatpush1.bf16.msra.mxu0 %v653
    %1542 = vmatprep.subr.bf16.mxu0 0
    %1543 = vmatpush2.bf16.msra.mxu0 0
    %1544 = vmatprep.subr.bf16.mxu0 0
    %1545 = vmatpush2.bf16.msra.mxu0 0
    %1546 = vmatprep.subr.bf16.mxu0 0
    %1547 = vmatpush2.bf16.msra.mxu0 0
    %1548 = vmatprep.subr.bf16.mxu0 0
    %1549 = vmatpush2.bf16.msra.mxu0 0
    %1550 = vmatprep.subr.bf16.mxu0 0
    %1551 = vmatpush2.bf16.msra.mxu0 0
    %1552 = vmatprep.subr.bf16.mxu0 0
    %1553 = vmatpush2.bf16.msra.mxu0 0
    %1554 = vmatprep.subr.bf16.mxu0 0
    %1555 = vmatpush2.bf16.msra.mxu0 0
    %1556 = vmatprep.subr.bf16.mxu0 0
    %1557 = vmatpush2.bf16.msra.mxu0 0
    %1558 = vmatprep.mubr.bf16.mxu0 0
    %1559 = vmatmul.mubr.bf16.gmra.mxu0 %v1479
    %v1560 = vpop.f32.mrf.mxu0
    %v1561 = vadd.f32 0.0, %v1560
    %v1562 = vpop.f32.mrf.mxu0
    %v1563 = vadd.f32 0.0, %v1562
    %v1564 = vpop.f32.mrf.mxu0
    %v1565 = vpop.f32.mrf.mxu0
    %1566 = vdwg.mxu0
    %v1567 = vadd.f32 %v1481, %v1520
    %v1568 = vadd.f32 %v1482, %v1522
    %v1569 = vadd.f32 %v1483, %v1561
    %v1570 = vadd.f32 %v1484, %v1563
    %v1571 = vmul.f32 %v1567, 0.5
    %v1572 = vtanh.pop %v1571
    %v1573 = vmul.f32 %v1572, 0.5
    %v1574 = vadd.f32 %v1573, 0.5
    %v1575 = vmul.f32 %v1568, 0.5
    %v1576 = vtanh.pop %v1575
    %v1577 = vmul.f32 %v1576, 0.5
    %v1578 = vadd.f32 %v1577, 0.5
    %v1579 = vtanh.pop %v1569
    %v1580 = vmul.f32 %v1570, 0.5
    %v1581 = vtanh.pop %v1580
    %v1582 = vmul.f32 %v1581, 0.5
    %v1583 = vadd.f32 %v1582, 0.5
    %v1584 = vmul.f32 %v1578, %v1476
    %v1585 = vmul.f32 %v1574, %v1579
    %v1586 = vadd.f32 %v1584, %v1585
    %v1587 = vtanh.pop %v1586
    %v1588 = vmul.f32 %v1583, %v1587
    %v1589 = vpack.c.bf16 %v1588, %v1588
    %1590 = vst [vmem:[#allocation2 + $0x1c] sm:$0xf] %v1589
    %1591 = vst [vmem:[%s7] sm:$0xff] %v1588
    %1592 = vst [vmem:[%s8] sm:$0xff] %v1586
    %v1593 = vld [vmem:[#allocation2] sm:$0xf]
    %v1594 = vld [vmem:[#allocation2 + $0x4] sm:$0xf]
    %v1595 = vld [vmem:[#allocation2 + $0x8] sm:$0xf]
    %v1596 = vld [vmem:[#allocation2 + $0xc] sm:$0xf]
    %v1597 = vld [vmem:[#allocation2 + $0x10] sm:$0xf]
    %v1598 = vld [vmem:[#allocation2 + $0x14] sm:$0xf]
    %v1599 = vld [vmem:[#allocation2 + $0x18] sm:$0xf]
    %v1600 = vld [vmem:[#allocation2 + $0x1c] sm:$0xf]
    %v1601 = vld [vmem:[#allocation6] sm:$0xff]
    %v1602 = vld [vmem:[#allocation6 + $0x8] sm:$0xff]
    %v1603 = vld [vmem:[#allocation6 + $0x10] sm:$0xff]
    %v1604 = vld [vmem:[#allocation6 + $0x18] sm:$0xff]
    %v1605 = vld [vmem:[#allocation6 + $0x20] sm:$0xff]
    %v1606 = vld [vmem:[#allocation6 + $0x28] sm:$0xff]
    %v1607 = vld [vmem:[#allocation6 + $0x30] sm:$0xff]
    %v1608 = vld [vmem:[#allocation6 + $0x38] sm:$0xff]
    %v1609 = vld [vmem:[#allocation6 + $0x40] sm:$0xff]
    %v1610 = vld [vmem:[#allocation6 + $0x48] sm:$0xff]
    %v1611 = vld [vmem:[#allocation6 + $0x50] sm:$0xff]
    %v1612 = vld [vmem:[#allocation6 + $0x58] sm:$0xff]
    %v1613 = vld [vmem:[#allocation6 + $0x60] sm:$0xff]
    %v1614 = vld [vmem:[#allocation6 + $0x68] sm:$0xff]
    %v1615 = vld [vmem:[#allocation6 + $0x70] sm:$0xff]
    %v1616 = vld [vmem:[#allocation6 + $0x78] sm:$0xff]
    %v1617 = vld [vmem:[#allocation6 + $0x80] sm:$0xff]
    %v1618 = vld [vmem:[#allocation6 + $0x88] sm:$0xff]
    %v1619 = vld [vmem:[#allocation6 + $0x90] sm:$0xff]
    %v1620 = vld [vmem:[#allocation6 + $0x98] sm:$0xff]
    %v1621 = vld [vmem:[#allocation6 + $0xa0] sm:$0xff]
    %v1622 = vld [vmem:[#allocation6 + $0xa8] sm:$0xff]
    %v1623 = vld [vmem:[#allocation6 + $0xb0] sm:$0xff]
    %v1624 = vld [vmem:[#allocation6 + $0xb8] sm:$0xff]
    %v1625 = vld [vmem:[#allocation6 + $0xc0] sm:$0xff]
    %v1626 = vld [vmem:[#allocation6 + $0xc8] sm:$0xff]
    %v1627 = vld [vmem:[#allocation6 + $0xd0] sm:$0xff]
    %v1628 = vld [vmem:[#allocation6 + $0xd8] sm:$0xff]
    %v1629 = vld [vmem:[#allocation6 + $0xe0] sm:$0xff]
    %v1630 = vld [vmem:[#allocation6 + $0xe8] sm:$0xff]
    %v1631 = vld [vmem:[#allocation6 + $0xf0] sm:$0xff]
    %v1632 = vld [vmem:[#allocation6 + $0xf8] sm:$0xff]
    %v1633 = vld [vmem:[%s6] sm:$0xf]
    %v1635 = vlaneseq
    %v1636 = vshrl.u32 %v1635, 7
    %v1637 = vsub.s32 0, %v1636
    %v1638 = vrot.slane %v1633, %v1637
    %v1639 = vlaneseq
    %v1640 = vshrl.u32 %v1639, 7
    %v1641 = vsub.s32 1, %v1640
    %v1642 = vrot.slane %v1633, %v1641
    %v1643 = vlaneseq
    %v1644 = vshrl.u32 %v1643, 7
    %v1645 = vsub.s32 2, %v1644
    %v1646 = vrot.slane %v1633, %v1645
    %v1647 = vlaneseq
    %v1648 = vshrl.u32 %v1647, 7
    %v1649 = vsub.s32 3, %v1648
    %v1650 = vrot.slane %v1633, %v1649
    %v1663 = vunpack.c.l.b16 %v1593
    %v1664 = vunpack.c.l.b16 %v1594
    %v1665 = vunpack.c.l.b16 %v1595
    %v1666 = vunpack.c.l.b16 %v1596
    %v1667 = vunpack.c.l.b16 %v1597
    %v1668 = vunpack.c.l.b16 %v1598
    %v1669 = vunpack.c.l.b16 %v1599
    %v1670 = vunpack.c.l.b16 %v1600
    %v1671 = vpack.c.b16 %v1664, %v1663
    %v1672 = vpack.c.b16 %v1666, %v1665
    %v1673 = vpack.c.b16 %v1668, %v1667
    %v1674 = vpack.c.b16 %v1670, %v1669
    %v1711 = vunpack.c.l.b16 %v1601
    %v1712 = vunpack.c.h.b16 %v1601
    %v1713 = vunpack.c.l.b16 %v1602
    %v1714 = vunpack.c.h.b16 %v1602
    %v1715 = vunpack.c.l.b16 %v1603
    %v1716 = vunpack.c.h.b16 %v1603
    %v1717 = vunpack.c.l.b16 %v1604
    %v1718 = vunpack.c.h.b16 %v1604
    %v1719 = vunpack.c.l.b16 %v1605
    %v1720 = vunpack.c.h.b16 %v1605
    %v1721 = vunpack.c.l.b16 %v1606
    %v1722 = vunpack.c.h.b16 %v1606
    %v1723 = vunpack.c.l.b16 %v1607
    %v1724 = vunpack.c.h.b16 %v1607
    %v1725 = vunpack.c.l.b16 %v1608
    %v1726 = vunpack.c.h.b16 %v1608
    %v1727 = vunpack.c.l.b16 %v1609
    %v1728 = vunpack.c.h.b16 %v1609
    %v1729 = vunpack.c.l.b16 %v1610
    %v1730 = vunpack.c.h.b16 %v1610
    %v1731 = vunpack.c.l.b16 %v1611
    %v1732 = vunpack.c.h.b16 %v1611
    %v1733 = vunpack.c.l.b16 %v1612
    %v1734 = vunpack.c.h.b16 %v1612
    %v1735 = vunpack.c.l.b16 %v1613
    %v1736 = vunpack.c.h.b16 %v1613
    %v1737 = vunpack.c.l.b16 %v1614
    %v1738 = vunpack.c.h.b16 %v1614
    %v1739 = vunpack.c.l.b16 %v1615
    %v1740 = vunpack.c.h.b16 %v1615
    %v1741 = vunpack.c.l.b16 %v1616
    %v1742 = vunpack.c.h.b16 %v1616
    %v1743 = vunpack.c.l.b16 %v1617
    %v1744 = vunpack.c.h.b16 %v1617
    %v1745 = vunpack.c.l.b16 %v1618
    %v1746 = vunpack.c.h.b16 %v1618
    %v1747 = vunpack.c.l.b16 %v1619
    %v1748 = vunpack.c.h.b16 %v1619
    %v1749 = vunpack.c.l.b16 %v1620
    %v1750 = vunpack.c.h.b16 %v1620
    %v1751 = vunpack.c.l.b16 %v1621
    %v1752 = vunpack.c.h.b16 %v1621
    %v1753 = vunpack.c.l.b16 %v1622
    %v1754 = vunpack.c.h.b16 %v1622
    %v1755 = vunpack.c.l.b16 %v1623
    %v1756 = vunpack.c.h.b16 %v1623
    %v1757 = vunpack.c.l.b16 %v1624
    %v1758 = vunpack.c.h.b16 %v1624
    %v1759 = vunpack.c.l.b16 %v1625
    %v1760 = vunpack.c.h.b16 %v1625
    %v1761 = vunpack.c.l.b16 %v1626
    %v1762 = vunpack.c.h.b16 %v1626
    %v1763 = vunpack.c.l.b16 %v1627
    %v1764 = vunpack.c.h.b16 %v1627
    %v1765 = vunpack.c.l.b16 %v1628
    %v1766 = vunpack.c.h.b16 %v1628
    %v1767 = vunpack.c.l.b16 %v1629
    %v1768 = vunpack.c.h.b16 %v1629
    %v1769 = vunpack.c.l.b16 %v1630
    %v1770 = vunpack.c.h.b16 %v1630
    %v1771 = vunpack.c.l.b16 %v1631
    %v1772 = vunpack.c.h.b16 %v1631
    %v1773 = vunpack.c.l.b16 %v1632
    %v1774 = vunpack.c.h.b16 %v1632
    %v1775 = vpack.c.b16 %v1715, %v1711
    %v1776 = vpack.c.b16 %v1716, %v1712
    %v1777 = vpack.c.b16 %v1717, %v1713
    %v1778 = vpack.c.b16 %v1718, %v1714
    %v1779 = vpack.c.b16 %v1723, %v1719
    %v1780 = vpack.c.b16 %v1724, %v1720
    %v1781 = vpack.c.b16 %v1725, %v1721
    %v1782 = vpack.c.b16 %v1726, %v1722
    %v1783 = vpack.c.b16 %v1731, %v1727
    %v1784 = vpack.c.b16 %v1732, %v1728
    %v1785 = vpack.c.b16 %v1733, %v1729
    %v1786 = vpack.c.b16 %v1734, %v1730
    %v1787 = vpack.c.b16 %v1739, %v1735
    %v1788 = vpack.c.b16 %v1740, %v1736
    %v1789 = vpack.c.b16 %v1741, %v1737
    %v1790 = vpack.c.b16 %v1742, %v1738
    %v1791 = vpack.c.b16 %v1747, %v1743
    %v1792 = vpack.c.b16 %v1748, %v1744
    %v1793 = vpack.c.b16 %v1749, %v1745
    %v1794 = vpack.c.b16 %v1750, %v1746
    %v1795 = vpack.c.b16 %v1755, %v1751
    %v1796 = vpack.c.b16 %v1756, %v1752
    %v1797 = vpack.c.b16 %v1757, %v1753
    %v1798 = vpack.c.b16 %v1758, %v1754
    %v1799 = vpack.c.b16 %v1763, %v1759
    %v1800 = vpack.c.b16 %v1764, %v1760
    %v1801 = vpack.c.b16 %v1765, %v1761
    %v1802 = vpack.c.b16 %v1766, %v1762
    %v1803 = vpack.c.b16 %v1771, %v1767
    %v1804 = vpack.c.b16 %v1772, %v1768
    %v1805 = vpack.c.b16 %v1773, %v1769
    %v1806 = vpack.c.b16 %v1774, %v1770
    %1839 = vmatprep.subr.bf16.mxu0 %v1804
    %1840 = vmatpush1.bf16.msra.mxu0 %v1803
    %1841 = vmatprep.subr.bf16.mxu0 %v1800
    %1842 = vmatpush1.bf16.msra.mxu0 %v1799
    %1843 = vmatprep.subr.bf16.mxu0 %v1796
    %1844 = vmatpush1.bf16.msra.mxu0 %v1795
    %1845 = vmatprep.subr.bf16.mxu0 %v1792
    %1846 = vmatpush1.bf16.msra.mxu0 %v1791
    %1847 = vmatprep.subr.bf16.mxu0 %v1788
    %1848 = vmatpush1.bf16.msra.mxu0 %v1787
    %1849 = vmatprep.subr.bf16.mxu0 %v1784
    %1850 = vmatpush1.bf16.msra.mxu0 %v1783
    %1851 = vmatprep.subr.bf16.mxu0 %v1780
    %1852 = vmatpush1.bf16.msra.mxu0 %v1779
    %1853 = vmatprep.subr.bf16.mxu0 %v1776
    %1854 = vmatpush1.bf16.msra.mxu0 %v1775
    %1855 = vmatprep.subr.bf16.mxu0 0
    %1856 = vmatpush2.bf16.msra.mxu0 0
    %1857 = vmatprep.subr.bf16.mxu0 0
    %1858 = vmatpush2.bf16.msra.mxu0 0
    %1859 = vmatprep.subr.bf16.mxu0 0
    %1860 = vmatpush2.bf16.msra.mxu0 0
    %1861 = vmatprep.subr.bf16.mxu0 0
    %1862 = vmatpush2.bf16.msra.mxu0 0
    %1863 = vmatprep.subr.bf16.mxu0 0
    %1864 = vmatpush2.bf16.msra.mxu0 0
    %1865 = vmatprep.subr.bf16.mxu0 0
    %1866 = vmatpush2.bf16.msra.mxu0 0
    %1867 = vmatprep.subr.bf16.mxu0 0
    %1868 = vmatpush2.bf16.msra.mxu0 0
    %1869 = vmatprep.subr.bf16.mxu0 0
    %1870 = vmatpush2.bf16.msra.mxu0 0
    %1871 = vmatprep.mubr.bf16.mxu0 0
    %1872 = vmatmul.mubr.bf16.gmra.mxu0 %v1671
    %v1873 = vpop.f32.mrf.mxu0
    %v1874 = vadd.f32 %v1638, %v1873
    %v1875 = vpop.f32.mrf.mxu0
    %v1876 = vadd.f32 %v1642, %v1875
    %v1877 = vpop.f32.mrf.mxu0
    %v1878 = vadd.f32 %v1638, %v1877
    %v1879 = vpop.f32.mrf.mxu0
    %v1880 = vadd.f32 %v1642, %v1879
    %1881 = vmatprep.mubr.bf16.mxu0 0
    %1882 = vmatmul.mubr.bf16.gmra.mxu0 %v1672
    %v1883 = vpop.f32.mrf.mxu0
    %v1884 = vadd.f32 %v1638, %v1883
    %v1885 = vpop.f32.mrf.mxu0
    %v1886 = vadd.f32 %v1642, %v1885
    %v1887 = vpop.f32.mrf.mxu0
    %v1888 = vadd.f32 %v1638, %v1887
    %v1889 = vpop.f32.mrf.mxu0
    %v1890 = vadd.f32 %v1642, %v1889
    %1891 = vmatprep.mubr.bf16.mxu0 0
    %1892 = vmatmul.mubr.bf16.gmra.mxu0 %v1673
    %v1893 = vpop.f32.mrf.mxu0
    %v1894 = vadd.f32 %v1638, %v1893
    %v1895 = vpop.f32.mrf.mxu0
    %v1896 = vadd.f32 %v1642, %v1895
    %v1897 = vpop.f32.mrf.mxu0
    %v1898 = vadd.f32 %v1638, %v1897
    %v1899 = vpop.f32.mrf.mxu0
    %v1900 = vadd.f32 %v1642, %v1899
    %1901 = vmatprep.mubr.bf16.mxu0 0
    %1902 = vmatmul.mubr.bf16.gmra.mxu0 %v1674
    %v1903 = vpop.f32.mrf.mxu0
    %v1904 = vadd.f32 %v1638, %v1903
    %v1905 = vpop.f32.mrf.mxu0
    %v1906 = vadd.f32 %v1642, %v1905
    %v1907 = vpop.f32.mrf.mxu0
    %v1908 = vadd.f32 %v1638, %v1907
    %v1909 = vpop.f32.mrf.mxu0
    %v1910 = vadd.f32 %v1642, %v1909
    %1911 = vdwg.mxu0
    %1912 = vmatprep.subr.bf16.mxu0 %v1806
    %1913 = vmatpush1.bf16.msra.mxu0 %v1805
    %1914 = vmatprep.subr.bf16.mxu0 %v1802
    %1915 = vmatpush1.bf16.msra.mxu0 %v1801
    %1916 = vmatprep.subr.bf16.mxu0 %v1798
    %1917 = vmatpush1.bf16.msra.mxu0 %v1797
    %1918 = vmatprep.subr.bf16.mxu0 %v1794
    %1919 = vmatpush1.bf16.msra.mxu0 %v1793
    %1920 = vmatprep.subr.bf16.mxu0 %v1790
    %1921 = vmatpush1.bf16.msra.mxu0 %v1789
    %1922 = vmatprep.subr.bf16.mxu0 %v1786
    %1923 = vmatpush1.bf16.msra.mxu0 %v1785
    %1924 = vmatprep.subr.bf16.mxu0 %v1782
    %1925 = vmatpush1.bf16.msra.mxu0 %v1781
    %1926 = vmatprep.subr.bf16.mxu0 %v1778
    %1927 = vmatpush1.bf16.msra.mxu0 %v1777
    %1928 = vmatprep.subr.bf16.mxu0 0
    %1929 = vmatpush2.bf16.msra.mxu0 0
    %1930 = vmatprep.subr.bf16.mxu0 0
    %1931 = vmatpush2.bf16.msra.mxu0 0
    %1932 = vmatprep.subr.bf16.mxu0 0
    %1933 = vmatpush2.bf16.msra.mxu0 0
    %1934 = vmatprep.subr.bf16.mxu0 0
    %1935 = vmatpush2.bf16.msra.mxu0 0
    %1936 = vmatprep.subr.bf16.mxu0 0
    %1937 = vmatpush2.bf16.msra.mxu0 0
    %1938 = vmatprep.subr.bf16.mxu0 0
    %1939 = vmatpush2.bf16.msra.mxu0 0
    %1940 = vmatprep.subr.bf16.mxu0 0
    %1941 = vmatpush2.bf16.msra.mxu0 0
    %1942 = vmatprep.subr.bf16.mxu0 0
    %1943 = vmatpush2.bf16.msra.mxu0 0
    %1944 = vmatprep.mubr.bf16.mxu0 0
    %1945 = vmatmul.mubr.bf16.gmra.mxu0 %v1671
    %v1946 = vpop.f32.mrf.mxu0
    %v1947 = vadd.f32 %v1646, %v1946
    %v1948 = vpop.f32.mrf.mxu0
    %v1949 = vadd.f32 %v1650, %v1948
    %v1950 = vpop.f32.mrf.mxu0
    %v1951 = vadd.f32 %v1646, %v1950
    %v1952 = vpop.f32.mrf.mxu0
    %v1953 = vadd.f32 %v1650, %v1952
    %1954 = vmatprep.mubr.bf16.mxu0 0
    %1955 = vmatmul.mubr.bf16.gmra.mxu0 %v1672
    %v1956 = vpop.f32.mrf.mxu0
    %v1957 = vadd.f32 %v1646, %v1956
    %v1958 = vpop.f32.mrf.mxu0
    %v1959 = vadd.f32 %v1650, %v1958
    %v1960 = vpop.f32.mrf.mxu0
    %v1961 = vadd.f32 %v1646, %v1960
    %v1962 = vpop.f32.mrf.mxu0
    %v1963 = vadd.f32 %v1650, %v1962
    %1964 = vmatprep.mubr.bf16.mxu0 0
    %1965 = vmatmul.mubr.bf16.gmra.mxu0 %v1673
    %v1966 = vpop.f32.mrf.mxu0
    %v1967 = vadd.f32 %v1646, %v1966
    %v1968 = vpop.f32.mrf.mxu0
    %v1969 = vadd.f32 %v1650, %v1968
    %v1970 = vpop.f32.mrf.mxu0
    %v1971 = vadd.f32 %v1646, %v1970
    %v1972 = vpop.f32.mrf.mxu0
    %v1973 = vadd.f32 %v1650, %v1972
    %1974 = vmatprep.mubr.bf16.mxu0 0
    %1975 = vmatmul.mubr.bf16.gmra.mxu0 %v1674
    %v1976 = vpop.f32.mrf.mxu0
    %v1977 = vadd.f32 %v1646, %v1976
    %v1978 = vpop.f32.mrf.mxu0
    %v1979 = vadd.f32 %v1650, %v1978
    %v1980 = vpop.f32.mrf.mxu0
    %v1981 = vadd.f32 %v1646, %v1980
    %v1982 = vpop.f32.mrf.mxu0
    %v1983 = vadd.f32 %v1650, %v1982
    %1984 = vdwg.mxu0
    %1985 = vst [vmem:[#allocation3] sm:$0xff] %v1874
    %1986 = vst [vmem:[#allocation3 + $0x8] sm:$0xff] %v1876
    %1987 = vst [vmem:[#allocation3 + $0x10] sm:$0xff] %v1947
    %1988 = vst [vmem:[#allocation3 + $0x18] sm:$0xff] %v1949
    %1989 = vst [vmem:[#allocation3 + $0x20] sm:$0xff] %v1878
    %1990 = vst [vmem:[#allocation3 + $0x28] sm:$0xff] %v1880
    %1991 = vst [vmem:[#allocation3 + $0x30] sm:$0xff] %v1951
    %1992 = vst [vmem:[#allocation3 + $0x38] sm:$0xff] %v1953
    %1993 = vst [vmem:[#allocation3 + $0x40] sm:$0xff] %v1884
    %1994 = vst [vmem:[#allocation3 + $0x48] sm:$0xff] %v1886
    %1995 = vst [vmem:[#allocation3 + $0x50] sm:$0xff] %v1957
    %1996 = vst [vmem:[#allocation3 + $0x58] sm:$0xff] %v1959
    %1997 = vst [vmem:[#allocation3 + $0x60] sm:$0xff] %v1888
    %1998 = vst [vmem:[#allocation3 + $0x68] sm:$0xff] %v1890
    %1999 = vst [vmem:[#allocation3 + $0x70] sm:$0xff] %v1961
    %2000 = vst [vmem:[#allocation3 + $0x78] sm:$0xff] %v1963
    %2001 = vst [vmem:[#allocation3 + $0x80] sm:$0xff] %v1894
    %2002 = vst [vmem:[#allocation3 + $0x88] sm:$0xff] %v1896
    %2003 = vst [vmem:[#allocation3 + $0x90] sm:$0xff] %v1967
    %2004 = vst [vmem:[#allocation3 + $0x98] sm:$0xff] %v1969
    %2005 = vst [vmem:[#allocation3 + $0xa0] sm:$0xff] %v1898
    %2006 = vst [vmem:[#allocation3 + $0xa8] sm:$0xff] %v1900
    %2007 = vst [vmem:[#allocation3 + $0xb0] sm:$0xff] %v1971
    %2008 = vst [vmem:[#allocation3 + $0xb8] sm:$0xff] %v1973
    %2009 = vst [vmem:[#allocation3 + $0xc0] sm:$0xff] %v1904
    %2010 = vst [vmem:[#allocation3 + $0xc8] sm:$0xff] %v1906
    %2011 = vst [vmem:[#allocation3 + $0xd0] sm:$0xff] %v1977
    %2012 = vst [vmem:[#allocation3 + $0xd8] sm:$0xff] %v1979
    %2013 = vst [vmem:[#allocation3 + $0xe0] sm:$0xff] %v1908
    %2014 = vst [vmem:[#allocation3 + $0xe8] sm:$0xff] %v1910
    %2015 = vst [vmem:[#allocation3 + $0xf0] sm:$0xff] %v1981
    %2016 = vst [vmem:[#allocation3 + $0xf8] sm:$0xff] %v1983
    %v2017 = vld [vmem:[#allocation9] sm:$0xff]
    %v2018 = vld [vmem:[#allocation9 + $0x8] sm:$0xff]
    %v2019 = vld [vmem:[#allocation9 + $0x10] sm:$0xff]
    %v2020 = vld [vmem:[#allocation9 + $0x18] sm:$0xff]
    %v2021 = vld [vmem:[#allocation9 + $0x20] sm:$0xff]
    %v2022 = vld [vmem:[#allocation9 + $0x28] sm:$0xff]
    %v2023 = vld [vmem:[#allocation9 + $0x30] sm:$0xff]
    %v2024 = vld [vmem:[#allocation9 + $0x38] sm:$0xff]
    %v2025 = vld [vmem:[#allocation9 + $0x40] sm:$0xff]
    %v2026 = vld [vmem:[#allocation9 + $0x48] sm:$0xff]
    %v2027 = vld [vmem:[#allocation9 + $0x50] sm:$0xff]
    %v2028 = vld [vmem:[#allocation9 + $0x58] sm:$0xff]
    %v2029 = vld [vmem:[#allocation9 + $0x60] sm:$0xff]
    %v2030 = vld [vmem:[#allocation9 + $0x68] sm:$0xff]
    %v2031 = vld [vmem:[#allocation9 + $0x70] sm:$0xff]
    %v2032 = vld [vmem:[#allocation9 + $0x78] sm:$0xff]
    %v2033 = vld [vmem:[#allocation9 + $0x80] sm:$0xff]
    %v2034 = vld [vmem:[#allocation9 + $0x88] sm:$0xff]
    %v2035 = vld [vmem:[#allocation9 + $0x90] sm:$0xff]
    %v2036 = vld [vmem:[#allocation9 + $0x98] sm:$0xff]
    %v2037 = vld [vmem:[#allocation9 + $0xa0] sm:$0xff]
    %v2038 = vld [vmem:[#allocation9 + $0xa8] sm:$0xff]
    %v2039 = vld [vmem:[#allocation9 + $0xb0] sm:$0xff]
    %v2040 = vld [vmem:[#allocation9 + $0xb8] sm:$0xff]
    %v2041 = vld [vmem:[#allocation9 + $0xc0] sm:$0xff]
    %v2042 = vld [vmem:[#allocation9 + $0xc8] sm:$0xff]
    %v2043 = vld [vmem:[#allocation9 + $0xd0] sm:$0xff]
    %v2044 = vld [vmem:[#allocation9 + $0xd8] sm:$0xff]
    %v2045 = vld [vmem:[#allocation9 + $0xe0] sm:$0xff]
    %v2046 = vld [vmem:[#allocation9 + $0xe8] sm:$0xff]
    %v2047 = vld [vmem:[#allocation9 + $0xf0] sm:$0xff]
    %v2048 = vld [vmem:[#allocation9 + $0xf8] sm:$0xff]
    %s2049 = scalar_lea.vmem %s7, 8
    %v2050 = vld [vmem:[%s2049] sm:$0xff]
    %s2051 = scalar_lea.vmem %s8, 8
    %v2052 = vld [vmem:[%s2051] sm:$0xff]
    %v2053 = vld [vmem:[#allocation3] sm:$0xff]
    %v2054 = vld [vmem:[#allocation3 + $0x8] sm:$0xff]
    %v2055 = vld [vmem:[#allocation3 + $0x10] sm:$0xff]
    %v2056 = vld [vmem:[#allocation3 + $0x18] sm:$0xff]
    %v2057 = vpack.c.bf16 %v2050, %v2050
    %v2090 = vunpack.c.l.b16 %v2017
    %v2091 = vunpack.c.h.b16 %v2017
    %v2092 = vunpack.c.l.b16 %v2018
    %v2093 = vunpack.c.h.b16 %v2018
    %v2094 = vunpack.c.l.b16 %v2019
    %v2095 = vunpack.c.h.b16 %v2019
    %v2096 = vunpack.c.l.b16 %v2020
    %v2097 = vunpack.c.h.b16 %v2020
    %v2098 = vunpack.c.l.b16 %v2021
    %v2099 = vunpack.c.h.b16 %v2021
    %v2100 = vunpack.c.l.b16 %v2022
    %v2101 = vunpack.c.h.b16 %v2022
    %v2102 = vunpack.c.l.b16 %v2023
    %v2103 = vunpack.c.h.b16 %v2023
    %v2104 = vunpack.c.l.b16 %v2024
    %v2105 = vunpack.c.h.b16 %v2024
    %v2106 = vunpack.c.l.b16 %v2025
    %v2107 = vunpack.c.h.b16 %v2025
    %v2108 = vunpack.c.l.b16 %v2026
    %v2109 = vunpack.c.h.b16 %v2026
    %v2110 = vunpack.c.l.b16 %v2027
    %v2111 = vunpack.c.h.b16 %v2027
    %v2112 = vunpack.c.l.b16 %v2028
    %v2113 = vunpack.c.h.b16 %v2028
    %v2114 = vunpack.c.l.b16 %v2029
    %v2115 = vunpack.c.h.b16 %v2029
    %v2116 = vunpack.c.l.b16 %v2030
    %v2117 = vunpack.c.h.b16 %v2030
    %v2118 = vunpack.c.l.b16 %v2031
    %v2119 = vunpack.c.h.b16 %v2031
    %v2120 = vunpack.c.l.b16 %v2032
    %v2121 = vunpack.c.h.b16 %v2032
    %v2122 = vunpack.c.l.b16 %v2033
    %v2123 = vunpack.c.h.b16 %v2033
    %v2124 = vunpack.c.l.b16 %v2034
    %v2125 = vunpack.c.h.b16 %v2034
    %v2126 = vunpack.c.l.b16 %v2035
    %v2127 = vunpack.c.h.b16 %v2035
    %v2128 = vunpack.c.l.b16 %v2036
    %v2129 = vunpack.c.h.b16 %v2036
    %v2130 = vunpack.c.l.b16 %v2037
    %v2131 = vunpack.c.h.b16 %v2037
    %v2132 = vunpack.c.l.b16 %v2038
    %v2133 = vunpack.c.h.b16 %v2038
    %v2134 = vunpack.c.l.b16 %v2039
    %v2135 = vunpack.c.h.b16 %v2039
    %v2136 = vunpack.c.l.b16 %v2040
    %v2137 = vunpack.c.h.b16 %v2040
    %v2138 = vunpack.c.l.b16 %v2041
    %v2139 = vunpack.c.h.b16 %v2041
    %v2140 = vunpack.c.l.b16 %v2042
    %v2141 = vunpack.c.h.b16 %v2042
    %v2142 = vunpack.c.l.b16 %v2043
    %v2143 = vunpack.c.h.b16 %v2043
    %v2144 = vunpack.c.l.b16 %v2044
    %v2145 = vunpack.c.h.b16 %v2044
    %v2146 = vunpack.c.l.b16 %v2045
    %v2147 = vunpack.c.h.b16 %v2045
    %v2148 = vunpack.c.l.b16 %v2046
    %v2149 = vunpack.c.h.b16 %v2046
    %v2150 = vunpack.c.l.b16 %v2047
    %v2151 = vunpack.c.h.b16 %v2047
    %v2152 = vunpack.c.l.b16 %v2048
    %v2153 = vunpack.c.h.b16 %v2048
    %v2154 = vpack.c.b16 %v2094, %v2090
    %v2155 = vpack.c.b16 %v2095, %v2091
    %v2156 = vpack.c.b16 %v2096, %v2092
    %v2157 = vpack.c.b16 %v2097, %v2093
    %v2158 = vpack.c.b16 %v2102, %v2098
    %v2159 = vpack.c.b16 %v2103, %v2099
    %v2160 = vpack.c.b16 %v2104, %v2100
    %v2161 = vpack.c.b16 %v2105, %v2101
    %v2162 = vpack.c.b16 %v2110, %v2106
    %v2163 = vpack.c.b16 %v2111, %v2107
    %v2164 = vpack.c.b16 %v2112, %v2108
    %v2165 = vpack.c.b16 %v2113, %v2109
    %v2166 = vpack.c.b16 %v2118, %v2114
    %v2167 = vpack.c.b16 %v2119, %v2115
    %v2168 = vpack.c.b16 %v2120, %v2116
    %v2169 = vpack.c.b16 %v2121, %v2117
    %v2170 = vpack.c.b16 %v2126, %v2122
    %v2171 = vpack.c.b16 %v2127, %v2123
    %v2172 = vpack.c.b16 %v2128, %v2124
    %v2173 = vpack.c.b16 %v2129, %v2125
    %v2174 = vpack.c.b16 %v2134, %v2130
    %v2175 = vpack.c.b16 %v2135, %v2131
    %v2176 = vpack.c.b16 %v2136, %v2132
    %v2177 = vpack.c.b16 %v2137, %v2133
    %v2178 = vpack.c.b16 %v2142, %v2138
    %v2179 = vpack.c.b16 %v2143, %v2139
    %v2180 = vpack.c.b16 %v2144, %v2140
    %v2181 = vpack.c.b16 %v2145, %v2141
    %v2182 = vpack.c.b16 %v2150, %v2146
    %v2183 = vpack.c.b16 %v2151, %v2147
    %v2184 = vpack.c.b16 %v2152, %v2148
    %v2185 = vpack.c.b16 %v2153, %v2149
    %2218 = vmatprep.subr.bf16.mxu0 %v2183
    %2219 = vmatpush1.bf16.msra.mxu0 %v2182
    %2220 = vmatprep.subr.bf16.mxu0 %v2179
    %2221 = vmatpush1.bf16.msra.mxu0 %v2178
    %2222 = vmatprep.subr.bf16.mxu0 %v2175
    %2223 = vmatpush1.bf16.msra.mxu0 %v2174
    %2224 = vmatprep.subr.bf16.mxu0 %v2171
    %2225 = vmatpush1.bf16.msra.mxu0 %v2170
    %2226 = vmatprep.subr.bf16.mxu0 %v2167
    %2227 = vmatpush1.bf16.msra.mxu0 %v2166
    %2228 = vmatprep.subr.bf16.mxu0 %v2163
    %2229 = vmatpush1.bf16.msra.mxu0 %v2162
    %2230 = vmatprep.subr.bf16.mxu0 %v2159
    %2231 = vmatpush1.bf16.msra.mxu0 %v2158
    %2232 = vmatprep.subr.bf16.mxu0 %v2155
    %2233 = vmatpush1.bf16.msra.mxu0 %v2154
    %2234 = vmatprep.subr.bf16.mxu0 0
    %2235 = vmatpush2.bf16.msra.mxu0 0
    %2236 = vmatprep.subr.bf16.mxu0 0
    %2237 = vmatpush2.bf16.msra.mxu0 0
    %2238 = vmatprep.subr.bf16.mxu0 0
    %2239 = vmatpush2.bf16.msra.mxu0 0
    %2240 = vmatprep.subr.bf16.mxu0 0
    %2241 = vmatpush2.bf16.msra.mxu0 0
    %2242 = vmatprep.subr.bf16.mxu0 0
    %2243 = vmatpush2.bf16.msra.mxu0 0
    %2244 = vmatprep.subr.bf16.mxu0 0
    %2245 = vmatpush2.bf16.msra.mxu0 0
    %2246 = vmatprep.subr.bf16.mxu0 0
    %2247 = vmatpush2.bf16.msra.mxu0 0
    %2248 = vmatprep.subr.bf16.mxu0 0
    %2249 = vmatpush2.bf16.msra.mxu0 0
    %2250 = vmatprep.mubr.bf16.mxu0 0
    %2251 = vmatmul.mubr.bf16.gmra.mxu0 %v2057
    %v2252 = vpop.f32.mrf.mxu0
    %v2253 = vadd.f32 0.0, %v2252
    %v2254 = vpop.f32.mrf.mxu0
    %v2255 = vadd.f32 0.0, %v2254
    %v2256 = vpop.f32.mrf.mxu0
    %v2257 = vpop.f32.mrf.mxu0
    %2258 = vdwg.mxu0
    %2259 = vmatprep.subr.bf16.mxu0 %v2185
    %2260 = vmatpush1.bf16.msra.mxu0 %v2184
    %2261 = vmatprep.subr.bf16.mxu0 %v2181
    %2262 = vmatpush1.bf16.msra.mxu0 %v2180
    %2263 = vmatprep.subr.bf16.mxu0 %v2177
    %2264 = vmatpush1.bf16.msra.mxu0 %v2176
    %2265 = vmatprep.subr.bf16.mxu0 %v2173
    %2266 = vmatpush1.bf16.msra.mxu0 %v2172
    %2267 = vmatprep.subr.bf16.mxu0 %v2169
    %2268 = vmatpush1.bf16.msra.mxu0 %v2168
    %2269 = vmatprep.subr.bf16.mxu0 %v2165
    %2270 = vmatpush1.bf16.msra.mxu0 %v2164
    %2271 = vmatprep.subr.bf16.mxu0 %v2161
    %2272 = vmatpush1.bf16.msra.mxu0 %v2160
    %2273 = vmatprep.subr.bf16.mxu0 %v2157
    %2274 = vmatpush1.bf16.msra.mxu0 %v2156
    %2275 = vmatprep.subr.bf16.mxu0 0
    %2276 = vmatpush2.bf16.msra.mxu0 0
    %2277 = vmatprep.subr.bf16.mxu0 0
    %2278 = vmatpush2.bf16.msra.mxu0 0
    %2279 = vmatprep.subr.bf16.mxu0 0
    %2280 = vmatpush2.bf16.msra.mxu0 0
    %2281 = vmatprep.subr.bf16.mxu0 0
    %2282 = vmatpush2.bf16.msra.mxu0 0
    %2283 = vmatprep.subr.bf16.mxu0 0
    %2284 = vmatpush2.bf16.msra.mxu0 0
    %2285 = vmatprep.subr.bf16.mxu0 0
    %2286 = vmatpush2.bf16.msra.mxu0 0
    %2287 = vmatprep.subr.bf16.mxu0 0
    %2288 = vmatpush2.bf16.msra.mxu0 0
    %2289 = vmatprep.subr.bf16.mxu0 0
    %2290 = vmatpush2.bf16.msra.mxu0 0
    %2291 = vmatprep.mubr.bf16.mxu0 0
    %2292 = vmatmul.mubr.bf16.gmra.mxu0 %v2057
    %v2293 = vpop.f32.mrf.mxu0
    %v2294 = vadd.f32 0.0, %v2293
    %v2295 = vpop.f32.mrf.mxu0
    %v2296 = vadd.f32 0.0, %v2295
    %v2297 = vpop.f32.mrf.mxu0
    %v2298 = vpop.f32.mrf.mxu0
    %2299 = vdwg.mxu0
    %v2300 = vadd.f32 %v2053, %v2253
    %v2301 = vadd.f32 %v2054, %v2255
    %v2302 = vadd.f32 %v2055, %v2294
    %v2303 = vadd.f32 %v2056, %v2296
    %v2304 = vmul.f32 %v2300, 0.5
    %v2305 = vtanh.pop %v2304
    %v2306 = vmul.f32 %v2305, 0.5
    %v2307 = vadd.f32 %v2306, 0.5
    %v2308 = vmul.f32 %v2301, 0.5
    %v2309 = vtanh.pop %v2308
    %v2310 = vmul.f32 %v2309, 0.5
    %v2311 = vadd.f32 %v2310, 0.5
    %v2312 = vtanh.pop %v2302
    %v2313 = vmul.f32 %v2303, 0.5
    %v2314 = vtanh.pop %v2313
    %v2315 = vmul.f32 %v2314, 0.5
    %v2316 = vadd.f32 %v2315, 0.5
    %v2317 = vmul.f32 %v2311, %v2052
    %v2318 = vmul.f32 %v2307, %v2312
    %v2319 = vadd.f32 %v2317, %v2318
    %v2320 = vtanh.pop %v2319
    %v2321 = vmul.f32 %v2316, %v2320
    %v2322 = vld [vmem:[#allocation3 + $0x20] sm:$0xff]
    %v2323 = vld [vmem:[#allocation3 + $0x28] sm:$0xff]
    %v2324 = vld [vmem:[#allocation3 + $0x30] sm:$0xff]
    %v2325 = vld [vmem:[#allocation3 + $0x38] sm:$0xff]
    %v2326 = vpack.c.bf16 %v2321, %v2321
    %2327 = vmatprep.subr.bf16.mxu0 %v2183
    %2328 = vmatpush1.bf16.msra.mxu0 %v2182
    %2329 = vmatprep.subr.bf16.mxu0 %v2179
    %2330 = vmatpush1.bf16.msra.mxu0 %v2178
    %2331 = vmatprep.subr.bf16.mxu0 %v2175
    %2332 = vmatpush1.bf16.msra.mxu0 %v2174
    %2333 = vmatprep.subr.bf16.mxu0 %v2171
    %2334 = vmatpush1.bf16.msra.mxu0 %v2170
    %2335 = vmatprep.subr.bf16.mxu0 %v2167
    %2336 = vmatpush1.bf16.msra.mxu0 %v2166
    %2337 = vmatprep.subr.bf16.mxu0 %v2163
    %2338 = vmatpush1.bf16.msra.mxu0 %v2162
    %2339 = vmatprep.subr.bf16.mxu0 %v2159
    %2340 = vmatpush1.bf16.msra.mxu0 %v2158
    %2341 = vmatprep.subr.bf16.mxu0 %v2155
    %2342 = vmatpush1.bf16.msra.mxu0 %v2154
    %2343 = vmatprep.subr.bf16.mxu0 0
    %2344 = vmatpush2.bf16.msra.mxu0 0
    %2345 = vmatprep.subr.bf16.mxu0 0
    %2346 = vmatpush2.bf16.msra.mxu0 0
    %2347 = vmatprep.subr.bf16.mxu0 0
    %2348 = vmatpush2.bf16.msra.mxu0 0
    %2349 = vmatprep.subr.bf16.mxu0 0
    %2350 = vmatpush2.bf16.msra.mxu0 0
    %2351 = vmatprep.subr.bf16.mxu0 0
    %2352 = vmatpush2.bf16.msra.mxu0 0
    %2353 = vmatprep.subr.bf16.mxu0 0
    %2354 = vmatpush2.bf16.msra.mxu0 0
    %2355 = vmatprep.subr.bf16.mxu0 0
    %2356 = vmatpush2.bf16.msra.mxu0 0
    %2357 = vmatprep.subr.bf16.mxu0 0
    %2358 = vmatpush2.bf16.msra.mxu0 0
    %2359 = vmatprep.mubr.bf16.mxu0 0
    %2360 = vmatmul.mubr.bf16.gmra.mxu0 %v2326
    %v2361 = vpop.f32.mrf.mxu0
    %v2362 = vadd.f32 0.0, %v2361
    %v2363 = vpop.f32.mrf.mxu0
    %v2364 = vadd.f32 0.0, %v2363
    %v2365 = vpop.f32.mrf.mxu0
    %v2366 = vpop.f32.mrf.mxu0
    %2367 = vdwg.mxu0
    %2368 = vmatprep.subr.bf16.mxu0 %v2185
    %2369 = vmatpush1.bf16.msra.mxu0 %v2184
    %2370 = vmatprep.subr.bf16.mxu0 %v2181
    %2371 = vmatpush1.bf16.msra.mxu0 %v2180
    %2372 = vmatprep.subr.bf16.mxu0 %v2177
    %2373 = vmatpush1.bf16.msra.mxu0 %v2176
    %2374 = vmatprep.subr.bf16.mxu0 %v2173
    %2375 = vmatpush1.bf16.msra.mxu0 %v2172
    %2376 = vmatprep.subr.bf16.mxu0 %v2169
    %2377 = vmatpush1.bf16.msra.mxu0 %v2168
    %2378 = vmatprep.subr.bf16.mxu0 %v2165
    %2379 = vmatpush1.bf16.msra.mxu0 %v2164
    %2380 = vmatprep.subr.bf16.mxu0 %v2161
    %2381 = vmatpush1.bf16.msra.mxu0 %v2160
    %2382 = vmatprep.subr.bf16.mxu0 %v2157
    %2383 = vmatpush1.bf16.msra.mxu0 %v2156
    %2384 = vmatprep.subr.bf16.mxu0 0
    %2385 = vmatpush2.bf16.msra.mxu0 0
    %2386 = vmatprep.subr.bf16.mxu0 0
    %2387 = vmatpush2.bf16.msra.mxu0 0
    %2388 = vmatprep.subr.bf16.mxu0 0
    %2389 = vmatpush2.bf16.msra.mxu0 0
    %2390 = vmatprep.subr.bf16.mxu0 0
    %2391 = vmatpush2.bf16.msra.mxu0 0
    %2392 = vmatprep.subr.bf16.mxu0 0
    %2393 = vmatpush2.bf16.msra.mxu0 0
    %2394 = vmatprep.subr.bf16.mxu0 0
    %2395 = vmatpush2.bf16.msra.mxu0 0
    %2396 = vmatprep.subr.bf16.mxu0 0
    %2397 = vmatpush2.bf16.msra.mxu0 0
    %2398 = vmatprep.subr.bf16.mxu0 0
    %2399 = vmatpush2.bf16.msra.mxu0 0
    %2400 = vmatprep.mubr.bf16.mxu0 0
    %2401 = vmatmul.mubr.bf16.gmra.mxu0 %v2326
    %v2402 = vpop.f32.mrf.mxu0
    %v2403 = vadd.f32 0.0, %v2402
    %v2404 = vpop.f32.mrf.mxu0
    %v2405 = vadd.f32 0.0, %v2404
    %v2406 = vpop.f32.mrf.mxu0
    %v2407 = vpop.f32.mrf.mxu0
    %2408 = vdwg.mxu0
    %v2409 = vadd.f32 %v2322, %v2362
    %v2410 = vadd.f32 %v2323, %v2364
    %v2411 = vadd.f32 %v2324, %v2403
    %v2412 = vadd.f32 %v2325, %v2405
    %v2413 = vmul.f32 %v2409, 0.5
    %v2414 = vtanh.pop %v2413
    %v2415 = vmul.f32 %v2414, 0.5
    %v2416 = vadd.f32 %v2415, 0.5
    %v2417 = vmul.f32 %v2410, 0.5
    %v2418 = vtanh.pop %v2417
    %v2419 = vmul.f32 %v2418, 0.5
    %v2420 = vadd.f32 %v2419, 0.5
    %v2421 = vtanh.pop %v2411
    %v2422 = vmul.f32 %v2412, 0.5
    %v2423 = vtanh.pop %v2422
    %v2424 = vmul.f32 %v2423, 0.5
    %v2425 = vadd.f32 %v2424, 0.5
    %v2426 = vmul.f32 %v2420, %v2319
    %v2427 = vmul.f32 %v2416, %v2421
    %v2428 = vadd.f32 %v2426, %v2427
    %v2429 = vtanh.pop %v2428
    %v2430 = vmul.f32 %v2425, %v2429
    %v2431 = vld [vmem:[#allocation3 + $0x40] sm:$0xff]
    %v2432 = vld [vmem:[#allocation3 + $0x48] sm:$0xff]
    %v2433 = vld [vmem:[#allocation3 + $0x50] sm:$0xff]
    %v2434 = vld [vmem:[#allocation3 + $0x58] sm:$0xff]
    %v2435 = vpack.c.bf16 %v2430, %v2430
    %2436 = vmatprep.subr.bf16.mxu0 %v2183
    %2437 = vmatpush1.bf16.msra.mxu0 %v2182
    %2438 = vmatprep.subr.bf16.mxu0 %v2179
    %2439 = vmatpush1.bf16.msra.mxu0 %v2178
    %2440 = vmatprep.subr.bf16.mxu0 %v2175
    %2441 = vmatpush1.bf16.msra.mxu0 %v2174
    %2442 = vmatprep.subr.bf16.mxu0 %v2171
    %2443 = vmatpush1.bf16.msra.mxu0 %v2170
    %2444 = vmatprep.subr.bf16.mxu0 %v2167
    %2445 = vmatpush1.bf16.msra.mxu0 %v2166
    %2446 = vmatprep.subr.bf16.mxu0 %v2163
    %2447 = vmatpush1.bf16.msra.mxu0 %v2162
    %2448 = vmatprep.subr.bf16.mxu0 %v2159
    %2449 = vmatpush1.bf16.msra.mxu0 %v2158
    %2450 = vmatprep.subr.bf16.mxu0 %v2155
    %2451 = vmatpush1.bf16.msra.mxu0 %v2154
    %2452 = vmatprep.subr.bf16.mxu0 0
    %2453 = vmatpush2.bf16.msra.mxu0 0
    %2454 = vmatprep.subr.bf16.mxu0 0
    %2455 = vmatpush2.bf16.msra.mxu0 0
    %2456 = vmatprep.subr.bf16.mxu0 0
    %2457 = vmatpush2.bf16.msra.mxu0 0
    %2458 = vmatprep.subr.bf16.mxu0 0
    %2459 = vmatpush2.bf16.msra.mxu0 0
    %2460 = vmatprep.subr.bf16.mxu0 0
    %2461 = vmatpush2.bf16.msra.mxu0 0
    %2462 = vmatprep.subr.bf16.mxu0 0
    %2463 = vmatpush2.bf16.msra.mxu0 0
    %2464 = vmatprep.subr.bf16.mxu0 0
    %2465 = vmatpush2.bf16.msra.mxu0 0
    %2466 = vmatprep.subr.bf16.mxu0 0
    %2467 = vmatpush2.bf16.msra.mxu0 0
    %2468 = vmatprep.mubr.bf16.mxu0 0
    %2469 = vmatmul.mubr.bf16.gmra.mxu0 %v2435
    %v2470 = vpop.f32.mrf.mxu0
    %v2471 = vadd.f32 0.0, %v2470
    %v2472 = vpop.f32.mrf.mxu0
    %v2473 = vadd.f32 0.0, %v2472
    %v2474 = vpop.f32.mrf.mxu0
    %v2475 = vpop.f32.mrf.mxu0
    %2476 = vdwg.mxu0
    %2477 = vmatprep.subr.bf16.mxu0 %v2185
    %2478 = vmatpush1.bf16.msra.mxu0 %v2184
    %2479 = vmatprep.subr.bf16.mxu0 %v2181
    %2480 = vmatpush1.bf16.msra.mxu0 %v2180
    %2481 = vmatprep.subr.bf16.mxu0 %v2177
    %2482 = vmatpush1.bf16.msra.mxu0 %v2176
    %2483 = vmatprep.subr.bf16.mxu0 %v2173
    %2484 = vmatpush1.bf16.msra.mxu0 %v2172
    %2485 = vmatprep.subr.bf16.mxu0 %v2169
    %2486 = vmatpush1.bf16.msra.mxu0 %v2168
    %2487 = vmatprep.subr.bf16.mxu0 %v2165
    %2488 = vmatpush1.bf16.msra.mxu0 %v2164
    %2489 = vmatprep.subr.bf16.mxu0 %v2161
    %2490 = vmatpush1.bf16.msra.mxu0 %v2160
    %2491 = vmatprep.subr.bf16.mxu0 %v2157
    %2492 = vmatpush1.bf16.msra.mxu0 %v2156
    %2493 = vmatprep.subr.bf16.mxu0 0
    %2494 = vmatpush2.bf16.msra.mxu0 0
    %2495 = vmatprep.subr.bf16.mxu0 0
    %2496 = vmatpush2.bf16.msra.mxu0 0
    %2497 = vmatprep.subr.bf16.mxu0 0
    %2498 = vmatpush2.bf16.msra.mxu0 0
    %2499 = vmatprep.subr.bf16.mxu0 0
    %2500 = vmatpush2.bf16.msra.mxu0 0
    %2501 = vmatprep.subr.bf16.mxu0 0
    %2502 = vmatpush2.bf16.msra.mxu0 0
    %2503 = vmatprep.subr.bf16.mxu0 0
    %2504 = vmatpush2.bf16.msra.mxu0 0
    %2505 = vmatprep.subr.bf16.mxu0 0
    %2506 = vmatpush2.bf16.msra.mxu0 0
    %2507 = vmatprep.subr.bf16.mxu0 0
    %2508 = vmatpush2.bf16.msra.mxu0 0
    %2509 = vmatprep.mubr.bf16.mxu0 0
    %2510 = vmatmul.mubr.bf16.gmra.mxu0 %v2435
    %v2511 = vpop.f32.mrf.mxu0
    %v2512 = vadd.f32 0.0, %v2511
    %v2513 = vpop.f32.mrf.mxu0
    %v2514 = vadd.f32 0.0, %v2513
    %v2515 = vpop.f32.mrf.mxu0
    %v2516 = vpop.f32.mrf.mxu0
    %2517 = vdwg.mxu0
    %v2518 = vadd.f32 %v2431, %v2471
    %v2519 = vadd.f32 %v2432, %v2473
    %v2520 = vadd.f32 %v2433, %v2512
    %v2521 = vadd.f32 %v2434, %v2514
    %v2522 = vmul.f32 %v2518, 0.5
    %v2523 = vtanh.pop %v2522
    %v2524 = vmul.f32 %v2523, 0.5
    %v2525 = vadd.f32 %v2524, 0.5
    %v2526 = vmul.f32 %v2519, 0.5
    %v2527 = vtanh.pop %v2526
    %v2528 = vmul.f32 %v2527, 0.5
    %v2529 = vadd.f32 %v2528, 0.5
    %v2530 = vtanh.pop %v2520
    %v2531 = vmul.f32 %v2521, 0.5
    %v2532 = vtanh.pop %v2531
    %v2533 = vmul.f32 %v2532, 0.5
    %v2534 = vadd.f32 %v2533, 0.5
    %v2535 = vmul.f32 %v2529, %v2428
    %v2536 = vmul.f32 %v2525, %v2530
    %v2537 = vadd.f32 %v2535, %v2536
    %v2538 = vtanh.pop %v2537
    %v2539 = vmul.f32 %v2534, %v2538
    %v2540 = vld [vmem:[#allocation3 + $0x60] sm:$0xff]
    %v2541 = vld [vmem:[#allocation3 + $0x68] sm:$0xff]
    %v2542 = vld [vmem:[#allocation3 + $0x70] sm:$0xff]
    %v2543 = vld [vmem:[#allocation3 + $0x78] sm:$0xff]
    %v2544 = vpack.c.bf16 %v2539, %v2539
    %2545 = vmatprep.subr.bf16.mxu0 %v2183
    %2546 = vmatpush1.bf16.msra.mxu0 %v2182
    %2547 = vmatprep.subr.bf16.mxu0 %v2179
    %2548 = vmatpush1.bf16.msra.mxu0 %v2178
    %2549 = vmatprep.subr.bf16.mxu0 %v2175
    %2550 = vmatpush1.bf16.msra.mxu0 %v2174
    %2551 = vmatprep.subr.bf16.mxu0 %v2171
    %2552 = vmatpush1.bf16.msra.mxu0 %v2170
    %2553 = vmatprep.subr.bf16.mxu0 %v2167
    %2554 = vmatpush1.bf16.msra.mxu0 %v2166
    %2555 = vmatprep.subr.bf16.mxu0 %v2163
    %2556 = vmatpush1.bf16.msra.mxu0 %v2162
    %2557 = vmatprep.subr.bf16.mxu0 %v2159
    %2558 = vmatpush1.bf16.msra.mxu0 %v2158
    %2559 = vmatprep.subr.bf16.mxu0 %v2155
    %2560 = vmatpush1.bf16.msra.mxu0 %v2154
    %2561 = vmatprep.subr.bf16.mxu0 0
    %2562 = vmatpush2.bf16.msra.mxu0 0
    %2563 = vmatprep.subr.bf16.mxu0 0
    %2564 = vmatpush2.bf16.msra.mxu0 0
    %2565 = vmatprep.subr.bf16.mxu0 0
    %2566 = vmatpush2.bf16.msra.mxu0 0
    %2567 = vmatprep.subr.bf16.mxu0 0
    %2568 = vmatpush2.bf16.msra.mxu0 0
    %2569 = vmatprep.subr.bf16.mxu0 0
    %2570 = vmatpush2.bf16.msra.mxu0 0
    %2571 = vmatprep.subr.bf16.mxu0 0
    %2572 = vmatpush2.bf16.msra.mxu0 0
    %2573 = vmatprep.subr.bf16.mxu0 0
    %2574 = vmatpush2.bf16.msra.mxu0 0
    %2575 = vmatprep.subr.bf16.mxu0 0
    %2576 = vmatpush2.bf16.msra.mxu0 0
    %2577 = vmatprep.mubr.bf16.mxu0 0
    %2578 = vmatmul.mubr.bf16.gmra.mxu0 %v2544
    %v2579 = vpop.f32.mrf.mxu0
    %v2580 = vadd.f32 0.0, %v2579
    %v2581 = vpop.f32.mrf.mxu0
    %v2582 = vadd.f32 0.0, %v2581
    %v2583 = vpop.f32.mrf.mxu0
    %v2584 = vpop.f32.mrf.mxu0
    %2585 = vdwg.mxu0
    %2586 = vmatprep.subr.bf16.mxu0 %v2185
    %2587 = vmatpush1.bf16.msra.mxu0 %v2184
    %2588 = vmatprep.subr.bf16.mxu0 %v2181
    %2589 = vmatpush1.bf16.msra.mxu0 %v2180
    %2590 = vmatprep.subr.bf16.mxu0 %v2177
    %2591 = vmatpush1.bf16.msra.mxu0 %v2176
    %2592 = vmatprep.subr.bf16.mxu0 %v2173
    %2593 = vmatpush1.bf16.msra.mxu0 %v2172
    %2594 = vmatprep.subr.bf16.mxu0 %v2169
    %2595 = vmatpush1.bf16.msra.mxu0 %v2168
    %2596 = vmatprep.subr.bf16.mxu0 %v2165
    %2597 = vmatpush1.bf16.msra.mxu0 %v2164
    %2598 = vmatprep.subr.bf16.mxu0 %v2161
    %2599 = vmatpush1.bf16.msra.mxu0 %v2160
    %2600 = vmatprep.subr.bf16.mxu0 %v2157
    %2601 = vmatpush1.bf16.msra.mxu0 %v2156
    %2602 = vmatprep.subr.bf16.mxu0 0
    %2603 = vmatpush2.bf16.msra.mxu0 0
    %2604 = vmatprep.subr.bf16.mxu0 0
    %2605 = vmatpush2.bf16.msra.mxu0 0
    %2606 = vmatprep.subr.bf16.mxu0 0
    %2607 = vmatpush2.bf16.msra.mxu0 0
    %2608 = vmatprep.subr.bf16.mxu0 0
    %2609 = vmatpush2.bf16.msra.mxu0 0
    %2610 = vmatprep.subr.bf16.mxu0 0
    %2611 = vmatpush2.bf16.msra.mxu0 0
    %2612 = vmatprep.subr.bf16.mxu0 0
    %2613 = vmatpush2.bf16.msra.mxu0 0
    %2614 = vmatprep.subr.bf16.mxu0 0
    %2615 = vmatpush2.bf16.msra.mxu0 0
    %2616 = vmatprep.subr.bf16.mxu0 0
    %2617 = vmatpush2.bf16.msra.mxu0 0
    %2618 = vmatprep.mubr.bf16.mxu0 0
    %2619 = vmatmul.mubr.bf16.gmra.mxu0 %v2544
    %v2620 = vpop.f32.mrf.mxu0
    %v2621 = vadd.f32 0.0, %v2620
    %v2622 = vpop.f32.mrf.mxu0
    %v2623 = vadd.f32 0.0, %v2622
    %v2624 = vpop.f32.mrf.mxu0
    %v2625 = vpop.f32.mrf.mxu0
    %2626 = vdwg.mxu0
    %v2627 = vadd.f32 %v2540, %v2580
    %v2628 = vadd.f32 %v2541, %v2582
    %v2629 = vadd.f32 %v2542, %v2621
    %v2630 = vadd.f32 %v2543, %v2623
    %v2631 = vmul.f32 %v2627, 0.5
    %v2632 = vtanh.pop %v2631
    %v2633 = vmul.f32 %v2632, 0.5
    %v2634 = vadd.f32 %v2633, 0.5
    %v2635 = vmul.f32 %v2628, 0.5
    %v2636 = vtanh.pop %v2635
    %v2637 = vmul.f32 %v2636, 0.5
    %v2638 = vadd.f32 %v2637, 0.5
    %v2639 = vtanh.pop %v2629
    %v2640 = vmul.f32 %v2630, 0.5
    %v2641 = vtanh.pop %v2640
    %v2642 = vmul.f32 %v2641, 0.5
    %v2643 = vadd.f32 %v2642, 0.5
    %v2644 = vmul.f32 %v2638, %v2537
    %v2645 = vmul.f32 %v2634, %v2639
    %v2646 = vadd.f32 %v2644, %v2645
    %v2647 = vtanh.pop %v2646
    %v2648 = vmul.f32 %v2643, %v2647
    %v2649 = vld [vmem:[#allocation3 + $0x80] sm:$0xff]
    %v2650 = vld [vmem:[#allocation3 + $0x88] sm:$0xff]
    %v2651 = vld [vmem:[#allocation3 + $0x90] sm:$0xff]
    %v2652 = vld [vmem:[#allocation3 + $0x98] sm:$0xff]
    %v2653 = vpack.c.bf16 %v2648, %v2648
    %2654 = vmatprep.subr.bf16.mxu0 %v2183
    %2655 = vmatpush1.bf16.msra.mxu0 %v2182
    %2656 = vmatprep.subr.bf16.mxu0 %v2179
    %2657 = vmatpush1.bf16.msra.mxu0 %v2178
    %2658 = vmatprep.subr.bf16.mxu0 %v2175
    %2659 = vmatpush1.bf16.msra.mxu0 %v2174
    %2660 = vmatprep.subr.bf16.mxu0 %v2171
    %2661 = vmatpush1.bf16.msra.mxu0 %v2170
    %2662 = vmatprep.subr.bf16.mxu0 %v2167
    %2663 = vmatpush1.bf16.msra.mxu0 %v2166
    %2664 = vmatprep.subr.bf16.mxu0 %v2163
    %2665 = vmatpush1.bf16.msra.mxu0 %v2162
    %2666 = vmatprep.subr.bf16.mxu0 %v2159
    %2667 = vmatpush1.bf16.msra.mxu0 %v2158
    %2668 = vmatprep.subr.bf16.mxu0 %v2155
    %2669 = vmatpush1.bf16.msra.mxu0 %v2154
    %2670 = vmatprep.subr.bf16.mxu0 0
    %2671 = vmatpush2.bf16.msra.mxu0 0
    %2672 = vmatprep.subr.bf16.mxu0 0
    %2673 = vmatpush2.bf16.msra.mxu0 0
    %2674 = vmatprep.subr.bf16.mxu0 0
    %2675 = vmatpush2.bf16.msra.mxu0 0
    %2676 = vmatprep.subr.bf16.mxu0 0
    %2677 = vmatpush2.bf16.msra.mxu0 0
    %2678 = vmatprep.subr.bf16.mxu0 0
    %2679 = vmatpush2.bf16.msra.mxu0 0
    %2680 = vmatprep.subr.bf16.mxu0 0
    %2681 = vmatpush2.bf16.msra.mxu0 0
    %2682 = vmatprep.subr.bf16.mxu0 0
    %2683 = vmatpush2.bf16.msra.mxu0 0
    %2684 = vmatprep.subr.bf16.mxu0 0
    %2685 = vmatpush2.bf16.msra.mxu0 0
    %2686 = vmatprep.mubr.bf16.mxu0 0
    %2687 = vmatmul.mubr.bf16.gmra.mxu0 %v2653
    %v2688 = vpop.f32.mrf.mxu0
    %v2689 = vadd.f32 0.0, %v2688
    %v2690 = vpop.f32.mrf.mxu0
    %v2691 = vadd.f32 0.0, %v2690
    %v2692 = vpop.f32.mrf.mxu0
    %v2693 = vpop.f32.mrf.mxu0
    %2694 = vdwg.mxu0
    %2695 = vmatprep.subr.bf16.mxu0 %v2185
    %2696 = vmatpush1.bf16.msra.mxu0 %v2184
    %2697 = vmatprep.subr.bf16.mxu0 %v2181
    %2698 = vmatpush1.bf16.msra.mxu0 %v2180
    %2699 = vmatprep.subr.bf16.mxu0 %v2177
    %2700 = vmatpush1.bf16.msra.mxu0 %v2176
    %2701 = vmatprep.subr.bf16.mxu0 %v2173
    %2702 = vmatpush1.bf16.msra.mxu0 %v2172
    %2703 = vmatprep.subr.bf16.mxu0 %v2169
    %2704 = vmatpush1.bf16.msra.mxu0 %v2168
    %2705 = vmatprep.subr.bf16.mxu0 %v2165
    %2706 = vmatpush1.bf16.msra.mxu0 %v2164
    %2707 = vmatprep.subr.bf16.mxu0 %v2161
    %2708 = vmatpush1.bf16.msra.mxu0 %v2160
    %2709 = vmatprep.subr.bf16.mxu0 %v2157
    %2710 = vmatpush1.bf16.msra.mxu0 %v2156
    %2711 = vmatprep.subr.bf16.mxu0 0
    %2712 = vmatpush2.bf16.msra.mxu0 0
    %2713 = vmatprep.subr.bf16.mxu0 0
    %2714 = vmatpush2.bf16.msra.mxu0 0
    %2715 = vmatprep.subr.bf16.mxu0 0
    %2716 = vmatpush2.bf16.msra.mxu0 0
    %2717 = vmatprep.subr.bf16.mxu0 0
    %2718 = vmatpush2.bf16.msra.mxu0 0
    %2719 = vmatprep.subr.bf16.mxu0 0
    %2720 = vmatpush2.bf16.msra.mxu0 0
    %2721 = vmatprep.subr.bf16.mxu0 0
    %2722 = vmatpush2.bf16.msra.mxu0 0
    %2723 = vmatprep.subr.bf16.mxu0 0
    %2724 = vmatpush2.bf16.msra.mxu0 0
    %2725 = vmatprep.subr.bf16.mxu0 0
    %2726 = vmatpush2.bf16.msra.mxu0 0
    %2727 = vmatprep.mubr.bf16.mxu0 0
    %2728 = vmatmul.mubr.bf16.gmra.mxu0 %v2653
    %v2729 = vpop.f32.mrf.mxu0
    %v2730 = vadd.f32 0.0, %v2729
    %v2731 = vpop.f32.mrf.mxu0
    %v2732 = vadd.f32 0.0, %v2731
    %v2733 = vpop.f32.mrf.mxu0
    %v2734 = vpop.f32.mrf.mxu0
    %2735 = vdwg.mxu0
    %v2736 = vadd.f32 %v2649, %v2689
    %v2737 = vadd.f32 %v2650, %v2691
    %v2738 = vadd.f32 %v2651, %v2730
    %v2739 = vadd.f32 %v2652, %v2732
    %v2740 = vmul.f32 %v2736, 0.5
    %v2741 = vtanh.pop %v2740
    %v2742 = vmul.f32 %v2741, 0.5
    %v2743 = vadd.f32 %v2742, 0.5
    %v2744 = vmul.f32 %v2737, 0.5
    %v2745 = vtanh.pop %v2744
    %v2746 = vmul.f32 %v2745, 0.5
    %v2747 = vadd.f32 %v2746, 0.5
    %v2748 = vtanh.pop %v2738
    %v2749 = vmul.f32 %v2739, 0.5
    %v2750 = vtanh.pop %v2749
    %v2751 = vmul.f32 %v2750, 0.5
    %v2752 = vadd.f32 %v2751, 0.5
    %v2753 = vmul.f32 %v2747, %v2646
    %v2754 = vmul.f32 %v2743, %v2748
    %v2755 = vadd.f32 %v2753, %v2754
    %v2756 = vtanh.pop %v2755
    %v2757 = vmul.f32 %v2752, %v2756
    %v2758 = vld [vmem:[#allocation3 + $0xa0] sm:$0xff]
    %v2759 = vld [vmem:[#allocation3 + $0xa8] sm:$0xff]
    %v2760 = vld [vmem:[#allocation3 + $0xb0] sm:$0xff]
    %v2761 = vld [vmem:[#allocation3 + $0xb8] sm:$0xff]
    %v2762 = vpack.c.bf16 %v2757, %v2757
    %2763 = vmatprep.subr.bf16.mxu0 %v2183
    %2764 = vmatpush1.bf16.msra.mxu0 %v2182
    %2765 = vmatprep.subr.bf16.mxu0 %v2179
    %2766 = vmatpush1.bf16.msra.mxu0 %v2178
    %2767 = vmatprep.subr.bf16.mxu0 %v2175
    %2768 = vmatpush1.bf16.msra.mxu0 %v2174
    %2769 = vmatprep.subr.bf16.mxu0 %v2171
    %2770 = vmatpush1.bf16.msra.mxu0 %v2170
    %2771 = vmatprep.subr.bf16.mxu0 %v2167
    %2772 = vmatpush1.bf16.msra.mxu0 %v2166
    %2773 = vmatprep.subr.bf16.mxu0 %v2163
    %2774 = vmatpush1.bf16.msra.mxu0 %v2162
    %2775 = vmatprep.subr.bf16.mxu0 %v2159
    %2776 = vmatpush1.bf16.msra.mxu0 %v2158
    %2777 = vmatprep.subr.bf16.mxu0 %v2155
    %2778 = vmatpush1.bf16.msra.mxu0 %v2154
    %2779 = vmatprep.subr.bf16.mxu0 0
    %2780 = vmatpush2.bf16.msra.mxu0 0
    %2781 = vmatprep.subr.bf16.mxu0 0
    %2782 = vmatpush2.bf16.msra.mxu0 0
    %2783 = vmatprep.subr.bf16.mxu0 0
    %2784 = vmatpush2.bf16.msra.mxu0 0
    %2785 = vmatprep.subr.bf16.mxu0 0
    %2786 = vmatpush2.bf16.msra.mxu0 0
    %2787 = vmatprep.subr.bf16.mxu0 0
    %2788 = vmatpush2.bf16.msra.mxu0 0
    %2789 = vmatprep.subr.bf16.mxu0 0
    %2790 = vmatpush2.bf16.msra.mxu0 0
    %2791 = vmatprep.subr.bf16.mxu0 0
    %2792 = vmatpush2.bf16.msra.mxu0 0
    %2793 = vmatprep.subr.bf16.mxu0 0
    %2794 = vmatpush2.bf16.msra.mxu0 0
    %2795 = vmatprep.mubr.bf16.mxu0 0
    %2796 = vmatmul.mubr.bf16.gmra.mxu0 %v2762
    %v2797 = vpop.f32.mrf.mxu0
    %v2798 = vadd.f32 0.0, %v2797
    %v2799 = vpop.f32.mrf.mxu0
    %v2800 = vadd.f32 0.0, %v2799
    %v2801 = vpop.f32.mrf.mxu0
    %v2802 = vpop.f32.mrf.mxu0
    %2803 = vdwg.mxu0
    %2804 = vmatprep.subr.bf16.mxu0 %v2185
    %2805 = vmatpush1.bf16.msra.mxu0 %v2184
    %2806 = vmatprep.subr.bf16.mxu0 %v2181
    %2807 = vmatpush1.bf16.msra.mxu0 %v2180
    %2808 = vmatprep.subr.bf16.mxu0 %v2177
    %2809 = vmatpush1.bf16.msra.mxu0 %v2176
    %2810 = vmatprep.subr.bf16.mxu0 %v2173
    %2811 = vmatpush1.bf16.msra.mxu0 %v2172
    %2812 = vmatprep.subr.bf16.mxu0 %v2169
    %2813 = vmatpush1.bf16.msra.mxu0 %v2168
    %2814 = vmatprep.subr.bf16.mxu0 %v2165
    %2815 = vmatpush1.bf16.msra.mxu0 %v2164
    %2816 = vmatprep.subr.bf16.mxu0 %v2161
    %2817 = vmatpush1.bf16.msra.mxu0 %v2160
    %2818 = vmatprep.subr.bf16.mxu0 %v2157
    %2819 = vmatpush1.bf16.msra.mxu0 %v2156
    %2820 = vmatprep.subr.bf16.mxu0 0
    %2821 = vmatpush2.bf16.msra.mxu0 0
    %2822 = vmatprep.subr.bf16.mxu0 0
    %2823 = vmatpush2.bf16.msra.mxu0 0
    %2824 = vmatprep.subr.bf16.mxu0 0
    %2825 = vmatpush2.bf16.msra.mxu0 0
    %2826 = vmatprep.subr.bf16.mxu0 0
    %2827 = vmatpush2.bf16.msra.mxu0 0
    %2828 = vmatprep.subr.bf16.mxu0 0
    %2829 = vmatpush2.bf16.msra.mxu0 0
    %2830 = vmatprep.subr.bf16.mxu0 0
    %2831 = vmatpush2.bf16.msra.mxu0 0
    %2832 = vmatprep.subr.bf16.mxu0 0
    %2833 = vmatpush2.bf16.msra.mxu0 0
    %2834 = vmatprep.subr.bf16.mxu0 0
    %2835 = vmatpush2.bf16.msra.mxu0 0
    %2836 = vmatprep.mubr.bf16.mxu0 0
    %2837 = vmatmul.mubr.bf16.gmra.mxu0 %v2762
    %v2838 = vpop.f32.mrf.mxu0
    %v2839 = vadd.f32 0.0, %v2838
    %v2840 = vpop.f32.mrf.mxu0
    %v2841 = vadd.f32 0.0, %v2840
    %v2842 = vpop.f32.mrf.mxu0
    %v2843 = vpop.f32.mrf.mxu0
    %2844 = vdwg.mxu0
    %v2845 = vadd.f32 %v2758, %v2798
    %v2846 = vadd.f32 %v2759, %v2800
    %v2847 = vadd.f32 %v2760, %v2839
    %v2848 = vadd.f32 %v2761, %v2841
    %v2849 = vmul.f32 %v2845, 0.5
    %v2850 = vtanh.pop %v2849
    %v2851 = vmul.f32 %v2850, 0.5
    %v2852 = vadd.f32 %v2851, 0.5
    %v2853 = vmul.f32 %v2846, 0.5
    %v2854 = vtanh.pop %v2853
    %v2855 = vmul.f32 %v2854, 0.5
    %v2856 = vadd.f32 %v2855, 0.5
    %v2857 = vtanh.pop %v2847
    %v2858 = vmul.f32 %v2848, 0.5
    %v2859 = vtanh.pop %v2858
    %v2860 = vmul.f32 %v2859, 0.5
    %v2861 = vadd.f32 %v2860, 0.5
    %v2862 = vmul.f32 %v2856, %v2755
    %v2863 = vmul.f32 %v2852, %v2857
    %v2864 = vadd.f32 %v2862, %v2863
    %v2865 = vtanh.pop %v2864
    %v2866 = vmul.f32 %v2861, %v2865
    %v2867 = vld [vmem:[#allocation3 + $0xc0] sm:$0xff]
    %v2868 = vld [vmem:[#allocation3 + $0xc8] sm:$0xff]
    %v2869 = vld [vmem:[#allocation3 + $0xd0] sm:$0xff]
    %v2870 = vld [vmem:[#allocation3 + $0xd8] sm:$0xff]
    %v2871 = vpack.c.bf16 %v2866, %v2866
    %2872 = vmatprep.subr.bf16.mxu0 %v2183
    %2873 = vmatpush1.bf16.msra.mxu0 %v2182
    %2874 = vmatprep.subr.bf16.mxu0 %v2179
    %2875 = vmatpush1.bf16.msra.mxu0 %v2178
    %2876 = vmatprep.subr.bf16.mxu0 %v2175
    %2877 = vmatpush1.bf16.msra.mxu0 %v2174
    %2878 = vmatprep.subr.bf16.mxu0 %v2171
    %2879 = vmatpush1.bf16.msra.mxu0 %v2170
    %2880 = vmatprep.subr.bf16.mxu0 %v2167
    %2881 = vmatpush1.bf16.msra.mxu0 %v2166
    %2882 = vmatprep.subr.bf16.mxu0 %v2163
    %2883 = vmatpush1.bf16.msra.mxu0 %v2162
    %2884 = vmatprep.subr.bf16.mxu0 %v2159
    %2885 = vmatpush1.bf16.msra.mxu0 %v2158
    %2886 = vmatprep.subr.bf16.mxu0 %v2155
    %2887 = vmatpush1.bf16.msra.mxu0 %v2154
    %2888 = vmatprep.subr.bf16.mxu0 0
    %2889 = vmatpush2.bf16.msra.mxu0 0
    %2890 = vmatprep.subr.bf16.mxu0 0
    %2891 = vmatpush2.bf16.msra.mxu0 0
    %2892 = vmatprep.subr.bf16.mxu0 0
    %2893 = vmatpush2.bf16.msra.mxu0 0
    %2894 = vmatprep.subr.bf16.mxu0 0
    %2895 = vmatpush2.bf16.msra.mxu0 0
    %2896 = vmatprep.subr.bf16.mxu0 0
    %2897 = vmatpush2.bf16.msra.mxu0 0
    %2898 = vmatprep.subr.bf16.mxu0 0
    %2899 = vmatpush2.bf16.msra.mxu0 0
    %2900 = vmatprep.subr.bf16.mxu0 0
    %2901 = vmatpush2.bf16.msra.mxu0 0
    %2902 = vmatprep.subr.bf16.mxu0 0
    %2903 = vmatpush2.bf16.msra.mxu0 0
    %2904 = vmatprep.mubr.bf16.mxu0 0
    %2905 = vmatmul.mubr.bf16.gmra.mxu0 %v2871
    %v2906 = vpop.f32.mrf.mxu0
    %v2907 = vadd.f32 0.0, %v2906
    %v2908 = vpop.f32.mrf.mxu0
    %v2909 = vadd.f32 0.0, %v2908
    %v2910 = vpop.f32.mrf.mxu0
    %v2911 = vpop.f32.mrf.mxu0
    %2912 = vdwg.mxu0
    %2913 = vmatprep.subr.bf16.mxu0 %v2185
    %2914 = vmatpush1.bf16.msra.mxu0 %v2184
    %2915 = vmatprep.subr.bf16.mxu0 %v2181
    %2916 = vmatpush1.bf16.msra.mxu0 %v2180
    %2917 = vmatprep.subr.bf16.mxu0 %v2177
    %2918 = vmatpush1.bf16.msra.mxu0 %v2176
    %2919 = vmatprep.subr.bf16.mxu0 %v2173
    %2920 = vmatpush1.bf16.msra.mxu0 %v2172
    %2921 = vmatprep.subr.bf16.mxu0 %v2169
    %2922 = vmatpush1.bf16.msra.mxu0 %v2168
    %2923 = vmatprep.subr.bf16.mxu0 %v2165
    %2924 = vmatpush1.bf16.msra.mxu0 %v2164
    %2925 = vmatprep.subr.bf16.mxu0 %v2161
    %2926 = vmatpush1.bf16.msra.mxu0 %v2160
    %2927 = vmatprep.subr.bf16.mxu0 %v2157
    %2928 = vmatpush1.bf16.msra.mxu0 %v2156
    %2929 = vmatprep.subr.bf16.mxu0 0
    %2930 = vmatpush2.bf16.msra.mxu0 0
    %2931 = vmatprep.subr.bf16.mxu0 0
    %2932 = vmatpush2.bf16.msra.mxu0 0
    %2933 = vmatprep.subr.bf16.mxu0 0
    %2934 = vmatpush2.bf16.msra.mxu0 0
    %2935 = vmatprep.subr.bf16.mxu0 0
    %2936 = vmatpush2.bf16.msra.mxu0 0
    %2937 = vmatprep.subr.bf16.mxu0 0
    %2938 = vmatpush2.bf16.msra.mxu0 0
    %2939 = vmatprep.subr.bf16.mxu0 0
    %2940 = vmatpush2.bf16.msra.mxu0 0
    %2941 = vmatprep.subr.bf16.mxu0 0
    %2942 = vmatpush2.bf16.msra.mxu0 0
    %2943 = vmatprep.subr.bf16.mxu0 0
    %2944 = vmatpush2.bf16.msra.mxu0 0
    %2945 = vmatprep.mubr.bf16.mxu0 0
    %2946 = vmatmul.mubr.bf16.gmra.mxu0 %v2871
    %v2947 = vpop.f32.mrf.mxu0
    %v2948 = vadd.f32 0.0, %v2947
    %v2949 = vpop.f32.mrf.mxu0
    %v2950 = vadd.f32 0.0, %v2949
    %v2951 = vpop.f32.mrf.mxu0
    %v2952 = vpop.f32.mrf.mxu0
    %2953 = vdwg.mxu0
    %v2954 = vadd.f32 %v2867, %v2907
    %v2955 = vadd.f32 %v2868, %v2909
    %v2956 = vadd.f32 %v2869, %v2948
    %v2957 = vadd.f32 %v2870, %v2950
    %v2958 = vmul.f32 %v2954, 0.5
    %v2959 = vtanh.pop %v2958
    %v2960 = vmul.f32 %v2959, 0.5
    %v2961 = vadd.f32 %v2960, 0.5
    %v2962 = vmul.f32 %v2955, 0.5
    %v2963 = vtanh.pop %v2962
    %v2964 = vmul.f32 %v2963, 0.5
    %v2965 = vadd.f32 %v2964, 0.5
    %v2966 = vtanh.pop %v2956
    %v2967 = vmul.f32 %v2957, 0.5
    %v2968 = vtanh.pop %v2967
    %v2969 = vmul.f32 %v2968, 0.5
    %v2970 = vadd.f32 %v2969, 0.5
    %v2971 = vmul.f32 %v2965, %v2864
    %v2972 = vmul.f32 %v2961, %v2966
    %v2973 = vadd.f32 %v2971, %v2972
    %v2974 = vtanh.pop %v2973
    %v2975 = vmul.f32 %v2970, %v2974
    %v2976 = vld [vmem:[#allocation3 + $0xe0] sm:$0xff]
    %v2977 = vld [vmem:[#allocation3 + $0xe8] sm:$0xff]
    %v2978 = vld [vmem:[#allocation3 + $0xf0] sm:$0xff]
    %v2979 = vld [vmem:[#allocation3 + $0xf8] sm:$0xff]
    %v2980 = vpack.c.bf16 %v2975, %v2975
    %2981 = vmatprep.subr.bf16.mxu0 %v2183
    %2982 = vmatpush1.bf16.msra.mxu0 %v2182
    %2983 = vmatprep.subr.bf16.mxu0 %v2179
    %2984 = vmatpush1.bf16.msra.mxu0 %v2178
    %2985 = vmatprep.subr.bf16.mxu0 %v2175
    %2986 = vmatpush1.bf16.msra.mxu0 %v2174
    %2987 = vmatprep.subr.bf16.mxu0 %v2171
    %2988 = vmatpush1.bf16.msra.mxu0 %v2170
    %2989 = vmatprep.subr.bf16.mxu0 %v2167
    %2990 = vmatpush1.bf16.msra.mxu0 %v2166
    %2991 = vmatprep.subr.bf16.mxu0 %v2163
    %2992 = vmatpush1.bf16.msra.mxu0 %v2162
    %2993 = vmatprep.subr.bf16.mxu0 %v2159
    %2994 = vmatpush1.bf16.msra.mxu0 %v2158
    %2995 = vmatprep.subr.bf16.mxu0 %v2155
    %2996 = vmatpush1.bf16.msra.mxu0 %v2154
    %2997 = vmatprep.subr.bf16.mxu0 0
    %2998 = vmatpush2.bf16.msra.mxu0 0
    %2999 = vmatprep.subr.bf16.mxu0 0
    %3000 = vmatpush2.bf16.msra.mxu0 0
    %3001 = vmatprep.subr.bf16.mxu0 0
    %3002 = vmatpush2.bf16.msra.mxu0 0
    %3003 = vmatprep.subr.bf16.mxu0 0
    %3004 = vmatpush2.bf16.msra.mxu0 0
    %3005 = vmatprep.subr.bf16.mxu0 0
    %3006 = vmatpush2.bf16.msra.mxu0 0
    %3007 = vmatprep.subr.bf16.mxu0 0
    %3008 = vmatpush2.bf16.msra.mxu0 0
    %3009 = vmatprep.subr.bf16.mxu0 0
    %3010 = vmatpush2.bf16.msra.mxu0 0
    %3011 = vmatprep.subr.bf16.mxu0 0
    %3012 = vmatpush2.bf16.msra.mxu0 0
    %3013 = vmatprep.mubr.bf16.mxu0 0
    %3014 = vmatmul.mubr.bf16.gmra.mxu0 %v2980
    %v3015 = vpop.f32.mrf.mxu0
    %v3016 = vadd.f32 0.0, %v3015
    %v3017 = vpop.f32.mrf.mxu0
    %v3018 = vadd.f32 0.0, %v3017
    %v3019 = vpop.f32.mrf.mxu0
    %v3020 = vpop.f32.mrf.mxu0
    %3021 = vdwg.mxu0
    %3022 = vmatprep.subr.bf16.mxu0 %v2185
    %3023 = vmatpush1.bf16.msra.mxu0 %v2184
    %3024 = vmatprep.subr.bf16.mxu0 %v2181
    %3025 = vmatpush1.bf16.msra.mxu0 %v2180
    %3026 = vmatprep.subr.bf16.mxu0 %v2177
    %3027 = vmatpush1.bf16.msra.mxu0 %v2176
    %3028 = vmatprep.subr.bf16.mxu0 %v2173
    %3029 = vmatpush1.bf16.msra.mxu0 %v2172
    %3030 = vmatprep.subr.bf16.mxu0 %v2169
    %3031 = vmatpush1.bf16.msra.mxu0 %v2168
    %3032 = vmatprep.subr.bf16.mxu0 %v2165
    %3033 = vmatpush1.bf16.msra.mxu0 %v2164
    %3034 = vmatprep.subr.bf16.mxu0 %v2161
    %3035 = vmatpush1.bf16.msra.mxu0 %v2160
    %3036 = vmatprep.subr.bf16.mxu0 %v2157
    %3037 = vmatpush1.bf16.msra.mxu0 %v2156
    %3038 = vmatprep.subr.bf16.mxu0 0
    %3039 = vmatpush2.bf16.msra.mxu0 0
    %3040 = vmatprep.subr.bf16.mxu0 0
    %3041 = vmatpush2.bf16.msra.mxu0 0
    %3042 = vmatprep.subr.bf16.mxu0 0
    %3043 = vmatpush2.bf16.msra.mxu0 0
    %3044 = vmatprep.subr.bf16.mxu0 0
    %3045 = vmatpush2.bf16.msra.mxu0 0
    %3046 = vmatprep.subr.bf16.mxu0 0
    %3047 = vmatpush2.bf16.msra.mxu0 0
    %3048 = vmatprep.subr.bf16.mxu0 0
    %3049 = vmatpush2.bf16.msra.mxu0 0
    %3050 = vmatprep.subr.bf16.mxu0 0
    %3051 = vmatpush2.bf16.msra.mxu0 0
    %3052 = vmatprep.subr.bf16.mxu0 0
    %3053 = vmatpush2.bf16.msra.mxu0 0
    %3054 = vmatprep.mubr.bf16.mxu0 0
    %3055 = vmatmul.mubr.bf16.gmra.mxu0 %v2980
    %v3056 = vpop.f32.mrf.mxu0
    %v3057 = vadd.f32 0.0, %v3056
    %v3058 = vpop.f32.mrf.mxu0
    %v3059 = vadd.f32 0.0, %v3058
    %v3060 = vpop.f32.mrf.mxu0
    %v3061 = vpop.f32.mrf.mxu0
    %3062 = vdwg.mxu0
    %v3063 = vadd.f32 %v2976, %v3016
    %v3064 = vadd.f32 %v2977, %v3018
    %v3065 = vadd.f32 %v2978, %v3057
    %v3066 = vadd.f32 %v2979, %v3059
    %v3067 = vmul.f32 %v3063, 0.5
    %v3068 = vtanh.pop %v3067
    %v3069 = vmul.f32 %v3068, 0.5
    %v3070 = vadd.f32 %v3069, 0.5
    %v3071 = vmul.f32 %v3064, 0.5
    %v3072 = vtanh.pop %v3071
    %v3073 = vmul.f32 %v3072, 0.5
    %v3074 = vadd.f32 %v3073, 0.5
    %v3075 = vtanh.pop %v3065
    %v3076 = vmul.f32 %v3066, 0.5
    %v3077 = vtanh.pop %v3076
    %v3078 = vmul.f32 %v3077, 0.5
    %v3079 = vadd.f32 %v3078, 0.5
    %v3080 = vmul.f32 %v3074, %v2973
    %v3081 = vmul.f32 %v3070, %v3075
    %v3082 = vadd.f32 %v3080, %v3081
    %v3083 = vtanh.pop %v3082
    %v3084 = vmul.f32 %v3079, %v3083
    %3085 = vst [vmem:[%s2049] sm:$0xff] %v3084
    %3086 = vst [vmem:[%s2051] sm:$0xff] %v3082
    // Predicated region
    $region50: #{encoder_forward.1} parent=1 // pred_check
      _
    $region51: #{encoder_forward.1} parent=1 // pred_check_branch
      %3088 = sbr.rel (0) target = $region53
    $region52: #{encoder_forward.1} parent=1 // pred_region
      _
    $region53: #{encoder_forward.1} parent=1 // pred_fallthru
      _
    // Predicated region
    $region54: #{encoder_forward.1} parent=1 // pred_check
      _
    $region55: #{encoder_forward.1} parent=1 // pred_check_branch
      %3090 = sbr.rel (0) target = $region57
    $region56: #{encoder_forward.1} parent=1 // pred_region
      _
    $region57: #{encoder_forward.1} parent=1 // pred_fallthru
      _
    // Predicated region
    $region58: #{encoder_forward.1} parent=1 // pred_check
      _
    $region59: #{encoder_forward.1} parent=1 // pred_check_branch
      %3092 = sbr.rel (0) target = $region61
    $region60: #{encoder_forward.1} parent=1 // pred_region
      _
    $region61: #{encoder_forward.1} parent=1 // pred_fallthru
      _
    // Predicated region
    $region62: #{encoder_forward.1} parent=1 // pred_check
      _
    $region63: #{encoder_forward.1} parent=1 // pred_check_branch
      %3094 = sbr.rel (0) target = $region65
    $region64: #{encoder_forward.1} parent=1 // pred_region
      _
    $region65: #{encoder_forward.1} parent=1 // pred_fallthru
      _
    %3095 = vsyncpa [#allocation5], 1
    %3096 = vsyncpa [#allocation7], 1
    %3097 = vsyncpa [#allocation10], 1

</llo_original>
